<compile_context>
chip_gen: v5e
topology: v5e:2x2
jax: 0.10.0
libtpu: 0.0.40
codegen_flags: <defaults>
</compile_context>

<pallas_src>
import math
import functools

import jax
import jax.numpy as jnp
from jax.experimental import pallas as pl
from jax.experimental.pallas import tpu as pltpu

_BN_EPS = 1e-5
_TM = 512                       # token tile (rows); multiple of 8 (and 16 for bf16)
_VMEM_LIMIT = 32 * 1024 * 1024  # sized against v7x default scoped VMEM


def _cp():
    return pltpu.CompilerParams(dimension_semantics=("parallel",),
                                vmem_limit_bytes=_VMEM_LIMIT)


def _row_spec(tm, ncol):
    return pl.BlockSpec((tm, ncol), lambda i: (i, 0))


def _const_spec(shape):
    n = len(shape)
    return pl.BlockSpec(shape, lambda i, _n=n: (0,) * _n)


# ----------------------------- Pallas kernels -----------------------------

def _dwt_high_q_kernel(a_ref, b_ref, c_ref, d_ref, wh_ref, bh_ref, wq_ref, bq_ref,
                       ll_ref, q_ref):
    """Haar DWT + high-freq 1x1 conv (BN folded, ReLU) + Q projection, fused."""
    a = a_ref[...]
    b = b_ref[...]
    c = c_ref[...]
    d = d_ref[...]
    ll_ref[...] = (a + b + c + d) * 0.5
    lh = ((c + d) - (a + b)) * 0.5
    hl = ((b + d) - (a + c)) * 0.5
    hh = ((a + d) - (b + c)) * 0.5
    # conv_high on cat(LH, HL, HH) expressed as a sum of three small matmuls
    # (equivalent to the concatenated 1x1 conv with a block-partitioned weight).
    xh = (jnp.dot(lh.astype(jnp.bfloat16), wh_ref[0], preferred_element_type=jnp.float32)
          + jnp.dot(hl.astype(jnp.bfloat16), wh_ref[1], preferred_element_type=jnp.float32)
          + jnp.dot(hh.astype(jnp.bfloat16), wh_ref[2], preferred_element_type=jnp.float32))
    xh = jnp.maximum(xh + bh_ref[...], 0.0)
    q = jnp.dot(xh.astype(jnp.bfloat16), wq_ref[...],
                preferred_element_type=jnp.float32) + bq_ref[...]
    q_ref[...] = q.astype(q_ref.dtype)


def _conv_kernel(p_ref, w_ref, b_ref, o_ref):
    """im2col conv as matmul: relu(patches @ w_folded + b)   (BN pre-folded)."""
    y = jnp.dot(p_ref[...], w_ref[...], preferred_element_type=jnp.float32)
    o_ref[...] = jnp.maximum(y + b_ref[...], 0.0).astype(o_ref.dtype)


def _conv_stats_kernel(p_ref, w_ref, b_ref, o_ref, s_ref):
    """conv2 matmul + ReLU, with fused per-pixel channel mean/max stats."""
    y = jnp.dot(p_ref[...], w_ref[...], preferred_element_type=jnp.float32)
    y = jnp.maximum(y + b_ref[...], 0.0)
    o_ref[...] = y
    s_ref[...] = jnp.concatenate(
        [jnp.mean(y, axis=-1, keepdims=True),
         jnp.max(y, axis=-1, keepdims=True)], axis=-1)


def _attn_fdfa_kernel(pa_ref, wa_ref, ba_ref, x_ref, q_ref,
                      wkv_ref, bkv_ref, wo_ref, bo_ref, o_ref, *, nh, dh, sm_scale):
    """Per-batch fused tail:
       7x7 attention conv (N=1 -> VPU lane reduction, not MXU) + sigmoid +
       multiply, K/V projection (lane-dense [C, 2C] weight), all heads of
       cross-attention, output projection and residual.
       Heads are column slices of the [N, C] layout (no transposes through HBM);
       the output projection is accumulated per head, so no concat is needed."""
    C = nh * dh
    # Spatial attention map (2-channel 7x7 conv, BN folded) -> sigmoid -> gate.
    amap = jnp.sum(pa_ref[0] * wa_ref[...], axis=-1, keepdims=True) + ba_ref[...]
    amap = jax.nn.sigmoid(amap)
    xo = x_ref[0] * amap                                   # [N, C] f32 (x_ll gated)
    # K/V projection from gated x_ll.
    kv = jnp.dot(xo.astype(jnp.bfloat16), wkv_ref[...],
                 preferred_element_type=jnp.float32) + bkv_ref[...]
    kv = kv.astype(jnp.bfloat16)                           # [N, 2C]
    q = q_ref[0]                                           # [N, C] bf16
    acc = xo + bo_ref[...]                                 # residual + out-proj bias
    for h in range(nh):
        lo, hi = h * dh, (h + 1) * dh
        qh = q[:, lo:hi]
        kh = kv[:, lo:hi]
        vh = kv[:, C + lo:C + hi]
        s = jax.lax.dot_general(qh, kh, (((1,), (1,)), ((), ())),
                                preferred_element_type=jnp.float32) * sm_scale
        s = s - jnp.max(s, axis=-1, keepdims=True)
        p = jnp.exp(s)
        p = p * pl.reciprocal(jnp.sum(p, axis=-1, keepdims=True), approx=True)
        oh = jnp.dot(p.astype(jnp.bfloat16), vh, preferred_element_type=jnp.float32)
        acc = acc + jnp.dot(oh.astype(jnp.bfloat16), wo_ref[h],
                            preferred_element_type=jnp.float32)
    o_ref[0] = acc


# ----------------------------- pallas_call wrappers -----------------------------

def dwt_high_q(a, b, c, d, wh3, bh, wq, bq):
    M, Cin = a.shape
    Cout = bh.shape[-1]
    tm = min(_TM, M)
    return pl.pallas_call(
        _dwt_high_q_kernel,
        grid=(pl.cdiv(M, tm),),
        in_specs=[_row_spec(tm, Cin)] * 4 + [
            _const_spec(wh3.shape), _const_spec((1, Cout)),
            _const_spec(wq.shape), _const_spec((1, Cout))],
        out_specs=(_row_spec(tm, Cin), _row_spec(tm, Cout)),
        out_shape=(jax.ShapeDtypeStruct((M, Cin), jnp.float32),
                   jax.ShapeDtypeStruct((M, Cout), jnp.bfloat16)),
        compiler_params=_cp(),
    )(a, b, c, d, wh3, bh, wq, bq)


def conv_bn_relu(p, w, b, out_dtype=jnp.float32):
    M, K = p.shape
    Nc = w.shape[-1]
    tm = min(_TM, M)
    return pl.pallas_call(
        _conv_kernel,
        grid=(pl.cdiv(M, tm),),
        in_specs=[_row_spec(tm, K), _const_spec((K, Nc)), _const_spec((1, Nc))],
        out_specs=_row_spec(tm, Nc),
        out_shape=jax.ShapeDtypeStruct((M, Nc), out_dtype),
        compiler_params=_cp(),
    )(p, w, b)


def conv_bn_relu_stats(p, w, b):
    M, K = p.shape
    Nc = w.shape[-1]
    tm = min(_TM, M)
    return pl.pallas_call(
        _conv_stats_kernel,
        grid=(pl.cdiv(M, tm),),
        in_specs=[_row_spec(tm, K), _const_spec((K, Nc)), _const_spec((1, Nc))],
        out_specs=(_row_spec(tm, Nc), _row_spec(tm, 2)),
        out_shape=(jax.ShapeDtypeStruct((M, Nc), jnp.float32),
                   jax.ShapeDtypeStruct((M, 2), jnp.float32)),
        compiler_params=_cp(),
    )(p, w, b)


def attn_fdfa(pa, wa, ba, x_ll, q, wkv, bkv, wo3, bo, *, nh, dh):
    B, N, C = x_ll.shape
    Kp = pa.shape[-1]
    kern = functools.partial(_attn_fdfa_kernel, nh=nh, dh=dh,
                             sm_scale=1.0 / math.sqrt(dh))
    bspec = lambda ncol: pl.BlockSpec((1, N, ncol), lambda b: (b, 0, 0))
    return pl.pallas_call(
        kern,
        grid=(B,),
        in_specs=[bspec(Kp),                       # pa: 7x7 im2col of mean/max stats
                  _const_spec((1, Kp)), _const_spec((1, 1)),
                  bspec(C),                        # x_ll
                  bspec(C),                        # q (bf16)
                  _const_spec(wkv.shape), _const_spec((1, 2 * C)),
                  _const_spec(wo3.shape), _const_spec((1, C))],
        out_specs=bspec(C),
        out_shape=jax.ShapeDtypeStruct((B, N, C), jnp.float32),
        compiler_params=_cp(),
    )(pa, wa, ba, x_ll, q, wkv, bkv, wo3, bo)


# ----------------------------- JAX glue -----------------------------

def im2col(x, k):
    """x: [B, H, W, C] -> [B, H, W, k*k*C] with 'same' zero padding.
    Flattened K ordering is (ki, kj, c) with c fastest."""
    B, H, W, C = x.shape
    pad = k // 2
    xp = jnp.pad(x, ((0, 0), (pad, pad), (pad, pad), (0, 0)))
    cols = [xp[:, i:i + H, j:j + W, :] for i in range(k) for j in range(k)]
    return jnp.concatenate(cols, axis=-1)


def init_params(key, in_channels, out_channels=64, attn_kernel_size=7, num_heads=4):
    ks = jax.random.split(key, 16)
    Cin, Co = in_channels, out_channels
    assert Co % num_heads == 0
    dh = Co // num_heads

    def dense(k, fan_in, fan_out):
        return jax.random.normal(k, (fan_in, fan_out), jnp.float32) / math.sqrt(fan_in)

    def bias(k, n):
        return jax.random.normal(k, (n,), jnp.float32) * 0.01

    # Inference-mode BN fold (gamma=1, beta=0, mean=0, var=1), pre-folded into weights.
    bn_scale = 1.0 / math.sqrt(1.0 + _BN_EPS)

    p = {"num_heads": num_heads, "attn_k": attn_kernel_size}

    p["w1"] = (dense(ks[0], 9 * Cin, 32) * bn_scale).astype(jnp.bfloat16)
    p["b1"] = (bias(ks[1], 32) * bn_scale).reshape(1, 32)

    p["w2"] = (dense(ks[2], 9 * 32, Co) * bn_scale).astype(jnp.bfloat16)
    p["b2"] = (bias(ks[3], Co) * bn_scale).reshape(1, Co)

    # 7x7 attention conv (N=1) stays f32: it runs as a VPU reduction, not on the MXU.
    p["wa"] = (dense(ks[4], attn_kernel_size * attn_kernel_size * 2, 1)
               * bn_scale).reshape(1, -1)
    p["ba"] = (bias(ks[5], 1) * bn_scale).reshape(1, 1)

    p["wh3"] = (dense(ks[6], 3 * Cin, Co) * bn_scale).reshape(3, Cin, Co).astype(jnp.bfloat16)
    p["bh"] = (bias(ks[7], Co) * bn_scale).reshape(1, Co)

    # FDFA stand-in projections (no BN).
    p["wq"] = dense(ks[8], Co, Co).astype(jnp.bfloat16)
    p["bq"] = bias(ks[9], Co).reshape(1, Co)
    wk = dense(ks[10], Co, Co)
    wv = dense(ks[11], Co, Co)
    p["wkv"] = jnp.concatenate([wk, wv], axis=1).astype(jnp.bfloat16)   # [Co, 2Co]
    p["bkv"] = jnp.concatenate([bias(ks[12], Co), bias(ks[13], Co)]).reshape(1, 2 * Co)
    p["wo3"] = dense(ks[14], Co, Co).reshape(num_heads, dh, Co).astype(jnp.bfloat16)
    p["bo"] = bias(ks[15], Co).reshape(1, Co)
    return p


def hsi_wave_forward(params, hsi_img):
    B, Cin, H, W = hsi_img.shape
    x = jnp.transpose(hsi_img, (0, 2, 3, 1)).astype(jnp.float32)  # NHWC
    h, w_ = H // 2, W // 2
    N = h * w_
    M = B * N
    Cout = params["bo"].shape[-1]
    nh = params["num_heads"]
    dh = Cout // nh

    # --- DWT 2x2 sub-grids (strided slices; fused by XLA with the transpose) ---
    a = x[:, 0::2, 0::2, :].reshape(M, Cin)
    b = x[:, 0::2, 1::2, :].reshape(M, Cin)
    c = x[:, 1::2, 0::2, :].reshape(M, Cin)
    d = x[:, 1::2, 1::2, :].reshape(M, Cin)

    # --- fused: Haar DWT + conv_high(1x1, BN, ReLU) + Q projection ---
    ll, q = dwt_high_q(a, b, c, d, params["wh3"], params["bh"],
                       params["wq"], params["bq"])

    # --- conv1: 3x3 Cin->32 + BN + ReLU (im2col matmul, bf16 patches & output) ---
    # TODO(synk): the im2col expansion for conv1/conv2 is still materialized in
    # XLA (bf16); a haloed in-kernel shifted-matmul conv would remove it.
    p1 = im2col(ll.reshape(B, h, w_, Cin), 3).reshape(M, 9 * Cin).astype(jnp.bfloat16)
    x1 = conv_bn_relu(p1, params["w1"], params["b1"], out_dtype=jnp.bfloat16)

    # --- conv2: 3x3 32->Cout + BN + ReLU, fused channel mean/max stats ---
    p2 = im2col(x1.reshape(B, h, w_, 32), 3).reshape(M, 9 * 32)
    x_ll, stats = conv_bn_relu_stats(p2, params["w2"], params["b2"])

    # --- fused tail: spatial attention (7x7 conv + BN + sigmoid + multiply),
    #     K/V projection, 4-head cross-attention, output projection, residual ---
    # TODO(synk): FDFA's definition is not in the provided MCFNet snippet;
    # implemented as 4-head cross-attention (Q from x_high, K/V from x_ll).
    ak = params["attn_k"]
    pa = im2col(stats.reshape(B, h, w_, 2), ak).reshape(B, N, ak * ak * 2)
    out = attn_fdfa(pa, params["wa"], params["ba"],
                    x_ll.reshape(B, N, Cout), q.reshape(B, N, Cout),
                    params["wkv"], params["bkv"], params["wo3"], params["bo"],
                    nh=nh, dh=dh)

    return jnp.transpose(out.reshape(B, h, w_, Cout), (0, 3, 1, 2))  # NCHW


if __name__ == "__main__":
    key = jax.random.PRNGKey(0)
    k_in, k_par = jax.random.split(key)
    B, Cin, H, W = 2, 4, 16, 16
    hsi_img = jax.random.normal(k_in, (B, Cin, H, W), jnp.float32)
    params = init_params(k_par, in_channels=Cin, out_channels=64,
                         attn_kernel_size=7, num_heads=4)

    fwd = jax.jit(functools.partial(hsi_wave_forward, params))
    y = fwd(hsi_img)
    jax.block_until_ready(y)
    assert y.shape == (B, 64, H // 2, W // 2), y.shape
    assert bool(jnp.all(jnp.isfinite(y)))
    print("KERNEL_OK")
</pallas_src>

<mosaic_0001>
module attributes {stable_mosaic.version = 11 : i64} {
  func.func @_dwt_high_q_kernel(%arg0: i32, %arg1: memref<128x4xf32, #tpu.memory_space<vmem>>, %arg2: memref<128x4xf32, #tpu.memory_space<vmem>>, %arg3: memref<128x4xf32, #tpu.memory_space<vmem>>, %arg4: memref<128x4xf32, #tpu.memory_space<vmem>>, %arg5: memref<3x4x64xbf16, #tpu.memory_space<vmem>>, %arg6: memref<1x64xf32, #tpu.memory_space<vmem>>, %arg7: memref<64x64xbf16, #tpu.memory_space<vmem>>, %arg8: memref<1x64xf32, #tpu.memory_space<vmem>>, %arg9: memref<128x4xf32, #tpu.memory_space<vmem>>, %arg10: memref<128x64xbf16, #tpu.memory_space<vmem>>) attributes {dimension_semantics = [#tpu.dimension_semantics<parallel>], iteration_bounds = array<i64: 1>, scalar_prefetch = 0 : i64, scratch_operands = 0 : i64, tpu.core_type = #tpu.core_type<tc>, window_params = [{transform_indices = @transform_0, window_bounds = array<i64: 128, 4>}, {transform_indices = @transform_1, window_bounds = array<i64: 128, 4>}, {transform_indices = @transform_2, window_bounds = array<i64: 128, 4>}, {transform_indices = @transform_3, window_bounds = array<i64: 128, 4>}, {pipeline_mode = #tpu.pipeline_mode<synchronous>, transform_indices = @transform_4, window_bounds = array<i64: 3, 4, 64>}, {pipeline_mode = #tpu.pipeline_mode<synchronous>, transform_indices = @transform_5, window_bounds = array<i64: 1, 64>}, {pipeline_mode = #tpu.pipeline_mode<synchronous>, transform_indices = @transform_6, window_bounds = array<i64: 64, 64>}, {pipeline_mode = #tpu.pipeline_mode<synchronous>, transform_indices = @transform_7, window_bounds = array<i64: 1, 64>}, {transform_indices = @transform_8, window_bounds = array<i64: 128, 4>}, {transform_indices = @transform_9, window_bounds = array<i64: 128, 64>}]} {
    %c0 = arith.constant 0 : index
    %c0_0 = arith.constant 0 : index
    %0 = vector.load %arg1[%c0, %c0_0] : memref<128x4xf32, #tpu.memory_space<vmem>>, vector<128x4xf32>
    %c0_1 = arith.constant 0 : index
    %c0_2 = arith.constant 0 : index
    %1 = vector.load %arg2[%c0_1, %c0_2] : memref<128x4xf32, #tpu.memory_space<vmem>>, vector<128x4xf32>
    %c0_3 = arith.constant 0 : index
    %c0_4 = arith.constant 0 : index
    %2 = vector.load %arg3[%c0_3, %c0_4] : memref<128x4xf32, #tpu.memory_space<vmem>>, vector<128x4xf32>
    %c0_5 = arith.constant 0 : index
    %c0_6 = arith.constant 0 : index
    %3 = vector.load %arg4[%c0_5, %c0_6] : memref<128x4xf32, #tpu.memory_space<vmem>>, vector<128x4xf32>
    %4 = arith.addf %0, %1 : vector<128x4xf32>
    %5 = arith.addf %4, %2 : vector<128x4xf32>
    %6 = arith.addf %5, %3 : vector<128x4xf32>
    %cst = arith.constant 5.000000e-01 : f32
    %7 = vector.broadcast %cst : f32 to vector<128x4xf32>
    %8 = arith.mulf %6, %7 : vector<128x4xf32>
    %c0_7 = arith.constant 0 : index
    %c0_8 = arith.constant 0 : index
    %9 = vector.load %arg9[%c0_7, %c0_8] : memref<128x4xf32, #tpu.memory_space<vmem>>, vector<128x4xf32>
    tpu.vector_store %arg9[%c0_7, %c0_8], %8 {strides = array<i32>} : memref<128x4xf32, #tpu.memory_space<vmem>>, vector<128x4xf32>,
    %10 = arith.addf %2, %3 : vector<128x4xf32>
    %11 = arith.addf %0, %1 : vector<128x4xf32>
    %12 = arith.subf %10, %11 : vector<128x4xf32>
    %cst_9 = arith.constant 5.000000e-01 : f32
    %13 = vector.broadcast %cst_9 : f32 to vector<128x4xf32>
    %14 = arith.mulf %12, %13 : vector<128x4xf32>
    %15 = arith.addf %1, %3 : vector<128x4xf32>
    %16 = arith.addf %0, %2 : vector<128x4xf32>
    %17 = arith.subf %15, %16 : vector<128x4xf32>
    %cst_10 = arith.constant 5.000000e-01 : f32
    %18 = vector.broadcast %cst_10 : f32 to vector<128x4xf32>
    %19 = arith.mulf %17, %18 : vector<128x4xf32>
    %20 = arith.addf %0, %3 : vector<128x4xf32>
    %21 = arith.addf %1, %2 : vector<128x4xf32>
    %22 = arith.subf %20, %21 : vector<128x4xf32>
    %cst_11 = arith.constant 5.000000e-01 : f32
    %23 = vector.broadcast %cst_11 : f32 to vector<128x4xf32>
    %24 = arith.mulf %22, %23 : vector<128x4xf32>
    %25 = arith.truncf %14 : vector<128x4xf32> to vector<128x4xbf16>
    %c0_12 = arith.constant 0 : index
    %c0_13 = arith.constant 0 : index
    %c0_14 = arith.constant 0 : index
    %26 = vector.load %arg5[%c0_12, %c0_13, %c0_14] : memref<3x4x64xbf16, #tpu.memory_space<vmem>>, vector<1x4x64xbf16>
    %27 = vector.shape_cast %26 : vector<1x4x64xbf16> to vector<4x64xbf16>
    %cst_15 = arith.constant dense<0.000000e+00> : vector<128x64xf32>
    %28 = tpu.matmul %25, %27, %cst_15 {dimension_numbers = #tpu.dot_dimension_numbers<[1], [0], [0], [1], [0, 0, 1, 1], [], []>} : vector<128x4xbf16>, vector<4x64xbf16>, vector<128x64xf32> -> vector<128x64xf32>
    %29 = arith.truncf %19 : vector<128x4xf32> to vector<128x4xbf16>
    %c1 = arith.constant 1 : index
    %c0_16 = arith.constant 0 : index
    %c0_17 = arith.constant 0 : index
    %30 = vector.load %arg5[%c1, %c0_16, %c0_17] : memref<3x4x64xbf16, #tpu.memory_space<vmem>>, vector<1x4x64xbf16>
    %31 = vector.shape_cast %30 : vector<1x4x64xbf16> to vector<4x64xbf16>
    %cst_18 = arith.constant dense<0.000000e+00> : vector<128x64xf32>
    %32 = tpu.matmul %29, %31, %cst_18 {dimension_numbers = #tpu.dot_dimension_numbers<[1], [0], [0], [1], [0, 0, 1, 1], [], []>} : vector<128x4xbf16>, vector<4x64xbf16>, vector<128x64xf32> -> vector<128x64xf32>
    %33 = arith.addf %28, %32 : vector<128x64xf32>
    %34 = arith.truncf %24 : vector<128x4xf32> to vector<128x4xbf16>
    %c2 = arith.constant 2 : index
    %c0_19 = arith.constant 0 : index
    %c0_20 = arith.constant 0 : index
    %35 = vector.load %arg5[%c2, %c0_19, %c0_20] : memref<3x4x64xbf16, #tpu.memory_space<vmem>>, vector<1x4x64xbf16>
    %36 = vector.shape_cast %35 : vector<1x4x64xbf16> to vector<4x64xbf16>
    %cst_21 = arith.constant dense<0.000000e+00> : vector<128x64xf32>
    %37 = tpu.matmul %34, %36, %cst_21 {dimension_numbers = #tpu.dot_dimension_numbers<[1], [0], [0], [1], [0, 0, 1, 1], [], []>} : vector<128x4xbf16>, vector<4x64xbf16>, vector<128x64xf32> -> vector<128x64xf32>
    %38 = arith.addf %33, %37 : vector<128x64xf32>
    %c0_22 = arith.constant 0 : index
    %c0_23 = arith.constant 0 : index
    %39 = vector.load %arg6[%c0_22, %c0_23] : memref<1x64xf32, #tpu.memory_space<vmem>>, vector<1x64xf32>
    %40 = vector.broadcast %39 : vector<1x64xf32> to vector<128x64xf32>
    %41 = arith.addf %38, %40 : vector<128x64xf32>
    %cst_24 = arith.constant 0.000000e+00 : f32
    %42 = vector.broadcast %cst_24 : f32 to vector<128x64xf32>
    %43 = arith.maximumf %41, %42 : vector<128x64xf32>
    %44 = arith.truncf %43 : vector<128x64xf32> to vector<128x64xbf16>
    %c0_25 = arith.constant 0 : index
    %c0_26 = arith.constant 0 : index
    %45 = vector.load %arg7[%c0_25, %c0_26] : memref<64x64xbf16, #tpu.memory_space<vmem>>, vector<64x64xbf16>
    %cst_27 = arith.constant dense<0.000000e+00> : vector<128x64xf32>
    %46 = tpu.matmul %44, %45, %cst_27 {dimension_numbers = #tpu.dot_dimension_numbers<[1], [0], [0], [1], [0, 0, 1, 1], [], []>} : vector<128x64xbf16>, vector<64x64xbf16>, vector<128x64xf32> -> vector<128x64xf32>
    %c0_28 = arith.constant 0 : index
    %c0_29 = arith.constant 0 : index
    %47 = vector.load %arg8[%c0_28, %c0_29] : memref<1x64xf32, #tpu.memory_space<vmem>>, vector<1x64xf32>
    %48 = vector.broadcast %47 : vector<1x64xf32> to vector<128x64xf32>
    %49 = arith.addf %46, %48 : vector<128x64xf32>
    %50 = arith.truncf %49 : vector<128x64xf32> to vector<128x64xbf16>
    %c0_30 = arith.constant 0 : index
    %c0_31 = arith.constant 0 : index
    %51 = vector.load %arg10[%c0_30, %c0_31] : memref<128x64xbf16, #tpu.memory_space<vmem>>, vector<128x64xbf16>
    tpu.vector_store %arg10[%c0_30, %c0_31], %50 {strides = array<i32>} : memref<128x64xbf16, #tpu.memory_space<vmem>>, vector<128x64xbf16>,
    return
  }
  func.func @transform_0(%arg0: i32) -> (i32, i32) {
    %c0_i32 = arith.constant 0 : i32
    %c0_i32_0 = arith.constant 0 : i32
    return %arg0, %c0_i32 : i32, i32
  }
  func.func @transform_1(%arg0: i32) -> (i32, i32) {
    %c0_i32 = arith.constant 0 : i32
    %c0_i32_0 = arith.constant 0 : i32
    return %arg0, %c0_i32 : i32, i32
  }
  func.func @transform_2(%arg0: i32) -> (i32, i32) {
    %c0_i32 = arith.constant 0 : i32
    %c0_i32_0 = arith.constant 0 : i32
    return %arg0, %c0_i32 : i32, i32
  }
  func.func @transform_3(%arg0: i32) -> (i32, i32) {
    %c0_i32 = arith.constant 0 : i32
    %c0_i32_0 = arith.constant 0 : i32
    return %arg0, %c0_i32 : i32, i32
  }
  func.func @transform_4(%arg0: i32) -> (i32, i32, i32) {
    %c0_i32 = arith.constant 0 : i32
    %c0_i32_0 = arith.constant 0 : i32
    %c0_i32_1 = arith.constant 0 : i32
    %c0_i32_2 = arith.constant 0 : i32
    return %c0_i32, %c0_i32_0, %c0_i32_1 : i32, i32, i32
  }
  func.func @transform_5(%arg0: i32) -> (i32, i32) {
    %c0_i32 = arith.constant 0 : i32
    %c0_i32_0 = arith.constant 0 : i32
    %c0_i32_1 = arith.constant 0 : i32
    return %c0_i32, %c0_i32_0 : i32, i32
  }
  func.func @transform_6(%arg0: i32) -> (i32, i32) {
    %c0_i32 = arith.constant 0 : i32
    %c0_i32_0 = arith.constant 0 : i32
    %c0_i32_1 = arith.constant 0 : i32
    return %c0_i32, %c0_i32_0 : i32, i32
  }
  func.func @transform_7(%arg0: i32) -> (i32, i32) {
    %c0_i32 = arith.constant 0 : i32
    %c0_i32_0 = arith.constant 0 : i32
    %c0_i32_1 = arith.constant 0 : i32
    return %c0_i32, %c0_i32_0 : i32, i32
  }
  func.func @transform_8(%arg0: i32) -> (i32, i32) {
    %c0_i32 = arith.constant 0 : i32
    %c0_i32_0 = arith.constant 0 : i32
    return %arg0, %c0_i32 : i32, i32
  }
  func.func @transform_9(%arg0: i32) -> (i32, i32) {
    %c0_i32 = arith.constant 0 : i32
    %c0_i32_0 = arith.constant 0 : i32
    return %arg0, %c0_i32 : i32, i32
  }
}

module attributes {stable_mosaic.version = 11 : i64} {
  func.func @_conv_kernel(%arg0: i32, %arg1: memref<128x36xbf16, #tpu.memory_space<vmem>>, %arg2: memref<36x32xbf16, #tpu.memory_space<vmem>>, %arg3: memref<1x32xf32, #tpu.memory_space<vmem>>, %arg4: memref<128x32xbf16, #tpu.memory_space<vmem>>) attributes {dimension_semantics = [#tpu.dimension_semantics<parallel>], iteration_bounds = array<i64: 1>, scalar_prefetch = 0 : i64, scratch_operands = 0 : i64, tpu.core_type = #tpu.core_type<tc>, window_params = [{transform_indices = @transform_0, window_bounds = array<i64: 128, 36>}, {pipeline_mode = #tpu.pipeline_mode<synchronous>, transform_indices = @transform_1, window_bounds = array<i64: 36, 32>}, {pipeline_mode = #tpu.pipeline_mode<synchronous>, transform_indices = @transform_2, window_bounds = array<i64: 1, 32>}, {transform_indices = @transform_3, window_bounds = array<i64: 128, 32>}]} {
    %c0 = arith.constant 0 : index
    %c0_0 = arith.constant 0 : index
    %0 = vector.load %arg1[%c0, %c0_0] : memref<128x36xbf16, #tpu.memory_space<vmem>>, vector<128x36xbf16>
    %c0_1 = arith.constant 0 : index
    %c0_2 = arith.constant 0 : index
    %1 = vector.load %arg2[%c0_1, %c0_2] : memref<36x32xbf16, #tpu.memory_space<vmem>>, vector<36x32xbf16>
    %cst = arith.constant dense<0.000000e+00> : vector<128x32xf32>
    %2 = tpu.matmul %0, %1, %cst {dimension_numbers = #tpu.dot_dimension_numbers<[1], [0], [0], [1], [0, 0, 1, 1], [], []>} : vector<128x36xbf16>, vector<36x32xbf16>, vector<128x32xf32> -> vector<128x32xf32>
    %c0_3 = arith.constant 0 : index
    %c0_4 = arith.constant 0 : index
    %3 = vector.load %arg3[%c0_3, %c0_4] : memref<1x32xf32, #tpu.memory_space<vmem>>, vector<1x32xf32>
    %4 = vector.broadcast %3 : vector<1x32xf32> to vector<128x32xf32>
    %5 = arith.addf %2, %4 : vector<128x32xf32>
    %cst_5 = arith.constant 0.000000e+00 : f32
    %6 = vector.broadcast %cst_5 : f32 to vector<128x32xf32>
    %7 = arith.maximumf %5, %6 : vector<128x32xf32>
    %8 = arith.truncf %7 : vector<128x32xf32> to vector<128x32xbf16>
    %c0_6 = arith.constant 0 : index
    %c0_7 = arith.constant 0 : index
    %9 = vector.load %arg4[%c0_6, %c0_7] : memref<128x32xbf16, #tpu.memory_space<vmem>>, vector<128x32xbf16>
    tpu.vector_store %arg4[%c0_6, %c0_7], %8 {strides = array<i32>} : memref<128x32xbf16, #tpu.memory_space<vmem>>, vector<128x32xbf16>,
    return
  }
  func.func @transform_0(%arg0: i32) -> (i32, i32) {
    %c0_i32 = arith.constant 0 : i32
    %c0_i32_0 = arith.constant 0 : i32
    return %arg0, %c0_i32 : i32, i32
  }
  func.func @transform_1(%arg0: i32) -> (i32, i32) {
    %c0_i32 = arith.constant 0 : i32
    %c0_i32_0 = arith.constant 0 : i32
    %c0_i32_1 = arith.constant 0 : i32
    return %c0_i32, %c0_i32_0 : i32, i32
  }
  func.func @transform_2(%arg0: i32) -> (i32, i32) {
    %c0_i32 = arith.constant 0 : i32
    %c0_i32_0 = arith.constant 0 : i32
    %c0_i32_1 = arith.constant 0 : i32
    return %c0_i32, %c0_i32_0 : i32, i32
  }
  func.func @transform_3(%arg0: i32) -> (i32, i32) {
    %c0_i32 = arith.constant 0 : i32
    %c0_i32_0 = arith.constant 0 : i32
    return %arg0, %c0_i32 : i32, i32
  }
}

module attributes {stable_mosaic.version = 11 : i64} {
  func.func @_conv_stats_kernel(%arg0: i32, %arg1: memref<128x288xbf16, #tpu.memory_space<vmem>>, %arg2: memref<288x64xbf16, #tpu.memory_space<vmem>>, %arg3: memref<1x64xf32, #tpu.memory_space<vmem>>, %arg4: memref<128x64xf32, #tpu.memory_space<vmem>>, %arg5: memref<128x2xf32, #tpu.memory_space<vmem>>) attributes {dimension_semantics = [#tpu.dimension_semantics<parallel>], iteration_bounds = array<i64: 1>, scalar_prefetch = 0 : i64, scratch_operands = 0 : i64, tpu.core_type = #tpu.core_type<tc>, window_params = [{transform_indices = @transform_0, window_bounds = array<i64: 128, 288>}, {pipeline_mode = #tpu.pipeline_mode<synchronous>, transform_indices = @transform_1, window_bounds = array<i64: 288, 64>}, {pipeline_mode = #tpu.pipeline_mode<synchronous>, transform_indices = @transform_2, window_bounds = array<i64: 1, 64>}, {transform_indices = @transform_3, window_bounds = array<i64: 128, 64>}, {transform_indices = @transform_4, window_bounds = array<i64: 128, 2>}]} {
    %c0 = arith.constant 0 : index
    %c0_0 = arith.constant 0 : index
    %0 = vector.load %arg1[%c0, %c0_0] : memref<128x288xbf16, #tpu.memory_space<vmem>>, vector<128x288xbf16>
    %c0_1 = arith.constant 0 : index
    %c0_2 = arith.constant 0 : index
    %1 = vector.load %arg2[%c0_1, %c0_2] : memref<288x64xbf16, #tpu.memory_space<vmem>>, vector<288x64xbf16>
    %cst = arith.constant dense<0.000000e+00> : vector<128x64xf32>
    %2 = tpu.matmul %0, %1, %cst {dimension_numbers = #tpu.dot_dimension_numbers<[1], [0], [0], [1], [0, 0, 1, 1], [], []>} : vector<128x288xbf16>, vector<288x64xbf16>, vector<128x64xf32> -> vector<128x64xf32>
    %c0_3 = arith.constant 0 : index
    %c0_4 = arith.constant 0 : index
    %3 = vector.load %arg3[%c0_3, %c0_4] : memref<1x64xf32, #tpu.memory_space<vmem>>, vector<1x64xf32>
    %4 = vector.broadcast %3 : vector<1x64xf32> to vector<128x64xf32>
    %5 = arith.addf %2, %4 : vector<128x64xf32>
    %cst_5 = arith.constant 0.000000e+00 : f32
    %6 = vector.broadcast %cst_5 : f32 to vector<128x64xf32>
    %7 = arith.maximumf %5, %6 : vector<128x64xf32>
    %c0_6 = arith.constant 0 : index
    %c0_7 = arith.constant 0 : index
    %8 = vector.load %arg4[%c0_6, %c0_7] : memref<128x64xf32, #tpu.memory_space<vmem>>, vector<128x64xf32>
    tpu.vector_store %arg4[%c0_6, %c0_7], %7 {strides = array<i32>} : memref<128x64xf32, #tpu.memory_space<vmem>>, vector<128x64xf32>,
    %cst_8 = arith.constant dense<0.000000e+00> : vector<128xf32>
    %9 = vector.multi_reduction <add>, %7, %cst_8 [1] : vector<128x64xf32> to vector<128xf32>
    %10 = vector.shape_cast %9 : vector<128xf32> to vector<128x1xf32>
    %cst_9 = arith.constant 6.400000e+01 : f32
    %11 = vector.broadcast %cst_9 : f32 to vector<128x1xf32>
    %12 = arith.divf %10, %11 : vector<128x1xf32>
    %cst_10 = arith.constant dense<0xFF800000> : vector<128xf32>
    %13 = vector.multi_reduction <maximumf>, %7, %cst_10 [1] : vector<128x64xf32> to vector<128xf32>
    %14 = vector.shape_cast %13 : vector<128xf32> to vector<128x1xf32>
    %15 = tpu.concatenate %12, %14 in 1 : vector<128x1xf32>, vector<128x1xf32> -> vector<128x2xf32>
    %c0_11 = arith.constant 0 : index
    %c0_12 = arith.constant 0 : index
    %16 = vector.load %arg5[%c0_11, %c0_12] : memref<128x2xf32, #tpu.memory_space<vmem>>, vector<128x2xf32>
    tpu.vector_store %arg5[%c0_11, %c0_12], %15 {strides = array<i32>} : memref<128x2xf32, #tpu.memory_space<vmem>>, vector<128x2xf32>,
    return
  }
  func.func @transform_0(%arg0: i32) -> (i32, i32) {
    %c0_i32 = arith.constant 0 : i32
    %c0_i32_0 = arith.constant 0 : i32
    return %arg0, %c0_i32 : i32, i32
  }
  func.func @transform_1(%arg0: i32) -> (i32, i32) {
    %c0_i32 = arith.constant 0 : i32
    %c0_i32_0 = arith.constant 0 : i32
    %c0_i32_1 = arith.constant 0 : i32
    return %c0_i32, %c0_i32_0 : i32, i32
  }
  func.func @transform_2(%arg0: i32) -> (i32, i32) {
    %c0_i32 = arith.constant 0 : i32
    %c0_i32_0 = arith.constant 0 : i32
    %c0_i32_1 = arith.constant 0 : i32
    return %c0_i32, %c0_i32_0 : i32, i32
  }
  func.func @transform_3(%arg0: i32) -> (i32, i32) {
    %c0_i32 = arith.constant 0 : i32
    %c0_i32_0 = arith.constant 0 : i32
    return %arg0, %c0_i32 : i32, i32
  }
  func.func @transform_4(%arg0: i32) -> (i32, i32) {
    %c0_i32 = arith.constant 0 : i32
    %c0_i32_0 = arith.constant 0 : i32
    return %arg0, %c0_i32 : i32, i32
  }
}

module attributes {stable_mosaic.version = 11 : i64} {
  func.func @_attn_fdfa_kernel(%arg0: i32, %arg1: memref<1x64x98xf32, #tpu.memory_space<vmem>>, %arg2: memref<1x98xf32, #tpu.memory_space<vmem>>, %arg3: memref<1x1xf32, #tpu.memory_space<vmem>>, %arg4: memref<1x64x64xf32, #tpu.memory_space<vmem>>, %arg5: memref<1x64x64xbf16, #tpu.memory_space<vmem>>, %arg6: memref<64x128xbf16, #tpu.memory_space<vmem>>, %arg7: memref<1x128xf32, #tpu.memory_space<vmem>>, %arg8: memref<4x16x64xbf16, #tpu.memory_space<vmem>>, %arg9: memref<1x64xf32, #tpu.memory_space<vmem>>, %arg10: memref<1x64x64xf32, #tpu.memory_space<vmem>>) attributes {dimension_semantics = [#tpu.dimension_semantics<parallel>], iteration_bounds = array<i64: 2>, scalar_prefetch = 0 : i64, scratch_operands = 0 : i64, tpu.core_type = #tpu.core_type<tc>, window_params = [{transform_indices = @transform_0, window_bounds = array<i64: 1, 64, 98>}, {pipeline_mode = #tpu.pipeline_mode<synchronous>, transform_indices = @transform_1, window_bounds = array<i64: 1, 98>}, {pipeline_mode = #tpu.pipeline_mode<synchronous>, transform_indices = @transform_2, window_bounds = array<i64: 1, 1>}, {transform_indices = @transform_3, window_bounds = array<i64: 1, 64, 64>}, {transform_indices = @transform_4, window_bounds = array<i64: 1, 64, 64>}, {pipeline_mode = #tpu.pipeline_mode<synchronous>, transform_indices = @transform_5, window_bounds = array<i64: 64, 128>}, {pipeline_mode = #tpu.pipeline_mode<synchronous>, transform_indices = @transform_6, window_bounds = array<i64: 1, 128>}, {pipeline_mode = #tpu.pipeline_mode<synchronous>, transform_indices = @transform_7, window_bounds = array<i64: 4, 16, 64>}, {pipeline_mode = #tpu.pipeline_mode<synchronous>, transform_indices = @transform_8, window_bounds = array<i64: 1, 64>}, {transform_indices = @transform_9, window_bounds = array<i64: 1, 64, 64>}]} {
    %c0 = arith.constant 0 : index
    %c0_0 = arith.constant 0 : index
    %c0_1 = arith.constant 0 : index
    %0 = vector.load %arg1[%c0, %c0_0, %c0_1] : memref<1x64x98xf32, #tpu.memory_space<vmem>>, vector<1x64x98xf32>
    %1 = vector.shape_cast %0 : vector<1x64x98xf32> to vector<64x98xf32>
    %c0_2 = arith.constant 0 : index
    %c0_3 = arith.constant 0 : index
    %2 = vector.load %arg2[%c0_2, %c0_3] : memref<1x98xf32, #tpu.memory_space<vmem>>, vector<1x98xf32>
    %3 = vector.broadcast %2 : vector<1x98xf32> to vector<64x98xf32>
    %4 = arith.mulf %1, %3 : vector<64x98xf32>
    %cst = arith.constant dense<0.000000e+00> : vector<64xf32>
    %5 = vector.multi_reduction <add>, %4, %cst [1] : vector<64x98xf32> to vector<64xf32>
    %6 = vector.shape_cast %5 : vector<64xf32> to vector<64x1xf32>
    %c0_4 = arith.constant 0 : index
    %c0_5 = arith.constant 0 : index
    %7 = vector.load %arg3[%c0_4, %c0_5] : memref<1x1xf32, #tpu.memory_space<vmem>>, vector<1x1xf32>
    %8 = vector.broadcast %7 : vector<1x1xf32> to vector<64x1xf32>
    %9 = arith.addf %6, %8 : vector<64x1xf32>
    %10 = arith.negf %9 : vector<64x1xf32>
    %11 = math.exp %10 : vector<64x1xf32>
    %cst_6 = arith.constant 1.000000e+00 : f32
    %12 = vector.broadcast %cst_6 : f32 to vector<64x1xf32>
    %13 = arith.addf %12, %11 : vector<64x1xf32>
    %14 = arith.divf %12, %13 : vector<64x1xf32>
    %c0_7 = arith.constant 0 : index
    %c0_8 = arith.constant 0 : index
    %c0_9 = arith.constant 0 : index
    %15 = vector.load %arg4[%c0_7, %c0_8, %c0_9] : memref<1x64x64xf32, #tpu.memory_space<vmem>>, vector<1x64x64xf32>
    %16 = vector.shape_cast %15 : vector<1x64x64xf32> to vector<64x64xf32>
    %17 = vector.broadcast %14 : vector<64x1xf32> to vector<64x64xf32>
    %18 = arith.mulf %16, %17 : vector<64x64xf32>
    %19 = arith.truncf %18 : vector<64x64xf32> to vector<64x64xbf16>
    %c0_10 = arith.constant 0 : index
    %c0_11 = arith.constant 0 : index
    %20 = vector.load %arg6[%c0_10, %c0_11] : memref<64x128xbf16, #tpu.memory_space<vmem>>, vector<64x128xbf16>
    %cst_12 = arith.constant dense<0.000000e+00> : vector<64x128xf32>
    %21 = tpu.matmul %19, %20, %cst_12 {dimension_numbers = #tpu.dot_dimension_numbers<[1], [0], [0], [1], [0, 0, 1, 1], [], []>} : vector<64x64xbf16>, vector<64x128xbf16>, vector<64x128xf32> -> vector<64x128xf32>
    %c0_13 = arith.constant 0 : index
    %c0_14 = arith.constant 0 : index
    %22 = vector.load %arg7[%c0_13, %c0_14] : memref<1x128xf32, #tpu.memory_space<vmem>>, vector<1x128xf32>
    %23 = vector.broadcast %22 : vector<1x128xf32> to vector<64x128xf32>
    %24 = arith.addf %21, %23 : vector<64x128xf32>
    %25 = arith.truncf %24 : vector<64x128xf32> to vector<64x128xbf16>
    %c0_15 = arith.constant 0 : index
    %c0_16 = arith.constant 0 : index
    %c0_17 = arith.constant 0 : index
    %26 = vector.load %arg5[%c0_15, %c0_16, %c0_17] : memref<1x64x64xbf16, #tpu.memory_space<vmem>>, vector<1x64x64xbf16>
    %27 = vector.shape_cast %26 : vector<1x64x64xbf16> to vector<64x64xbf16>
    %c0_18 = arith.constant 0 : index
    %c0_19 = arith.constant 0 : index
    %28 = vector.load %arg9[%c0_18, %c0_19] : memref<1x64xf32, #tpu.memory_space<vmem>>, vector<1x64xf32>
    %29 = vector.broadcast %28 : vector<1x64xf32> to vector<64x64xf32>
    %30 = arith.addf %18, %29 : vector<64x64xf32>
    %31 = vector.extract_strided_slice %27 {offsets = [0, 0], sizes = [64, 16], strides = [1, 1]} : vector<64x64xbf16> to vector<64x16xbf16>
    %32 = vector.extract_strided_slice %25 {offsets = [0, 0], sizes = [64, 16], strides = [1, 1]} : vector<64x128xbf16> to vector<64x16xbf16>
    %33 = vector.extract_strided_slice %25 {offsets = [0, 64], sizes = [64, 16], strides = [1, 1]} : vector<64x128xbf16> to vector<64x16xbf16>
    %cst_20 = arith.constant dense<0.000000e+00> : vector<64x64xf32>
    %34 = tpu.matmul %31, %32, %cst_20 {dimension_numbers = #tpu.dot_dimension_numbers<[1], [1], [0], [0], [0, 0, 1, 0], [], []>} : vector<64x16xbf16>, vector<64x16xbf16>, vector<64x64xf32> -> vector<64x64xf32>
    %cst_21 = arith.constant 2.500000e-01 : f32
    %35 = vector.broadcast %cst_21 : f32 to vector<64x64xf32>
    %36 = arith.mulf %34, %35 : vector<64x64xf32>
    %cst_22 = arith.constant dense<0xFF800000> : vector<64xf32>
    %37 = vector.multi_reduction <maximumf>, %36, %cst_22 [1] : vector<64x64xf32> to vector<64xf32>
    %38 = vector.shape_cast %37 : vector<64xf32> to vector<64x1xf32>
    %39 = vector.broadcast %38 : vector<64x1xf32> to vector<64x64xf32>
    %40 = arith.subf %36, %39 : vector<64x64xf32>
    %41 = math.exp %40 : vector<64x64xf32>
    %cst_23 = arith.constant dense<0.000000e+00> : vector<64xf32>
    %42 = vector.multi_reduction <add>, %41, %cst_23 [1] : vector<64x64xf32> to vector<64xf32>
    %43 = vector.shape_cast %42 : vector<64xf32> to vector<64x1xf32>
    %44 = tpu.reciprocal %43 {approx = true} : vector<64x1xf32> -> vector<64x1xf32>
    %45 = vector.broadcast %44 : vector<64x1xf32> to vector<64x64xf32>
    %46 = arith.mulf %41, %45 : vector<64x64xf32>
    %47 = arith.truncf %46 : vector<64x64xf32> to vector<64x64xbf16>
    %cst_24 = arith.constant dense<0.000000e+00> : vector<64x16xf32>
    %48 = tpu.matmul %47, %33, %cst_24 {dimension_numbers = #tpu.dot_dimension_numbers<[1], [0], [0], [1], [0, 0, 1, 1], [], []>} : vector<64x64xbf16>, vector<64x16xbf16>, vector<64x16xf32> -> vector<64x16xf32>
    %49 = arith.truncf %48 : vector<64x16xf32> to vector<64x16xbf16>
    %c0_25 = arith.constant 0 : index
    %c0_26 = arith.constant 0 : index
    %c0_27 = arith.constant 0 : index
    %50 = vector.load %arg8[%c0_25, %c0_26, %c0_27] : memref<4x16x64xbf16, #tpu.memory_space<vmem>>, vector<1x16x64xbf16>
    %51 = vector.shape_cast %50 : vector<1x16x64xbf16> to vector<16x64xbf16>
    %cst_28 = arith.constant dense<0.000000e+00> : vector<64x64xf32>
    %52 = tpu.matmul %49, %51, %cst_28 {dimension_numbers = #tpu.dot_dimension_numbers<[1], [0], [0], [1], [0, 0, 1, 1], [], []>} : vector<64x16xbf16>, vector<16x64xbf16>, vector<64x64xf32> -> vector<64x64xf32>
    %53 = arith.addf %30, %52 : vector<64x64xf32>
    %54 = vector.extract_strided_slice %27 {offsets = [0, 16], sizes = [64, 16], strides = [1, 1]} : vector<64x64xbf16> to vector<64x16xbf16>
    %55 = vector.extract_strided_slice %25 {offsets = [0, 16], sizes = [64, 16], strides = [1, 1]} : vector<64x128xbf16> to vector<64x16xbf16>
    %56 = vector.extract_strided_slice %25 {offsets = [0, 80], sizes = [64, 16], strides = [1, 1]} : vector<64x128xbf16> to vector<64x16xbf16>
    %cst_29 = arith.constant dense<0.000000e+00> : vector<64x64xf32>
    %57 = tpu.matmul %54, %55, %cst_29 {dimension_numbers = #tpu.dot_dimension_numbers<[1], [1], [0], [0], [0, 0, 1, 0], [], []>} : vector<64x16xbf16>, vector<64x16xbf16>, vector<64x64xf32> -> vector<64x64xf32>
    %cst_30 = arith.constant 2.500000e-01 : f32
    %58 = vector.broadcast %cst_30 : f32 to vector<64x64xf32>
    %59 = arith.mulf %57, %58 : vector<64x64xf32>
    %cst_31 = arith.constant dense<0xFF800000> : vector<64xf32>
    %60 = vector.multi_reduction <maximumf>, %59, %cst_31 [1] : vector<64x64xf32> to vector<64xf32>
    %61 = vector.shape_cast %60 : vector<64xf32> to vector<64x1xf32>
    %62 = vector.broadcast %61 : vector<64x1xf32> to vector<64x64xf32>
    %63 = arith.subf %59, %62 : vector<64x64xf32>
    %64 = math.exp %63 : vector<64x64xf32>
    %cst_32 = arith.constant dense<0.000000e+00> : vector<64xf32>
    %65 = vector.multi_reduction <add>, %64, %cst_32 [1] : vector<64x64xf32> to vector<64xf32>
    %66 = vector.shape_cast %65 : vector<64xf32> to vector<64x1xf32>
    %67 = tpu.reciprocal %66 {approx = true} : vector<64x1xf32> -> vector<64x1xf32>
    %68 = vector.broadcast %67 : vector<64x1xf32> to vector<64x64xf32>
    %69 = arith.mulf %64, %68 : vector<64x64xf32>
    %70 = arith.truncf %69 : vector<64x64xf32> to vector<64x64xbf16>
    %cst_33 = arith.constant dense<0.000000e+00> : vector<64x16xf32>
    %71 = tpu.matmul %70, %56, %cst_33 {dimension_numbers = #tpu.dot_dimension_numbers<[1], [0], [0], [1], [0, 0, 1, 1], [], []>} : vector<64x64xbf16>, vector<64x16xbf16>, vector<64x16xf32> -> vector<64x16xf32>
    %72 = arith.truncf %71 : vector<64x16xf32> to vector<64x16xbf16>
    %c1 = arith.constant 1 : index
    %c0_34 = arith.constant 0 : index
    %c0_35 = arith.constant 0 : index
    %73 = vector.load %arg8[%c1, %c0_34, %c0_35] : memref<4x16x64xbf16, #tpu.memory_space<vmem>>, vector<1x16x64xbf16>
    %74 = vector.shape_cast %73 : vector<1x16x64xbf16> to vector<16x64xbf16>
    %cst_36 = arith.constant dense<0.000000e+00> : vector<64x64xf32>
    %75 = tpu.matmul %72, %74, %cst_36 {dimension_numbers = #tpu.dot_dimension_numbers<[1], [0], [0], [1], [0, 0, 1, 1], [], []>} : vector<64x16xbf16>, vector<16x64xbf16>, vector<64x64xf32> -> vector<64x64xf32>
    %76 = arith.addf %53, %75 : vector<64x64xf32>
    %77 = vector.extract_strided_slice %27 {offsets = [0, 32], sizes = [64, 16], strides = [1, 1]} : vector<64x64xbf16> to vector<64x16xbf16>
    %78 = vector.extract_strided_slice %25 {offsets = [0, 32], sizes = [64, 16], strides = [1, 1]} : vector<64x128xbf16> to vector<64x16xbf16>
    %79 = vector.extract_strided_slice %25 {offsets = [0, 96], sizes = [64, 16], strides = [1, 1]} : vector<64x128xbf16> to vector<64x16xbf16>
    %cst_37 = arith.constant dense<0.000000e+00> : vector<64x64xf32>
    %80 = tpu.matmul %77, %78, %cst_37 {dimension_numbers = #tpu.dot_dimension_numbers<[1], [1], [0], [0], [0, 0, 1, 0], [], []>} : vector<64x16xbf16>, vector<64x16xbf16>, vector<64x64xf32> -> vector<64x64xf32>
    %cst_38 = arith.constant 2.500000e-01 : f32
    %81 = vector.broadcast %cst_38 : f32 to vector<64x64xf32>
    %82 = arith.mulf %80, %81 : vector<64x64xf32>
    %cst_39 = arith.constant dense<0xFF800000> : vector<64xf32>
    %83 = vector.multi_reduction <maximumf>, %82, %cst_39 [1] : vector<64x64xf32> to vector<64xf32>
    %84 = vector.shape_cast %83 : vector<64xf32> to vector<64x1xf32>
    %85 = vector.broadcast %84 : vector<64x1xf32> to vector<64x64xf32>
    %86 = arith.subf %82, %85 : vector<64x64xf32>
    %87 = math.exp %86 : vector<64x64xf32>
    %cst_40 = arith.constant dense<0.000000e+00> : vector<64xf32>
    %88 = vector.multi_reduction <add>, %87, %cst_40 [1] : vector<64x64xf32> to vector<64xf32>
    %89 = vector.shape_cast %88 : vector<64xf32> to vector<64x1xf32>
    %90 = tpu.reciprocal %89 {approx = true} : vector<64x1xf32> -> vector<64x1xf32>
    %91 = vector.broadcast %90 : vector<64x1xf32> to vector<64x64xf32>
    %92 = arith.mulf %87, %91 : vector<64x64xf32>
    %93 = arith.truncf %92 : vector<64x64xf32> to vector<64x64xbf16>
    %cst_41 = arith.constant dense<0.000000e+00> : vector<64x16xf32>
    %94 = tpu.matmul %93, %79, %cst_41 {dimension_numbers = #tpu.dot_dimension_numbers<[1], [0], [0], [1], [0, 0, 1, 1], [], []>} : vector<64x64xbf16>, vector<64x16xbf16>, vector<64x16xf32> -> vector<64x16xf32>
    %95 = arith.truncf %94 : vector<64x16xf32> to vector<64x16xbf16>
    %c2 = arith.constant 2 : index
    %c0_42 = arith.constant 0 : index
    %c0_43 = arith.constant 0 : index
    %96 = vector.load %arg8[%c2, %c0_42, %c0_43] : memref<4x16x64xbf16, #tpu.memory_space<vmem>>, vector<1x16x64xbf16>
    %97 = vector.shape_cast %96 : vector<1x16x64xbf16> to vector<16x64xbf16>
    %cst_44 = arith.constant dense<0.000000e+00> : vector<64x64xf32>
    %98 = tpu.matmul %95, %97, %cst_44 {dimension_numbers = #tpu.dot_dimension_numbers<[1], [0], [0], [1], [0, 0, 1, 1], [], []>} : vector<64x16xbf16>, vector<16x64xbf16>, vector<64x64xf32> -> vector<64x64xf32>
    %99 = arith.addf %76, %98 : vector<64x64xf32>
    %100 = vector.extract_strided_slice %27 {offsets = [0, 48], sizes = [64, 16], strides = [1, 1]} : vector<64x64xbf16> to vector<64x16xbf16>
    %101 = vector.extract_strided_slice %25 {offsets = [0, 48], sizes = [64, 16], strides = [1, 1]} : vector<64x128xbf16> to vector<64x16xbf16>
    %102 = vector.extract_strided_slice %25 {offsets = [0, 112], sizes = [64, 16], strides = [1, 1]} : vector<64x128xbf16> to vector<64x16xbf16>
    %cst_45 = arith.constant dense<0.000000e+00> : vector<64x64xf32>
    %103 = tpu.matmul %100, %101, %cst_45 {dimension_numbers = #tpu.dot_dimension_numbers<[1], [1], [0], [0], [0, 0, 1, 0], [], []>} : vector<64x16xbf16>, vector<64x16xbf16>, vector<64x64xf32> -> vector<64x64xf32>
    %cst_46 = arith.constant 2.500000e-01 : f32
    %104 = vector.broadcast %cst_46 : f32 to vector<64x64xf32>
    %105 = arith.mulf %103, %104 : vector<64x64xf32>
    %cst_47 = arith.constant dense<0xFF800000> : vector<64xf32>
    %106 = vector.multi_reduction <maximumf>, %105, %cst_47 [1] : vector<64x64xf32> to vector<64xf32>
    %107 = vector.shape_cast %106 : vector<64xf32> to vector<64x1xf32>
    %108 = vector.broadcast %107 : vector<64x1xf32> to vector<64x64xf32>
    %109 = arith.subf %105, %108 : vector<64x64xf32>
    %110 = math.exp %109 : vector<64x64xf32>
    %cst_48 = arith.constant dense<0.000000e+00> : vector<64xf32>
    %111 = vector.multi_reduction <add>, %110, %cst_48 [1] : vector<64x64xf32> to vector<64xf32>
    %112 = vector.shape_cast %111 : vector<64xf32> to vector<64x1xf32>
    %113 = tpu.reciprocal %112 {approx = true} : vector<64x1xf32> -> vector<64x1xf32>
    %114 = vector.broadcast %113 : vector<64x1xf32> to vector<64x64xf32>
    %115 = arith.mulf %110, %114 : vector<64x64xf32>
    %116 = arith.truncf %115 : vector<64x64xf32> to vector<64x64xbf16>
    %cst_49 = arith.constant dense<0.000000e+00> : vector<64x16xf32>
    %117 = tpu.matmul %116, %102, %cst_49 {dimension_numbers = #tpu.dot_dimension_numbers<[1], [0], [0], [1], [0, 0, 1, 1], [], []>} : vector<64x64xbf16>, vector<64x16xbf16>, vector<64x16xf32> -> vector<64x16xf32>
    %118 = arith.truncf %117 : vector<64x16xf32> to vector<64x16xbf16>
    %c3 = arith.constant 3 : index
    %c0_50 = arith.constant 0 : index
    %c0_51 = arith.constant 0 : index
    %119 = vector.load %arg8[%c3, %c0_50, %c0_51] : memref<4x16x64xbf16, #tpu.memory_space<vmem>>, vector<1x16x64xbf16>
    %120 = vector.shape_cast %119 : vector<1x16x64xbf16> to vector<16x64xbf16>
    %cst_52 = arith.constant dense<0.000000e+00> : vector<64x64xf32>
    %121 = tpu.matmul %118, %120, %cst_52 {dimension_numbers = #tpu.dot_dimension_numbers<[1], [0], [0], [1], [0, 0, 1, 1], [], []>} : vector<64x16xbf16>, vector<16x64xbf16>, vector<64x64xf32> -> vector<64x64xf32>
    %122 = arith.addf %99, %121 : vector<64x64xf32>
    %c0_53 = arith.constant 0 : index
    %c0_54 = arith.constant 0 : index
    %c0_55 = arith.constant 0 : index
    %123 = vector.load %arg10[%c0_53, %c0_54, %c0_55] : memref<1x64x64xf32, #tpu.memory_space<vmem>>, vector<1x64x64xf32>
    %124 = vector.shape_cast %123 : vector<1x64x64xf32> to vector<64x64xf32>
    %125 = vector.shape_cast %122 : vector<64x64xf32> to vector<1x64x64xf32>
    tpu.vector_store %arg10[%c0_53, %c0_54, %c0_55], %125 {strides = array<i32>} : memref<1x64x64xf32, #tpu.memory_space<vmem>>, vector<1x64x64xf32>,
    return
  }
  func.func @transform_0(%arg0: i32) -> (i32, i32, i32) {
    %c0_i32 = arith.constant 0 : i32
    %c0_i32_0 = arith.constant 0 : i32
    %c0_i32_1 = arith.constant 0 : i32
    return %arg0, %c0_i32, %c0_i32_0 : i32, i32, i32
  }
  func.func @transform_1(%arg0: i32) -> (i32, i32) {
    %c0_i32 = arith.constant 0 : i32
    %c0_i32_0 = arith.constant 0 : i32
    %c0_i32_1 = arith.constant 0 : i32
    return %c0_i32, %c0_i32_0 : i32, i32
  }
  func.func @transform_2(%arg0: i32) -> (i32, i32) {
    %c0_i32 = arith.constant 0 : i32
    %c0_i32_0 = arith.constant 0 : i32
    %c0_i32_1 = arith.constant 0 : i32
    return %c0_i32, %c0_i32_0 : i32, i32
  }
  func.func @transform_3(%arg0: i32) -> (i32, i32, i32) {
    %c0_i32 = arith.constant 0 : i32
    %c0_i32_0 = arith.constant 0 : i32
    %c0_i32_1 = arith.constant 0 : i32
    return %arg0, %c0_i32, %c0_i32_0 : i32, i32, i32
  }
  func.func @transform_4(%arg0: i32) -> (i32, i32, i32) {
    %c0_i32 = arith.constant 0 : i32
    %c0_i32_0 = arith.constant 0 : i32
    %c0_i32_1 = arith.constant 0 : i32
    return %arg0, %c0_i32, %c0_i32_0 : i32, i32, i32
  }
  func.func @transform_5(%arg0: i32) -> (i32, i32) {
    %c0_i32 = arith.constant 0 : i32
    %c0_i32_0 = arith.constant 0 : i32
    %c0_i32_1 = arith.constant 0 : i32
    return %c0_i32, %c0_i32_0 : i32, i32
  }
  func.func @transform_6(%arg0: i32) -> (i32, i32) {
    %c0_i32 = arith.constant 0 : i32
    %c0_i32_0 = arith.constant 0 : i32
    %c0_i32_1 = arith.constant 0 : i32
    return %c0_i32, %c0_i32_0 : i32, i32
  }
  func.func @transform_7(%arg0: i32) -> (i32, i32, i32) {
    %c0_i32 = arith.constant 0 : i32
    %c0_i32_0 = arith.constant 0 : i32
    %c0_i32_1 = arith.constant 0 : i32
    %c0_i32_2 = arith.constant 0 : i32
    return %c0_i32, %c0_i32_0, %c0_i32_1 : i32, i32, i32
  }
  func.func @transform_8(%arg0: i32) -> (i32, i32) {
    %c0_i32 = arith.constant 0 : i32
    %c0_i32_0 = arith.constant 0 : i32
    %c0_i32_1 = arith.constant 0 : i32
    return %c0_i32, %c0_i32_0 : i32, i32
  }
  func.func @transform_9(%arg0: i32) -> (i32, i32, i32) {
    %c0_i32 = arith.constant 0 : i32
    %c0_i32_0 = arith.constant 0 : i32
    %c0_i32_1 = arith.constant 0 : i32
    return %arg0, %c0_i32, %c0_i32_0 : i32, i32, i32
  }
}

</mosaic_0001>

<llo_original>
// kernel: hsi_wave_forward.5
$region0: #{hsi_wave_forward.5}
  #allocation0 [shape = 'u32[]', space=smem, size = 0x4, offset = 0x4, fixed_abs, tag = 'smem constant byte address 0x4 - core index']
  #allocation1 [shape = 'u32[72,128]{1,0:T(1,128)}', space=vmem, size = 0x9000, scoped, tag = 'internal scratch']
  %s0 = inlined_call_operand.vmem [shape: bf16[128,36], index: 0, kind: input, shape index: {}]
  %s1 = inlined_call_operand.vmem [shape: bf16[36,32], index: 1, kind: input, shape index: {}]
  %s2 = inlined_call_operand.vmem [shape: f32[1,32], index: 2, kind: input, shape index: {}]
  %s3 = inlined_call_operand.vmem [shape: bf16[128,32], index: 3, kind: output, shape index: {}]
  %s4 = sld [smem:[#allocation0]]
  $region22: #{hsi_wave_forward.5} parent=0
    _
  %s6 = ssub.s32 1, %s4
  %s7 = scalar_select 0, %s6, %s4
  // Predicated region
  $region2: #{hsi_wave_forward.5} parent=0 // pred_check
    _
  $region3: #{hsi_wave_forward.5} parent=0 // pred_check_branch
    %9 = sbr.rel (0) target = $region5
  $region4: #{hsi_wave_forward.5} parent=0 // pred_region
    _
  $region5: #{hsi_wave_forward.5} parent=0 // pred_fallthru
    _
  // Predicated region
  $region6: #{hsi_wave_forward.5} parent=0 // pred_check
    _
  $region7: #{hsi_wave_forward.5} parent=0 // pred_check_branch
    %11 = sbr.rel (0) target = $region9
  $region8: #{hsi_wave_forward.5} parent=0 // pred_region
    _
  $region9: #{hsi_wave_forward.5} parent=0 // pred_fallthru
    _
  // Predicated region
  $region10: #{hsi_wave_forward.5} parent=0 // pred_check
    _
  $region11: #{hsi_wave_forward.5} parent=0 // pred_check_branch
    %13 = sbr.rel (0) target = $region13
  $region12: #{hsi_wave_forward.5} parent=0 // pred_region
    _
  $region13: #{hsi_wave_forward.5} parent=0 // pred_fallthru
    _
  %v15 = vld [vmem:[%s0] sm:$0xf]
  %v16 = vld [vmem:[%s0 + $0x4] sm:$0xf]
  %v17 = vld [vmem:[%s0 + $0x8] sm:$0xf]
  %v18 = vld [vmem:[%s0 + $0xc] sm:$0xf]
  %v19 = vld [vmem:[%s0 + $0x10] sm:$0xf]
  %v20 = vld [vmem:[%s0 + $0x14] sm:$0xf]
  %v21 = vld [vmem:[%s0 + $0x18] sm:$0xf]
  %v22 = vld [vmem:[%s0 + $0x1c] sm:$0xf]
  %v23 = vld [vmem:[%s0 + $0x20] sm:$0xf]
  %v24 = vld [vmem:[%s0 + $0x24] sm:$0xf]
  %v25 = vld [vmem:[%s0 + $0x28] sm:$0xf]
  %v26 = vld [vmem:[%s0 + $0x2c] sm:$0xf]
  %v27 = vld [vmem:[%s0 + $0x30] sm:$0xf]
  %v28 = vld [vmem:[%s0 + $0x34] sm:$0xf]
  %v29 = vld [vmem:[%s0 + $0x38] sm:$0xf]
  %v30 = vld [vmem:[%s0 + $0x3c] sm:$0xf]
  %v31 = vld [vmem:[%s1] sm:$0xf]
  %v32 = vld [vmem:[%s1 + $0x4] sm:$0xf]
  %v33 = vld [vmem:[%s1 + $0x8] sm:$0xf]
  %v34 = vld [vmem:[%s1 + $0xc] sm:$0xf]
  %v35 = vld [vmem:[%s1 + $0x10] sm:$0x3]
  %v36 = vld [vmem:[%s2] sm:$0x1]
  %v38 = vperm.slane %v36, 0
  %v56 = vunpack.c.l.b16 %v15
  %v57 = vunpack.c.l.b16 %v16
  %v58 = vunpack.c.l.b16 %v17
  %v59 = vunpack.c.l.b16 %v18
  %v60 = vunpack.c.l.b16 %v19
  %v61 = vunpack.c.l.b16 %v20
  %v62 = vunpack.c.l.b16 %v21
  %v63 = vunpack.c.l.b16 %v22
  %v64 = vunpack.c.l.b16 %v23
  %v65 = vunpack.c.l.b16 %v24
  %v66 = vunpack.c.l.b16 %v25
  %v67 = vunpack.c.l.b16 %v26
  %v68 = vunpack.c.l.b16 %v27
  %v69 = vunpack.c.l.b16 %v28
  %v70 = vunpack.c.l.b16 %v29
  %v71 = vunpack.c.l.b16 %v30
  %v72 = vpack.c.b16 %v57, %v56
  %v73 = vpack.c.b16 %v59, %v58
  %v74 = vpack.c.b16 %v61, %v60
  %v75 = vpack.c.b16 %v63, %v62
  %v76 = vpack.c.b16 %v65, %v64
  %v77 = vpack.c.b16 %v67, %v66
  %v78 = vpack.c.b16 %v69, %v68
  %v79 = vpack.c.b16 %v71, %v70
  %v85 = vunpack.c.l.b16 %v31
  %v86 = vunpack.c.l.b16 %v32
  %v87 = vunpack.c.l.b16 %v33
  %v88 = vunpack.c.l.b16 %v34
  %v89 = vunpack.c.l.b16 %v35
  %v90 = vpack.c.b16 %v86, %v85
  %v91 = vpack.c.b16 %v88, %v87
  %v92 = vpack.c.b16 %v89, %v89
  %vm95 = vcmask 293888
  %v97 = vsel %vm95, %v72, 0
  %v100 = vsel %vm95, %v73, 0
  %v103 = vsel %vm95, %v74, 0
  %v106 = vsel %vm95, %v75, 0
  %v109 = vsel %vm95, %v76, 0
  %v112 = vsel %vm95, %v77, 0
  %v115 = vsel %vm95, %v78, 0
  %v118 = vsel %vm95, %v79, 0
  %vm120 = vcmask 1041408
  %v122 = vsel %vm120, %v92, 0
  %124 = vmatpush.bf16.msra.mxu0 0
  %125 = vmatpush.bf16.msra.mxu0 0
  %126 = vmatpush.bf16.msra.mxu0 0
  %127 = vmatpush.bf16.msra.mxu0 0
  %128 = vmatpush.bf16.msra.mxu0 0
  %129 = vmatpush.bf16.msra.mxu0 %v122
  %130 = vmatpush.bf16.msra.mxu0 %v91
  %131 = vmatpush.bf16.msra.mxu0 %v90
  %132 = vmatmul.bf16.gmra.mxu0 %v97
  %v133 = vpop.f32.mrf.mxu0
  %v134 = vadd.f32 %v38, %v133
  %v135 = vpop.f32.mrf.mxu0
  %v136 = vadd.f32 %v38, %v135
  %137 = vmatmul.bf16.gmra.mxu0 %v100
  %v138 = vpop.f32.mrf.mxu0
  %v139 = vadd.f32 %v38, %v138
  %v140 = vpop.f32.mrf.mxu0
  %v141 = vadd.f32 %v38, %v140
  %142 = vmatmul.bf16.gmra.mxu0 %v103
  %v143 = vpop.f32.mrf.mxu0
  %v144 = vadd.f32 %v38, %v143
  %v145 = vpop.f32.mrf.mxu0
  %v146 = vadd.f32 %v38, %v145
  %147 = vmatmul.bf16.gmra.mxu0 %v106
  %v148 = vpop.f32.mrf.mxu0
  %v149 = vadd.f32 %v38, %v148
  %v150 = vpop.f32.mrf.mxu0
  %v151 = vadd.f32 %v38, %v150
  %152 = vmatmul.bf16.gmra.mxu0 %v109
  %v153 = vpop.f32.mrf.mxu0
  %v154 = vadd.f32 %v38, %v153
  %v155 = vpop.f32.mrf.mxu0
  %v156 = vadd.f32 %v38, %v155
  %157 = vmatmul.bf16.gmra.mxu0 %v112
  %v158 = vpop.f32.mrf.mxu0
  %v159 = vadd.f32 %v38, %v158
  %v160 = vpop.f32.mrf.mxu0
  %v161 = vadd.f32 %v38, %v160
  %162 = vmatmul.bf16.gmra.mxu0 %v115
  %v163 = vpop.f32.mrf.mxu0
  %v164 = vadd.f32 %v38, %v163
  %v165 = vpop.f32.mrf.mxu0
  %v166 = vadd.f32 %v38, %v165
  %167 = vmatmul.bf16.gmra.mxu0 %v118
  %v168 = vpop.f32.mrf.mxu0
  %v169 = vadd.f32 %v38, %v168
  %v170 = vpop.f32.mrf.mxu0
  %v171 = vadd.f32 %v38, %v170
  %172 = vdwg.mxu0
  %v173 = vmax.f32 %v134, 0.0
  %v174 = vmax.f32 %v136, 0.0
  %v175 = vmax.f32 %v139, 0.0
  %v176 = vmax.f32 %v141, 0.0
  %v177 = vmax.f32 %v144, 0.0
  %v178 = vmax.f32 %v146, 0.0
  %v179 = vmax.f32 %v149, 0.0
  %v180 = vmax.f32 %v151, 0.0
  %v181 = vmax.f32 %v154, 0.0
  %v182 = vmax.f32 %v156, 0.0
  %v183 = vmax.f32 %v159, 0.0
  %v184 = vmax.f32 %v161, 0.0
  %v185 = vmax.f32 %v164, 0.0
  %v186 = vmax.f32 %v166, 0.0
  %v187 = vmax.f32 %v169, 0.0
  %v188 = vmax.f32 %v171, 0.0
  %v189 = vpack.c.bf16 %v173, %v173
  %v190 = vpack.c.bf16 %v174, %v174
  %v191 = vpack.c.bf16 %v175, %v175
  %v192 = vpack.c.bf16 %v176, %v176
  %v193 = vpack.c.bf16 %v177, %v177
  %v194 = vpack.c.bf16 %v178, %v178
  %v195 = vpack.c.bf16 %v179, %v179
  %v196 = vpack.c.bf16 %v180, %v180
  %v197 = vpack.c.bf16 %v181, %v181
  %v198 = vpack.c.bf16 %v182, %v182
  %v199 = vpack.c.bf16 %v183, %v183
  %v200 = vpack.c.bf16 %v184, %v184
  %v201 = vpack.c.bf16 %v185, %v185
  %v202 = vpack.c.bf16 %v186, %v186
  %v203 = vpack.c.bf16 %v187, %v187
  %v204 = vpack.c.bf16 %v188, %v188
  %vm205 = vcmask 257024
  %206 = vst.msk [vmem:[%s3] sm:$0xf] %vm205, %v189
  %207 = vst.msk [vmem:[%s3 + $0x4] sm:$0xf] %vm205, %v190
  %208 = vst.msk [vmem:[%s3 + $0x8] sm:$0xf] %vm205, %v191
  %209 = vst.msk [vmem:[%s3 + $0xc] sm:$0xf] %vm205, %v192
  %210 = vst.msk [vmem:[%s3 + $0x10] sm:$0xf] %vm205, %v193
  %211 = vst.msk [vmem:[%s3 + $0x14] sm:$0xf] %vm205, %v194
  %212 = vst.msk [vmem:[%s3 + $0x18] sm:$0xf] %vm205, %v195
  %213 = vst.msk [vmem:[%s3 + $0x1c] sm:$0xf] %vm205, %v196
  %214 = vst.msk [vmem:[%s3 + $0x20] sm:$0xf] %vm205, %v197
  %215 = vst.msk [vmem:[%s3 + $0x24] sm:$0xf] %vm205, %v198
  %216 = vst.msk [vmem:[%s3 + $0x28] sm:$0xf] %vm205, %v199
  %217 = vst.msk [vmem:[%s3 + $0x2c] sm:$0xf] %vm205, %v200
  %218 = vst.msk [vmem:[%s3 + $0x30] sm:$0xf] %vm205, %v201
  %219 = vst.msk [vmem:[%s3 + $0x34] sm:$0xf] %vm205, %v202
  %220 = vst.msk [vmem:[%s3 + $0x38] sm:$0xf] %vm205, %v203
  %221 = vst.msk [vmem:[%s3 + $0x3c] sm:$0xf] %vm205, %v204
  // Predicated region
  $region14: #{hsi_wave_forward.5} parent=0 // pred_check
    _
  $region15: #{hsi_wave_forward.5} parent=0 // pred_check_branch
    %223 = sbr.rel (0) target = $region17
  $region16: #{hsi_wave_forward.5} parent=0 // pred_region
    _
  $region17: #{hsi_wave_forward.5} parent=0 // pred_fallthru
    _
  // Predicated region
  $region18: #{hsi_wave_forward.5} parent=0 // pred_check
    _
  $region19: #{hsi_wave_forward.5} parent=0 // pred_check_branch
    %225 = sbr.rel (0) target = $region21
  $region20: #{hsi_wave_forward.5} parent=0 // pred_region
    _
  $region21: #{hsi_wave_forward.5} parent=0 // pred_fallthru
    _

// kernel: hsi_wave_forward.4
$region0: #{hsi_wave_forward.4}
  #allocation0 [shape = 'u32[]', space=smem, size = 0x4, offset = 0x4, fixed_abs, tag = 'smem constant byte address 0x4 - core index']
  #allocation1 [shape = 'u32[72,128]{1,0:T(1,128)}', space=vmem, size = 0x9000, scoped, tag = 'internal scratch']
  %s0 = inlined_call_operand.vmem [shape: f32[128,4], index: 0, kind: input, shape index: {}]
  %s1 = inlined_call_operand.vmem [shape: f32[128,4], index: 1, kind: input, shape index: {}]
  %s2 = inlined_call_operand.vmem [shape: f32[128,4], index: 2, kind: input, shape index: {}]
  %s3 = inlined_call_operand.vmem [shape: f32[128,4], index: 3, kind: input, shape index: {}]
  %s4 = inlined_call_operand.vmem [shape: bf16[3,4,64], index: 4, kind: input, shape index: {}]
  %s5 = inlined_call_operand.vmem [shape: f32[1,64], index: 5, kind: input, shape index: {}]
  %s6 = inlined_call_operand.vmem [shape: bf16[64,64], index: 6, kind: input, shape index: {}]
  %s7 = inlined_call_operand.vmem [shape: f32[1,64], index: 7, kind: input, shape index: {}]
  %s8 = inlined_call_operand.vmem [shape: f32[128,4], index: 8, kind: output, shape index: {0}]
  %s9 = inlined_call_operand.vmem [shape: bf16[128,64], index: 9, kind: output, shape index: {1}]
  %10 = xla_tuple %s8, %s9
  %s11 = sld [smem:[#allocation0]]
  $region50: #{hsi_wave_forward.4} parent=0
    _
  %s13 = ssub.s32 1, %s11
  %s14 = scalar_select 0, %s13, %s11
  // Predicated region
  $region2: #{hsi_wave_forward.4} parent=0 // pred_check
    _
  $region3: #{hsi_wave_forward.4} parent=0 // pred_check_branch
    %16 = sbr.rel (0) target = $region5
  $region4: #{hsi_wave_forward.4} parent=0 // pred_region
    _
  $region5: #{hsi_wave_forward.4} parent=0 // pred_fallthru
    _
  // Predicated region
  $region6: #{hsi_wave_forward.4} parent=0 // pred_check
    _
  $region7: #{hsi_wave_forward.4} parent=0 // pred_check_branch
    %18 = sbr.rel (0) target = $region9
  $region8: #{hsi_wave_forward.4} parent=0 // pred_region
    _
  $region9: #{hsi_wave_forward.4} parent=0 // pred_fallthru
    _
  // Predicated region
  $region10: #{hsi_wave_forward.4} parent=0 // pred_check
    _
  $region11: #{hsi_wave_forward.4} parent=0 // pred_check_branch
    %20 = sbr.rel (0) target = $region13
  $region12: #{hsi_wave_forward.4} parent=0 // pred_region
    _
  $region13: #{hsi_wave_forward.4} parent=0 // pred_fallthru
    _
  // Predicated region
  $region14: #{hsi_wave_forward.4} parent=0 // pred_check
    _
  $region15: #{hsi_wave_forward.4} parent=0 // pred_check_branch
    %22 = sbr.rel (0) target = $region17
  $region16: #{hsi_wave_forward.4} parent=0 // pred_region
    _
  $region17: #{hsi_wave_forward.4} parent=0 // pred_fallthru
    _
  // Predicated region
  $region18: #{hsi_wave_forward.4} parent=0 // pred_check
    _
  $region19: #{hsi_wave_forward.4} parent=0 // pred_check_branch
    %24 = sbr.rel (0) target = $region21
  $region20: #{hsi_wave_forward.4} parent=0 // pred_region
    _
  $region21: #{hsi_wave_forward.4} parent=0 // pred_fallthru
    _
  // Predicated region
  $region22: #{hsi_wave_forward.4} parent=0 // pred_check
    _
  $region23: #{hsi_wave_forward.4} parent=0 // pred_check_branch
    %26 = sbr.rel (0) target = $region25
  $region24: #{hsi_wave_forward.4} parent=0 // pred_region
    _
  $region25: #{hsi_wave_forward.4} parent=0 // pred_fallthru
    _
  // Predicated region
  $region26: #{hsi_wave_forward.4} parent=0 // pred_check
    _
  $region27: #{hsi_wave_forward.4} parent=0 // pred_check_branch
    %28 = sbr.rel (0) target = $region29
  $region28: #{hsi_wave_forward.4} parent=0 // pred_region
    _
  $region29: #{hsi_wave_forward.4} parent=0 // pred_fallthru
    _
  // Predicated region
  $region30: #{hsi_wave_forward.4} parent=0 // pred_check
    _
  $region31: #{hsi_wave_forward.4} parent=0 // pred_check_branch
    %30 = sbr.rel (0) target = $region33
  $region32: #{hsi_wave_forward.4} parent=0 // pred_region
    _
  $region33: #{hsi_wave_forward.4} parent=0 // pred_fallthru
    _
  %v32 = vld [vmem:[%s0] sm:$0xff]
  %v33 = vld [vmem:[%s0 + $0x8] sm:$0xff]
  %v34 = vld [vmem:[%s0 + $0x10] sm:$0xff]
  %v35 = vld [vmem:[%s0 + $0x18] sm:$0xff]
  %v36 = vld [vmem:[%s0 + $0x20] sm:$0xff]
  %v37 = vld [vmem:[%s0 + $0x28] sm:$0xff]
  %v38 = vld [vmem:[%s0 + $0x30] sm:$0xff]
  %v39 = vld [vmem:[%s0 + $0x38] sm:$0xff]
  %v40 = vld [vmem:[%s0 + $0x40] sm:$0xff]
  %v41 = vld [vmem:[%s0 + $0x48] sm:$0xff]
  %v42 = vld [vmem:[%s0 + $0x50] sm:$0xff]
  %v43 = vld [vmem:[%s0 + $0x58] sm:$0xff]
  %v44 = vld [vmem:[%s0 + $0x60] sm:$0xff]
  %v45 = vld [vmem:[%s0 + $0x68] sm:$0xff]
  %v46 = vld [vmem:[%s0 + $0x70] sm:$0xff]
  %v47 = vld [vmem:[%s0 + $0x78] sm:$0xff]
  %v48 = vld [vmem:[%s1] sm:$0xff]
  %v49 = vld [vmem:[%s1 + $0x8] sm:$0xff]
  %v50 = vld [vmem:[%s1 + $0x10] sm:$0xff]
  %v51 = vld [vmem:[%s1 + $0x18] sm:$0xff]
  %v52 = vld [vmem:[%s1 + $0x20] sm:$0xff]
  %v53 = vld [vmem:[%s1 + $0x28] sm:$0xff]
  %v54 = vld [vmem:[%s1 + $0x30] sm:$0xff]
  %v55 = vld [vmem:[%s1 + $0x38] sm:$0xff]
  %v56 = vld [vmem:[%s1 + $0x40] sm:$0xff]
  %v57 = vld [vmem:[%s1 + $0x48] sm:$0xff]
  %v58 = vld [vmem:[%s1 + $0x50] sm:$0xff]
  %v59 = vld [vmem:[%s1 + $0x58] sm:$0xff]
  %v60 = vld [vmem:[%s1 + $0x60] sm:$0xff]
  %v61 = vld [vmem:[%s1 + $0x68] sm:$0xff]
  %v62 = vld [vmem:[%s1 + $0x70] sm:$0xff]
  %v63 = vld [vmem:[%s1 + $0x78] sm:$0xff]
  %v64 = vld [vmem:[%s2] sm:$0xff]
  %v65 = vld [vmem:[%s2 + $0x8] sm:$0xff]
  %v66 = vld [vmem:[%s2 + $0x10] sm:$0xff]
  %v67 = vld [vmem:[%s2 + $0x18] sm:$0xff]
  %v68 = vld [vmem:[%s2 + $0x20] sm:$0xff]
  %v69 = vld [vmem:[%s2 + $0x28] sm:$0xff]
  %v70 = vld [vmem:[%s2 + $0x30] sm:$0xff]
  %v71 = vld [vmem:[%s2 + $0x38] sm:$0xff]
  %v72 = vld [vmem:[%s2 + $0x40] sm:$0xff]
  %v73 = vld [vmem:[%s2 + $0x48] sm:$0xff]
  %v74 = vld [vmem:[%s2 + $0x50] sm:$0xff]
  %v75 = vld [vmem:[%s2 + $0x58] sm:$0xff]
  %v76 = vld [vmem:[%s2 + $0x60] sm:$0xff]
  %v77 = vld [vmem:[%s2 + $0x68] sm:$0xff]
  %v78 = vld [vmem:[%s2 + $0x70] sm:$0xff]
  %v79 = vld [vmem:[%s2 + $0x78] sm:$0xff]
  %v80 = vld [vmem:[%s3] sm:$0xff]
  %v81 = vld [vmem:[%s3 + $0x8] sm:$0xff]
  %v82 = vld [vmem:[%s3 + $0x10] sm:$0xff]
  %v83 = vld [vmem:[%s3 + $0x18] sm:$0xff]
  %v84 = vld [vmem:[%s3 + $0x20] sm:$0xff]
  %v85 = vld [vmem:[%s3 + $0x28] sm:$0xff]
  %v86 = vld [vmem:[%s3 + $0x30] sm:$0xff]
  %v87 = vld [vmem:[%s3 + $0x38] sm:$0xff]
  %v88 = vld [vmem:[%s3 + $0x40] sm:$0xff]
  %v89 = vld [vmem:[%s3 + $0x48] sm:$0xff]
  %v90 = vld [vmem:[%s3 + $0x50] sm:$0xff]
  %v91 = vld [vmem:[%s3 + $0x58] sm:$0xff]
  %v92 = vld [vmem:[%s3 + $0x60] sm:$0xff]
  %v93 = vld [vmem:[%s3 + $0x68] sm:$0xff]
  %v94 = vld [vmem:[%s3 + $0x70] sm:$0xff]
  %v95 = vld [vmem:[%s3 + $0x78] sm:$0xff]
  %v96 = vadd.f32 %v32, %v48
  %v97 = vadd.f32 %v33, %v49
  %v98 = vadd.f32 %v34, %v50
  %v99 = vadd.f32 %v35, %v51
  %v100 = vadd.f32 %v36, %v52
  %v101 = vadd.f32 %v37, %v53
  %v102 = vadd.f32 %v38, %v54
  %v103 = vadd.f32 %v39, %v55
  %v104 = vadd.f32 %v40, %v56
  %v105 = vadd.f32 %v41, %v57
  %v106 = vadd.f32 %v42, %v58
  %v107 = vadd.f32 %v43, %v59
  %v108 = vadd.f32 %v44, %v60
  %v109 = vadd.f32 %v45, %v61
  %v110 = vadd.f32 %v46, %v62
  %v111 = vadd.f32 %v47, %v63
  %v112 = vadd.f32 %v96, %v64
  %v113 = vadd.f32 %v97, %v65
  %v114 = vadd.f32 %v98, %v66
  %v115 = vadd.f32 %v99, %v67
  %v116 = vadd.f32 %v100, %v68
  %v117 = vadd.f32 %v101, %v69
  %v118 = vadd.f32 %v102, %v70
  %v119 = vadd.f32 %v103, %v71
  %v120 = vadd.f32 %v104, %v72
  %v121 = vadd.f32 %v105, %v73
  %v122 = vadd.f32 %v106, %v74
  %v123 = vadd.f32 %v107, %v75
  %v124 = vadd.f32 %v108, %v76
  %v125 = vadd.f32 %v109, %v77
  %v126 = vadd.f32 %v110, %v78
  %v127 = vadd.f32 %v111, %v79
  %v128 = vadd.f32 %v112, %v80
  %v129 = vadd.f32 %v113, %v81
  %v130 = vadd.f32 %v114, %v82
  %v131 = vadd.f32 %v115, %v83
  %v132 = vadd.f32 %v116, %v84
  %v133 = vadd.f32 %v117, %v85
  %v134 = vadd.f32 %v118, %v86
  %v135 = vadd.f32 %v119, %v87
  %v136 = vadd.f32 %v120, %v88
  %v137 = vadd.f32 %v121, %v89
  %v138 = vadd.f32 %v122, %v90
  %v139 = vadd.f32 %v123, %v91
  %v140 = vadd.f32 %v124, %v92
  %v141 = vadd.f32 %v125, %v93
  %v142 = vadd.f32 %v126, %v94
  %v143 = vadd.f32 %v127, %v95
  %v144 = vmul.f32 %v128, 0.5
  %v145 = vmul.f32 %v129, 0.5
  %v146 = vmul.f32 %v130, 0.5
  %v147 = vmul.f32 %v131, 0.5
  %v148 = vmul.f32 %v132, 0.5
  %v149 = vmul.f32 %v133, 0.5
  %v150 = vmul.f32 %v134, 0.5
  %v151 = vmul.f32 %v135, 0.5
  %v152 = vmul.f32 %v136, 0.5
  %v153 = vmul.f32 %v137, 0.5
  %v154 = vmul.f32 %v138, 0.5
  %v155 = vmul.f32 %v139, 0.5
  %v156 = vmul.f32 %v140, 0.5
  %v157 = vmul.f32 %v141, 0.5
  %v158 = vmul.f32 %v142, 0.5
  %v159 = vmul.f32 %v143, 0.5
  %vm160 = vcmask 31744
  %161 = vst.msk [vmem:[%s8] sm:$0xff] %vm160, %v144
  %162 = vst.msk [vmem:[%s8 + $0x8] sm:$0xff] %vm160, %v145
  %163 = vst.msk [vmem:[%s8 + $0x10] sm:$0xff] %vm160, %v146
  %164 = vst.msk [vmem:[%s8 + $0x18] sm:$0xff] %vm160, %v147
  %165 = vst.msk [vmem:[%s8 + $0x20] sm:$0xff] %vm160, %v148
  %166 = vst.msk [vmem:[%s8 + $0x28] sm:$0xff] %vm160, %v149
  %167 = vst.msk [vmem:[%s8 + $0x30] sm:$0xff] %vm160, %v150
  %168 = vst.msk [vmem:[%s8 + $0x38] sm:$0xff] %vm160, %v151
  %169 = vst.msk [vmem:[%s8 + $0x40] sm:$0xff] %vm160, %v152
  %170 = vst.msk [vmem:[%s8 + $0x48] sm:$0xff] %vm160, %v153
  %171 = vst.msk [vmem:[%s8 + $0x50] sm:$0xff] %vm160, %v154
  %172 = vst.msk [vmem:[%s8 + $0x58] sm:$0xff] %vm160, %v155
  %173 = vst.msk [vmem:[%s8 + $0x60] sm:$0xff] %vm160, %v156
  %174 = vst.msk [vmem:[%s8 + $0x68] sm:$0xff] %vm160, %v157
  %175 = vst.msk [vmem:[%s8 + $0x70] sm:$0xff] %vm160, %v158
  %176 = vst.msk [vmem:[%s8 + $0x78] sm:$0xff] %vm160, %v159
  %v177 = vadd.f32 %v64, %v80
  %v178 = vadd.f32 %v65, %v81
  %v179 = vadd.f32 %v66, %v82
  %v180 = vadd.f32 %v67, %v83
  %v181 = vadd.f32 %v68, %v84
  %v182 = vadd.f32 %v69, %v85
  %v183 = vadd.f32 %v70, %v86
  %v184 = vadd.f32 %v71, %v87
  %v185 = vadd.f32 %v72, %v88
  %v186 = vadd.f32 %v73, %v89
  %v187 = vadd.f32 %v74, %v90
  %v188 = vadd.f32 %v75, %v91
  %v189 = vadd.f32 %v76, %v92
  %v190 = vadd.f32 %v77, %v93
  %v191 = vadd.f32 %v78, %v94
  %v192 = vadd.f32 %v79, %v95
  %v193 = vsub.f32 %v177, %v96
  %v194 = vsub.f32 %v178, %v97
  %v195 = vsub.f32 %v179, %v98
  %v196 = vsub.f32 %v180, %v99
  %v197 = vsub.f32 %v181, %v100
  %v198 = vsub.f32 %v182, %v101
  %v199 = vsub.f32 %v183, %v102
  %v200 = vsub.f32 %v184, %v103
  %v201 = vsub.f32 %v185, %v104
  %v202 = vsub.f32 %v186, %v105
  %v203 = vsub.f32 %v187, %v106
  %v204 = vsub.f32 %v188, %v107
  %v205 = vsub.f32 %v189, %v108
  %v206 = vsub.f32 %v190, %v109
  %v207 = vsub.f32 %v191, %v110
  %v208 = vsub.f32 %v192, %v111
  %v209 = vmul.f32 %v193, 0.5
  %v210 = vmul.f32 %v194, 0.5
  %v211 = vmul.f32 %v195, 0.5
  %v212 = vmul.f32 %v196, 0.5
  %v213 = vmul.f32 %v197, 0.5
  %v214 = vmul.f32 %v198, 0.5
  %v215 = vmul.f32 %v199, 0.5
  %v216 = vmul.f32 %v200, 0.5
  %v217 = vmul.f32 %v201, 0.5
  %v218 = vmul.f32 %v202, 0.5
  %v219 = vmul.f32 %v203, 0.5
  %v220 = vmul.f32 %v204, 0.5
  %v221 = vmul.f32 %v205, 0.5
  %v222 = vmul.f32 %v206, 0.5
  %v223 = vmul.f32 %v207, 0.5
  %v224 = vmul.f32 %v208, 0.5
  %v225 = vadd.f32 %v48, %v80
  %v226 = vadd.f32 %v49, %v81
  %v227 = vadd.f32 %v50, %v82
  %v228 = vadd.f32 %v51, %v83
  %v229 = vadd.f32 %v52, %v84
  %v230 = vadd.f32 %v53, %v85
  %v231 = vadd.f32 %v54, %v86
  %v232 = vadd.f32 %v55, %v87
  %v233 = vadd.f32 %v56, %v88
  %v234 = vadd.f32 %v57, %v89
  %v235 = vadd.f32 %v58, %v90
  %v236 = vadd.f32 %v59, %v91
  %v237 = vadd.f32 %v60, %v92
  %v238 = vadd.f32 %v61, %v93
  %v239 = vadd.f32 %v62, %v94
  %v240 = vadd.f32 %v63, %v95
  %v241 = vadd.f32 %v32, %v64
  %v242 = vadd.f32 %v33, %v65
  %v243 = vadd.f32 %v34, %v66
  %v244 = vadd.f32 %v35, %v67
  %v245 = vadd.f32 %v36, %v68
  %v246 = vadd.f32 %v37, %v69
  %v247 = vadd.f32 %v38, %v70
  %v248 = vadd.f32 %v39, %v71
  %v249 = vadd.f32 %v40, %v72
  %v250 = vadd.f32 %v41, %v73
  %v251 = vadd.f32 %v42, %v74
  %v252 = vadd.f32 %v43, %v75
  %v253 = vadd.f32 %v44, %v76
  %v254 = vadd.f32 %v45, %v77
  %v255 = vadd.f32 %v46, %v78
  %v256 = vadd.f32 %v47, %v79
  %v257 = vsub.f32 %v225, %v241
  %v258 = vsub.f32 %v226, %v242
  %v259 = vsub.f32 %v227, %v243
  %v260 = vsub.f32 %v228, %v244
  %v261 = vsub.f32 %v229, %v245
  %v262 = vsub.f32 %v230, %v246
  %v263 = vsub.f32 %v231, %v247
  %v264 = vsub.f32 %v232, %v248
  %v265 = vsub.f32 %v233, %v249
  %v266 = vsub.f32 %v234, %v250
  %v267 = vsub.f32 %v235, %v251
  %v268 = vsub.f32 %v236, %v252
  %v269 = vsub.f32 %v237, %v253
  %v270 = vsub.f32 %v238, %v254
  %v271 = vsub.f32 %v239, %v255
  %v272 = vsub.f32 %v240, %v256
  %v273 = vmul.f32 %v257, 0.5
  %v274 = vmul.f32 %v258, 0.5
  %v275 = vmul.f32 %v259, 0.5
  %v276 = vmul.f32 %v260, 0.5
  %v277 = vmul.f32 %v261, 0.5
  %v278 = vmul.f32 %v262, 0.5
  %v279 = vmul.f32 %v263, 0.5
  %v280 = vmul.f32 %v264, 0.5
  %v281 = vmul.f32 %v265, 0.5
  %v282 = vmul.f32 %v266, 0.5
  %v283 = vmul.f32 %v267, 0.5
  %v284 = vmul.f32 %v268, 0.5
  %v285 = vmul.f32 %v269, 0.5
  %v286 = vmul.f32 %v270, 0.5
  %v287 = vmul.f32 %v271, 0.5
  %v288 = vmul.f32 %v272, 0.5
  %v289 = vadd.f32 %v32, %v80
  %v290 = vadd.f32 %v33, %v81
  %v291 = vadd.f32 %v34, %v82
  %v292 = vadd.f32 %v35, %v83
  %v293 = vadd.f32 %v36, %v84
  %v294 = vadd.f32 %v37, %v85
  %v295 = vadd.f32 %v38, %v86
  %v296 = vadd.f32 %v39, %v87
  %v297 = vadd.f32 %v40, %v88
  %v298 = vadd.f32 %v41, %v89
  %v299 = vadd.f32 %v42, %v90
  %v300 = vadd.f32 %v43, %v91
  %v301 = vadd.f32 %v44, %v92
  %v302 = vadd.f32 %v45, %v93
  %v303 = vadd.f32 %v46, %v94
  %v304 = vadd.f32 %v47, %v95
  %v305 = vadd.f32 %v48, %v64
  %v306 = vadd.f32 %v49, %v65
  %v307 = vadd.f32 %v50, %v66
  %v308 = vadd.f32 %v51, %v67
  %v309 = vadd.f32 %v52, %v68
  %v310 = vadd.f32 %v53, %v69
  %v311 = vadd.f32 %v54, %v70
  %v312 = vadd.f32 %v55, %v71
  %v313 = vadd.f32 %v56, %v72
  %v314 = vadd.f32 %v57, %v73
  %v315 = vadd.f32 %v58, %v74
  %v316 = vadd.f32 %v59, %v75
  %v317 = vadd.f32 %v60, %v76
  %v318 = vadd.f32 %v61, %v77
  %v319 = vadd.f32 %v62, %v78
  %v320 = vadd.f32 %v63, %v79
  %v321 = vsub.f32 %v289, %v305
  %v322 = vsub.f32 %v290, %v306
  %v323 = vsub.f32 %v291, %v307
  %v324 = vsub.f32 %v292, %v308
  %v325 = vsub.f32 %v293, %v309
  %v326 = vsub.f32 %v294, %v310
  %v327 = vsub.f32 %v295, %v311
  %v328 = vsub.f32 %v296, %v312
  %v329 = vsub.f32 %v297, %v313
  %v330 = vsub.f32 %v298, %v314
  %v331 = vsub.f32 %v299, %v315
  %v332 = vsub.f32 %v300, %v316
  %v333 = vsub.f32 %v301, %v317
  %v334 = vsub.f32 %v302, %v318
  %v335 = vsub.f32 %v303, %v319
  %v336 = vsub.f32 %v304, %v320
  %v337 = vmul.f32 %v321, 0.5
  %v338 = vmul.f32 %v322, 0.5
  %v339 = vmul.f32 %v323, 0.5
  %v340 = vmul.f32 %v324, 0.5
  %v341 = vmul.f32 %v325, 0.5
  %v342 = vmul.f32 %v326, 0.5
  %v343 = vmul.f32 %v327, 0.5
  %v344 = vmul.f32 %v328, 0.5
  %v345 = vmul.f32 %v329, 0.5
  %v346 = vmul.f32 %v330, 0.5
  %v347 = vmul.f32 %v331, 0.5
  %v348 = vmul.f32 %v332, 0.5
  %v349 = vmul.f32 %v333, 0.5
  %v350 = vmul.f32 %v334, 0.5
  %v351 = vmul.f32 %v335, 0.5
  %v352 = vmul.f32 %v336, 0.5
  %v353 = vpack.c.bf16 %v210, %v209
  %v354 = vpack.c.bf16 %v212, %v211
  %v355 = vpack.c.bf16 %v214, %v213
  %v356 = vpack.c.bf16 %v216, %v215
  %v357 = vpack.c.bf16 %v218, %v217
  %v358 = vpack.c.bf16 %v220, %v219
  %v359 = vpack.c.bf16 %v222, %v221
  %v360 = vpack.c.bf16 %v224, %v223
  %v361 = vld [vmem:[%s4] sm:$0x3]
  %v362 = vpack.c.bf16 %v274, %v273
  %v363 = vpack.c.bf16 %v276, %v275
  %v364 = vpack.c.bf16 %v278, %v277
  %v365 = vpack.c.bf16 %v280, %v279
  %v366 = vpack.c.bf16 %v282, %v281
  %v367 = vpack.c.bf16 %v284, %v283
  %v368 = vpack.c.bf16 %v286, %v285
  %v369 = vpack.c.bf16 %v288, %v287
  %s370 = scalar_lea.vmem %s4, 2
  %v371 = vld [vmem:[%s370] sm:$0x3]
  %v373 = vsel %vm160, %v362, 0
  %v376 = vsel %vm160, %v363, 0
  %v379 = vsel %vm160, %v364, 0
  %v382 = vsel %vm160, %v365, 0
  %v385 = vsel %vm160, %v366, 0
  %v388 = vsel %vm160, %v367, 0
  %v391 = vsel %vm160, %v368, 0
  %v394 = vsel %vm160, %v369, 0
  %vm396 = vcmask 1041408
  %v398 = vsel %vm396, %v371, 0
  %400 = vmatpush.bf16.msra.mxu0 0
  %401 = vmatpush.bf16.msra.mxu0 0
  %402 = vmatpush.bf16.msra.mxu0 0
  %403 = vmatpush.bf16.msra.mxu0 0
  %404 = vmatpush.bf16.msra.mxu0 0
  %405 = vmatpush.bf16.msra.mxu0 0
  %406 = vmatpush.bf16.msra.mxu0 0
  %407 = vmatpush.bf16.msra.mxu0 %v398
  %408 = vmatmul.bf16.gmra.mxu0 %v373
  %v409 = vpop.f32.mrf.mxu0
  %v410 = vadd.f32 0.0, %v409
  %v411 = vpop.f32.mrf.mxu0
  %v412 = vadd.f32 0.0, %v411
  %413 = vmatmul.bf16.gmra.mxu0 %v376
  %v414 = vpop.f32.mrf.mxu0
  %v415 = vadd.f32 0.0, %v414
  %v416 = vpop.f32.mrf.mxu0
  %v417 = vadd.f32 0.0, %v416
  %418 = vmatmul.bf16.gmra.mxu0 %v379
  %v419 = vpop.f32.mrf.mxu0
  %v420 = vadd.f32 0.0, %v419
  %v421 = vpop.f32.mrf.mxu0
  %v422 = vadd.f32 0.0, %v421
  %423 = vmatmul.bf16.gmra.mxu0 %v382
  %v424 = vpop.f32.mrf.mxu0
  %v425 = vadd.f32 0.0, %v424
  %v426 = vpop.f32.mrf.mxu0
  %v427 = vadd.f32 0.0, %v426
  %428 = vmatmul.bf16.gmra.mxu0 %v385
  %v429 = vpop.f32.mrf.mxu0
  %v430 = vadd.f32 0.0, %v429
  %v431 = vpop.f32.mrf.mxu0
  %v432 = vadd.f32 0.0, %v431
  %433 = vmatmul.bf16.gmra.mxu0 %v388
  %v434 = vpop.f32.mrf.mxu0
  %v435 = vadd.f32 0.0, %v434
  %v436 = vpop.f32.mrf.mxu0
  %v437 = vadd.f32 0.0, %v436
  %438 = vmatmul.bf16.gmra.mxu0 %v391
  %v439 = vpop.f32.mrf.mxu0
  %v440 = vadd.f32 0.0, %v439
  %v441 = vpop.f32.mrf.mxu0
  %v442 = vadd.f32 0.0, %v441
  %443 = vmatmul.bf16.gmra.mxu0 %v394
  %v444 = vpop.f32.mrf.mxu0
  %v445 = vadd.f32 0.0, %v444
  %v446 = vpop.f32.mrf.mxu0
  %v447 = vadd.f32 0.0, %v446
  %448 = vdwg.mxu0
  %v450 = vsel %vm160, %v353, 0
  %v453 = vsel %vm160, %v354, 0
  %v456 = vsel %vm160, %v355, 0
  %v459 = vsel %vm160, %v356, 0
  %v462 = vsel %vm160, %v357, 0
  %v465 = vsel %vm160, %v358, 0
  %v468 = vsel %vm160, %v359, 0
  %v471 = vsel %vm160, %v360, 0
  %v474 = vsel %vm396, %v361, 0
  %476 = vmatpush.bf16.msra.mxu0 0
  %477 = vmatpush.bf16.msra.mxu0 0
  %478 = vmatpush.bf16.msra.mxu0 0
  %479 = vmatpush.bf16.msra.mxu0 0
  %480 = vmatpush.bf16.msra.mxu0 0
  %481 = vmatpush.bf16.msra.mxu0 0
  %482 = vmatpush.bf16.msra.mxu0 0
  %483 = vmatpush.bf16.msra.mxu0 %v474
  %484 = vmatmul.bf16.gmra.mxu0 %v450
  %v485 = vpop.f32.mrf.mxu0
  %v486 = vadd.f32 %v410, %v485
  %v487 = vpop.f32.mrf.mxu0
  %v488 = vadd.f32 %v412, %v487
  %489 = vmatmul.bf16.gmra.mxu0 %v453
  %v490 = vpop.f32.mrf.mxu0
  %v491 = vadd.f32 %v415, %v490
  %v492 = vpop.f32.mrf.mxu0
  %v493 = vadd.f32 %v417, %v492
  %494 = vmatmul.bf16.gmra.mxu0 %v456
  %v495 = vpop.f32.mrf.mxu0
  %v496 = vadd.f32 %v420, %v495
  %v497 = vpop.f32.mrf.mxu0
  %v498 = vadd.f32 %v422, %v497
  %499 = vmatmul.bf16.gmra.mxu0 %v459
  %v500 = vpop.f32.mrf.mxu0
  %v501 = vadd.f32 %v425, %v500
  %v502 = vpop.f32.mrf.mxu0
  %v503 = vadd.f32 %v427, %v502
  %504 = vmatmul.bf16.gmra.mxu0 %v462
  %v505 = vpop.f32.mrf.mxu0
  %v506 = vadd.f32 %v430, %v505
  %v507 = vpop.f32.mrf.mxu0
  %v508 = vadd.f32 %v432, %v507
  %509 = vmatmul.bf16.gmra.mxu0 %v465
  %v510 = vpop.f32.mrf.mxu0
  %v511 = vadd.f32 %v435, %v510
  %v512 = vpop.f32.mrf.mxu0
  %v513 = vadd.f32 %v437, %v512
  %514 = vmatmul.bf16.gmra.mxu0 %v468
  %v515 = vpop.f32.mrf.mxu0
  %v516 = vadd.f32 %v440, %v515
  %v517 = vpop.f32.mrf.mxu0
  %v518 = vadd.f32 %v442, %v517
  %519 = vmatmul.bf16.gmra.mxu0 %v471
  %v520 = vpop.f32.mrf.mxu0
  %v521 = vadd.f32 %v445, %v520
  %v522 = vpop.f32.mrf.mxu0
  %v523 = vadd.f32 %v447, %v522
  %524 = vdwg.mxu0
  %v525 = vpack.c.bf16 %v338, %v337
  %v526 = vpack.c.bf16 %v340, %v339
  %v527 = vpack.c.bf16 %v342, %v341
  %v528 = vpack.c.bf16 %v344, %v343
  %v529 = vpack.c.bf16 %v346, %v345
  %v530 = vpack.c.bf16 %v348, %v347
  %v531 = vpack.c.bf16 %v350, %v349
  %v532 = vpack.c.bf16 %v352, %v351
  %s533 = scalar_lea.vmem %s4, 4
  %v534 = vld [vmem:[%s533] sm:$0x3]
  %v536 = vsel %vm160, %v525, 0
  %v539 = vsel %vm160, %v526, 0
  %v542 = vsel %vm160, %v527, 0
  %v545 = vsel %vm160, %v528, 0
  %v548 = vsel %vm160, %v529, 0
  %v551 = vsel %vm160, %v530, 0
  %v554 = vsel %vm160, %v531, 0
  %v557 = vsel %vm160, %v532, 0
  %v560 = vsel %vm396, %v534, 0
  %562 = vmatpush.bf16.msra.mxu0 0
  %563 = vmatpush.bf16.msra.mxu0 0
  %564 = vmatpush.bf16.msra.mxu0 0
  %565 = vmatpush.bf16.msra.mxu0 0
  %566 = vmatpush.bf16.msra.mxu0 0
  %567 = vmatpush.bf16.msra.mxu0 0
  %568 = vmatpush.bf16.msra.mxu0 0
  %569 = vmatpush.bf16.msra.mxu0 %v560
  %570 = vmatmul.bf16.gmra.mxu0 %v536
  %v571 = vpop.f32.mrf.mxu0
  %v572 = vadd.f32 0.0, %v571
  %v573 = vpop.f32.mrf.mxu0
  %v574 = vadd.f32 0.0, %v573
  %575 = vmatmul.bf16.gmra.mxu0 %v539
  %v576 = vpop.f32.mrf.mxu0
  %v577 = vadd.f32 0.0, %v576
  %v578 = vpop.f32.mrf.mxu0
  %v579 = vadd.f32 0.0, %v578
  %580 = vmatmul.bf16.gmra.mxu0 %v542
  %v581 = vpop.f32.mrf.mxu0
  %v582 = vadd.f32 0.0, %v581
  %v583 = vpop.f32.mrf.mxu0
  %v584 = vadd.f32 0.0, %v583
  %585 = vmatmul.bf16.gmra.mxu0 %v545
  %v586 = vpop.f32.mrf.mxu0
  %v587 = vadd.f32 0.0, %v586
  %v588 = vpop.f32.mrf.mxu0
  %v589 = vadd.f32 0.0, %v588
  %590 = vmatmul.bf16.gmra.mxu0 %v548
  %v591 = vpop.f32.mrf.mxu0
  %v592 = vadd.f32 0.0, %v591
  %v593 = vpop.f32.mrf.mxu0
  %v594 = vadd.f32 0.0, %v593
  %595 = vmatmul.bf16.gmra.mxu0 %v551
  %v596 = vpop.f32.mrf.mxu0
  %v597 = vadd.f32 0.0, %v596
  %v598 = vpop.f32.mrf.mxu0
  %v599 = vadd.f32 0.0, %v598
  %600 = vmatmul.bf16.gmra.mxu0 %v554
  %v601 = vpop.f32.mrf.mxu0
  %v602 = vadd.f32 0.0, %v601
  %v603 = vpop.f32.mrf.mxu0
  %v604 = vadd.f32 0.0, %v603
  %605 = vmatmul.bf16.gmra.mxu0 %v557
  %v606 = vpop.f32.mrf.mxu0
  %v607 = vadd.f32 0.0, %v606
  %v608 = vpop.f32.mrf.mxu0
  %v609 = vadd.f32 0.0, %v608
  %610 = vdwg.mxu0
  %v611 = vadd.f32 %v486, %v572
  %v612 = vadd.f32 %v488, %v574
  %v613 = vadd.f32 %v491, %v577
  %v614 = vadd.f32 %v493, %v579
  %v615 = vadd.f32 %v496, %v582
  %v616 = vadd.f32 %v498, %v584
  %v617 = vadd.f32 %v501, %v587
  %v618 = vadd.f32 %v503, %v589
  %v619 = vadd.f32 %v506, %v592
  %v620 = vadd.f32 %v508, %v594
  %v621 = vadd.f32 %v511, %v597
  %v622 = vadd.f32 %v513, %v599
  %v623 = vadd.f32 %v516, %v602
  %v624 = vadd.f32 %v518, %v604
  %v625 = vadd.f32 %v521, %v607
  %v626 = vadd.f32 %v523, %v609
  %v627 = vld [vmem:[%s5] sm:$0x1]
  %v629 = vperm.slane %v627, 0
  %v631 = vadd.f32 %v611, %v629
  %v632 = vadd.f32 %v612, %v629
  %v633 = vadd.f32 %v613, %v629
  %v634 = vadd.f32 %v614, %v629
  %v635 = vadd.f32 %v615, %v629
  %v636 = vadd.f32 %v616, %v629
  %v637 = vadd.f32 %v617, %v629
  %v638 = vadd.f32 %v618, %v629
  %v639 = vadd.f32 %v619, %v629
  %v640 = vadd.f32 %v620, %v629
  %v641 = vadd.f32 %v621, %v629
  %v642 = vadd.f32 %v622, %v629
  %v643 = vadd.f32 %v623, %v629
  %v644 = vadd.f32 %v624, %v629
  %v645 = vadd.f32 %v625, %v629
  %v646 = vadd.f32 %v626, %v629
  %v647 = vmax.f32 %v631, 0.0
  %v648 = vmax.f32 %v632, 0.0
  %v649 = vmax.f32 %v633, 0.0
  %v650 = vmax.f32 %v634, 0.0
  %v651 = vmax.f32 %v635, 0.0
  %v652 = vmax.f32 %v636, 0.0
  %v653 = vmax.f32 %v637, 0.0
  %v654 = vmax.f32 %v638, 0.0
  %v655 = vmax.f32 %v639, 0.0
  %v656 = vmax.f32 %v640, 0.0
  %v657 = vmax.f32 %v641, 0.0
  %v658 = vmax.f32 %v642, 0.0
  %v659 = vmax.f32 %v643, 0.0
  %v660 = vmax.f32 %v644, 0.0
  %v661 = vmax.f32 %v645, 0.0
  %v662 = vmax.f32 %v646, 0.0
  %v663 = vpack.c.bf16 %v648, %v647
  %v664 = vpack.c.bf16 %v650, %v649
  %v665 = vpack.c.bf16 %v652, %v651
  %v666 = vpack.c.bf16 %v654, %v653
  %v667 = vpack.c.bf16 %v656, %v655
  %v668 = vpack.c.bf16 %v658, %v657
  %v669 = vpack.c.bf16 %v660, %v659
  %v670 = vpack.c.bf16 %v662, %v661
  %v671 = vld [vmem:[%s6] sm:$0xf]
  %v672 = vld [vmem:[%s6 + $0x4] sm:$0xf]
  %v673 = vld [vmem:[%s6 + $0x8] sm:$0xf]
  %v674 = vld [vmem:[%s6 + $0xc] sm:$0xf]
  %v675 = vld [vmem:[%s6 + $0x10] sm:$0xf]
  %v676 = vld [vmem:[%s6 + $0x14] sm:$0xf]
  %v677 = vld [vmem:[%s6 + $0x18] sm:$0xf]
  %v678 = vld [vmem:[%s6 + $0x1c] sm:$0xf]
  %v679 = vld [vmem:[%s7] sm:$0x1]
  %v681 = vperm.slane %v679, 0
  %v691 = vunpack.c.l.b16 %v671
  %v692 = vunpack.c.l.b16 %v672
  %v693 = vunpack.c.l.b16 %v673
  %v694 = vunpack.c.l.b16 %v674
  %v695 = vunpack.c.l.b16 %v675
  %v696 = vunpack.c.l.b16 %v676
  %v697 = vunpack.c.l.b16 %v677
  %v698 = vunpack.c.l.b16 %v678
  %v699 = vpack.c.b16 %v692, %v691
  %v700 = vpack.c.b16 %v694, %v693
  %v701 = vpack.c.b16 %v696, %v695
  %v702 = vpack.c.b16 %v698, %v697
  %vm707 = vcmask 523264
  %v709 = vsel %vm707, %v663, 0
  %v712 = vsel %vm707, %v664, 0
  %v715 = vsel %vm707, %v665, 0
  %v718 = vsel %vm707, %v666, 0
  %v721 = vsel %vm707, %v667, 0
  %v724 = vsel %vm707, %v668, 0
  %v727 = vsel %vm707, %v669, 0
  %v730 = vsel %vm707, %v670, 0
  %732 = vmatpush.bf16.msra.mxu0 0
  %733 = vmatpush.bf16.msra.mxu0 0
  %734 = vmatpush.bf16.msra.mxu0 0
  %735 = vmatpush.bf16.msra.mxu0 0
  %736 = vmatpush.bf16.msra.mxu0 %v702
  %737 = vmatpush.bf16.msra.mxu0 %v701
  %738 = vmatpush.bf16.msra.mxu0 %v700
  %739 = vmatpush.bf16.msra.mxu0 %v699
  %740 = vmatmul.bf16.gmra.mxu0 %v709
  %v741 = vpop.f32.mrf.mxu0
  %v742 = vadd.f32 %v681, %v741
  %v743 = vpop.f32.mrf.mxu0
  %v744 = vadd.f32 %v681, %v743
  %745 = vmatmul.bf16.gmra.mxu0 %v712
  %v746 = vpop.f32.mrf.mxu0
  %v747 = vadd.f32 %v681, %v746
  %v748 = vpop.f32.mrf.mxu0
  %v749 = vadd.f32 %v681, %v748
  %750 = vmatmul.bf16.gmra.mxu0 %v715
  %v751 = vpop.f32.mrf.mxu0
  %v752 = vadd.f32 %v681, %v751
  %v753 = vpop.f32.mrf.mxu0
  %v754 = vadd.f32 %v681, %v753
  %755 = vmatmul.bf16.gmra.mxu0 %v718
  %v756 = vpop.f32.mrf.mxu0
  %v757 = vadd.f32 %v681, %v756
  %v758 = vpop.f32.mrf.mxu0
  %v759 = vadd.f32 %v681, %v758
  %760 = vmatmul.bf16.gmra.mxu0 %v721
  %v761 = vpop.f32.mrf.mxu0
  %v762 = vadd.f32 %v681, %v761
  %v763 = vpop.f32.mrf.mxu0
  %v764 = vadd.f32 %v681, %v763
  %765 = vmatmul.bf16.gmra.mxu0 %v724
  %v766 = vpop.f32.mrf.mxu0
  %v767 = vadd.f32 %v681, %v766
  %v768 = vpop.f32.mrf.mxu0
  %v769 = vadd.f32 %v681, %v768
  %770 = vmatmul.bf16.gmra.mxu0 %v727
  %v771 = vpop.f32.mrf.mxu0
  %v772 = vadd.f32 %v681, %v771
  %v773 = vpop.f32.mrf.mxu0
  %v774 = vadd.f32 %v681, %v773
  %775 = vmatmul.bf16.gmra.mxu0 %v730
  %v776 = vpop.f32.mrf.mxu0
  %v777 = vadd.f32 %v681, %v776
  %v778 = vpop.f32.mrf.mxu0
  %v779 = vadd.f32 %v681, %v778
  %780 = vdwg.mxu0
  %v781 = vpack.c.bf16 %v742, %v742
  %v782 = vpack.c.bf16 %v744, %v744
  %v783 = vpack.c.bf16 %v747, %v747
  %v784 = vpack.c.bf16 %v749, %v749
  %v785 = vpack.c.bf16 %v752, %v752
  %v786 = vpack.c.bf16 %v754, %v754
  %v787 = vpack.c.bf16 %v757, %v757
  %v788 = vpack.c.bf16 %v759, %v759
  %v789 = vpack.c.bf16 %v762, %v762
  %v790 = vpack.c.bf16 %v764, %v764
  %v791 = vpack.c.bf16 %v767, %v767
  %v792 = vpack.c.bf16 %v769, %v769
  %v793 = vpack.c.bf16 %v772, %v772
  %v794 = vpack.c.bf16 %v774, %v774
  %v795 = vpack.c.bf16 %v777, %v777
  %v796 = vpack.c.bf16 %v779, %v779
  %vm797 = vcmask 519168
  %798 = vst.msk [vmem:[%s9] sm:$0xf] %vm797, %v781
  %799 = vst.msk [vmem:[%s9 + $0x4] sm:$0xf] %vm797, %v782
  %800 = vst.msk [vmem:[%s9 + $0x8] sm:$0xf] %vm797, %v783
  %801 = vst.msk [vmem:[%s9 + $0xc] sm:$0xf] %vm797, %v784
  %802 = vst.msk [vmem:[%s9 + $0x10] sm:$0xf] %vm797, %v785
  %803 = vst.msk [vmem:[%s9 + $0x14] sm:$0xf] %vm797, %v786
  %804 = vst.msk [vmem:[%s9 + $0x18] sm:$0xf] %vm797, %v787
  %805 = vst.msk [vmem:[%s9 + $0x1c] sm:$0xf] %vm797, %v788
  %806 = vst.msk [vmem:[%s9 + $0x20] sm:$0xf] %vm797, %v789
  %807 = vst.msk [vmem:[%s9 + $0x24] sm:$0xf] %vm797, %v790
  %808 = vst.msk [vmem:[%s9 + $0x28] sm:$0xf] %vm797, %v791
  %809 = vst.msk [vmem:[%s9 + $0x2c] sm:$0xf] %vm797, %v792
  %810 = vst.msk [vmem:[%s9 + $0x30] sm:$0xf] %vm797, %v793
  %811 = vst.msk [vmem:[%s9 + $0x34] sm:$0xf] %vm797, %v794
  %812 = vst.msk [vmem:[%s9 + $0x38] sm:$0xf] %vm797, %v795
  %813 = vst.msk [vmem:[%s9 + $0x3c] sm:$0xf] %vm797, %v796
  // Predicated region
  $region34: #{hsi_wave_forward.4} parent=0 // pred_check
    _
  $region35: #{hsi_wave_forward.4} parent=0 // pred_check_branch
    %815 = sbr.rel (0) target = $region37
  $region36: #{hsi_wave_forward.4} parent=0 // pred_region
    _
  $region37: #{hsi_wave_forward.4} parent=0 // pred_fallthru
    _
  // Predicated region
  $region38: #{hsi_wave_forward.4} parent=0 // pred_check
    _
  $region39: #{hsi_wave_forward.4} parent=0 // pred_check_branch
    %817 = sbr.rel (0) target = $region41
  $region40: #{hsi_wave_forward.4} parent=0 // pred_region
    _
  $region41: #{hsi_wave_forward.4} parent=0 // pred_fallthru
    _
  // Predicated region
  $region42: #{hsi_wave_forward.4} parent=0 // pred_check
    _
  $region43: #{hsi_wave_forward.4} parent=0 // pred_check_branch
    %819 = sbr.rel (0) target = $region45
  $region44: #{hsi_wave_forward.4} parent=0 // pred_region
    _
  $region45: #{hsi_wave_forward.4} parent=0 // pred_fallthru
    _
  // Predicated region
  $region46: #{hsi_wave_forward.4} parent=0 // pred_check
    _
  $region47: #{hsi_wave_forward.4} parent=0 // pred_check_branch
    %821 = sbr.rel (0) target = $region49
  $region48: #{hsi_wave_forward.4} parent=0 // pred_region
    _
  $region49: #{hsi_wave_forward.4} parent=0 // pred_fallthru
    _

// kernel: hsi_wave_forward.6
$region0: #{hsi_wave_forward.6}
  #allocation0 [shape = 'u32[]', space=smem, size = 0x4, offset = 0x4, fixed_abs, tag = 'smem constant byte address 0x4 - core index']
  #allocation1 [shape = 'u32[72,128]{1,0:T(1,128)}', space=vmem, size = 0x9000, scoped, tag = 'internal scratch']
  %s0 = inlined_call_operand.vmem [shape: bf16[128,288], index: 0, kind: input, shape index: {}]
  %s1 = inlined_call_operand.vmem [shape: bf16[288,64], index: 1, kind: input, shape index: {}]
  %s2 = inlined_call_operand.vmem [shape: f32[1,64], index: 2, kind: input, shape index: {}]
  %s3 = inlined_call_operand.vmem [shape: f32[128,64], index: 3, kind: output, shape index: {0}]
  %s4 = inlined_call_operand.vmem [shape: f32[128,2], index: 4, kind: output, shape index: {1}]
  %5 = xla_tuple %s3, %s4
  %s6 = sld [smem:[#allocation0]]
  $region30: #{hsi_wave_forward.6} parent=0
    _
  %s8 = ssub.s32 1, %s6
  %s9 = scalar_select 0, %s8, %s6
  // Predicated region
  $region2: #{hsi_wave_forward.6} parent=0 // pred_check
    _
  $region3: #{hsi_wave_forward.6} parent=0 // pred_check_branch
    %11 = sbr.rel (0) target = $region5
  $region4: #{hsi_wave_forward.6} parent=0 // pred_region
    _
  $region5: #{hsi_wave_forward.6} parent=0 // pred_fallthru
    _
  // Predicated region
  $region6: #{hsi_wave_forward.6} parent=0 // pred_check
    _
  $region7: #{hsi_wave_forward.6} parent=0 // pred_check_branch
    %13 = sbr.rel (0) target = $region9
  $region8: #{hsi_wave_forward.6} parent=0 // pred_region
    _
  $region9: #{hsi_wave_forward.6} parent=0 // pred_fallthru
    _
  // Predicated region
  $region10: #{hsi_wave_forward.6} parent=0 // pred_check
    _
  $region11: #{hsi_wave_forward.6} parent=0 // pred_check_branch
    %15 = sbr.rel (0) target = $region13
  $region12: #{hsi_wave_forward.6} parent=0 // pred_region
    _
  $region13: #{hsi_wave_forward.6} parent=0 // pred_fallthru
    _
  %v17 = vld [vmem:[%s0] sm:$0xff]
  %v18 = vld [vmem:[%s0 + $0x8] sm:$0xf]
  %v19 = vld [vmem:[%s0 + $0xc] sm:$0xff]
  %v20 = vld [vmem:[%s0 + $0x14] sm:$0xf]
  %v21 = vld [vmem:[%s0 + $0x18] sm:$0xff]
  %v22 = vld [vmem:[%s0 + $0x20] sm:$0xf]
  %v23 = vld [vmem:[%s0 + $0x24] sm:$0xff]
  %v24 = vld [vmem:[%s0 + $0x2c] sm:$0xf]
  %v25 = vld [vmem:[%s0 + $0x30] sm:$0xff]
  %v26 = vld [vmem:[%s0 + $0x38] sm:$0xf]
  %v27 = vld [vmem:[%s0 + $0x3c] sm:$0xff]
  %v28 = vld [vmem:[%s0 + $0x44] sm:$0xf]
  %v29 = vld [vmem:[%s0 + $0x48] sm:$0xff]
  %v30 = vld [vmem:[%s0 + $0x50] sm:$0xf]
  %v31 = vld [vmem:[%s0 + $0x54] sm:$0xff]
  %v32 = vld [vmem:[%s0 + $0x5c] sm:$0xf]
  %v33 = vld [vmem:[%s0 + $0x60] sm:$0xff]
  %v34 = vld [vmem:[%s0 + $0x68] sm:$0xf]
  %v35 = vld [vmem:[%s0 + $0x6c] sm:$0xff]
  %v36 = vld [vmem:[%s0 + $0x74] sm:$0xf]
  %v37 = vld [vmem:[%s0 + $0x78] sm:$0xff]
  %v38 = vld [vmem:[%s0 + $0x80] sm:$0xf]
  %v39 = vld [vmem:[%s0 + $0x84] sm:$0xff]
  %v40 = vld [vmem:[%s0 + $0x8c] sm:$0xf]
  %v41 = vld [vmem:[%s0 + $0x90] sm:$0xff]
  %v42 = vld [vmem:[%s0 + $0x98] sm:$0xf]
  %v43 = vld [vmem:[%s0 + $0x9c] sm:$0xff]
  %v44 = vld [vmem:[%s0 + $0xa4] sm:$0xf]
  %v45 = vld [vmem:[%s0 + $0xa8] sm:$0xff]
  %v46 = vld [vmem:[%s0 + $0xb0] sm:$0xf]
  %v47 = vld [vmem:[%s0 + $0xb4] sm:$0xff]
  %v48 = vld [vmem:[%s0 + $0xbc] sm:$0xf]
  %v49 = vld [vmem:[%s1] sm:$0xf]
  %v50 = vld [vmem:[%s1 + $0x4] sm:$0xf]
  %v51 = vld [vmem:[%s1 + $0x8] sm:$0xf]
  %v52 = vld [vmem:[%s1 + $0xc] sm:$0xf]
  %v53 = vld [vmem:[%s1 + $0x10] sm:$0xf]
  %v54 = vld [vmem:[%s1 + $0x14] sm:$0xf]
  %v55 = vld [vmem:[%s1 + $0x18] sm:$0xf]
  %v56 = vld [vmem:[%s1 + $0x1c] sm:$0xf]
  %v57 = vld [vmem:[%s1 + $0x20] sm:$0xf]
  %v58 = vld [vmem:[%s1 + $0x24] sm:$0xf]
  %v59 = vld [vmem:[%s1 + $0x28] sm:$0xf]
  %v60 = vld [vmem:[%s1 + $0x2c] sm:$0xf]
  %v61 = vld [vmem:[%s1 + $0x30] sm:$0xf]
  %v62 = vld [vmem:[%s1 + $0x34] sm:$0xf]
  %v63 = vld [vmem:[%s1 + $0x38] sm:$0xf]
  %v64 = vld [vmem:[%s1 + $0x3c] sm:$0xf]
  %v65 = vld [vmem:[%s1 + $0x40] sm:$0xf]
  %v66 = vld [vmem:[%s1 + $0x44] sm:$0xf]
  %v67 = vld [vmem:[%s1 + $0x48] sm:$0xf]
  %v68 = vld [vmem:[%s1 + $0x4c] sm:$0xf]
  %v69 = vld [vmem:[%s1 + $0x50] sm:$0xf]
  %v70 = vld [vmem:[%s1 + $0x54] sm:$0xf]
  %v71 = vld [vmem:[%s1 + $0x58] sm:$0xf]
  %v72 = vld [vmem:[%s1 + $0x5c] sm:$0xf]
  %v73 = vld [vmem:[%s1 + $0x60] sm:$0xf]
  %v74 = vld [vmem:[%s1 + $0x64] sm:$0xf]
  %v75 = vld [vmem:[%s1 + $0x68] sm:$0xf]
  %v76 = vld [vmem:[%s1 + $0x6c] sm:$0xf]
  %v77 = vld [vmem:[%s1 + $0x70] sm:$0xf]
  %v78 = vld [vmem:[%s1 + $0x74] sm:$0xf]
  %v79 = vld [vmem:[%s1 + $0x78] sm:$0xf]
  %v80 = vld [vmem:[%s1 + $0x7c] sm:$0xf]
  %v81 = vld [vmem:[%s1 + $0x80] sm:$0xf]
  %v82 = vld [vmem:[%s1 + $0x84] sm:$0xf]
  %v83 = vld [vmem:[%s1 + $0x88] sm:$0xf]
  %v84 = vld [vmem:[%s1 + $0x8c] sm:$0xf]
  %v85 = vld [vmem:[%s2] sm:$0x1]
  %v87 = vperm.slane %v85, 0
  %v121 = vunpack.c.l.b16 %v17
  %v122 = vunpack.c.h.b16 %v17
  %v123 = vunpack.c.l.b16 %v18
  %v124 = vunpack.c.l.b16 %v19
  %v125 = vunpack.c.h.b16 %v19
  %v126 = vunpack.c.l.b16 %v20
  %v127 = vunpack.c.l.b16 %v21
  %v128 = vunpack.c.h.b16 %v21
  %v129 = vunpack.c.l.b16 %v22
  %v130 = vunpack.c.l.b16 %v23
  %v131 = vunpack.c.h.b16 %v23
  %v132 = vunpack.c.l.b16 %v24
  %v133 = vunpack.c.l.b16 %v25
  %v134 = vunpack.c.h.b16 %v25
  %v135 = vunpack.c.l.b16 %v26
  %v136 = vunpack.c.l.b16 %v27
  %v137 = vunpack.c.h.b16 %v27
  %v138 = vunpack.c.l.b16 %v28
  %v139 = vunpack.c.l.b16 %v29
  %v140 = vunpack.c.h.b16 %v29
  %v141 = vunpack.c.l.b16 %v30
  %v142 = vunpack.c.l.b16 %v31
  %v143 = vunpack.c.h.b16 %v31
  %v144 = vunpack.c.l.b16 %v32
  %v145 = vunpack.c.l.b16 %v33
  %v146 = vunpack.c.h.b16 %v33
  %v147 = vunpack.c.l.b16 %v34
  %v148 = vunpack.c.l.b16 %v35
  %v149 = vunpack.c.h.b16 %v35
  %v150 = vunpack.c.l.b16 %v36
  %v151 = vunpack.c.l.b16 %v37
  %v152 = vunpack.c.h.b16 %v37
  %v153 = vunpack.c.l.b16 %v38
  %v154 = vunpack.c.l.b16 %v39
  %v155 = vunpack.c.h.b16 %v39
  %v156 = vunpack.c.l.b16 %v40
  %v157 = vunpack.c.l.b16 %v41
  %v158 = vunpack.c.h.b16 %v41
  %v159 = vunpack.c.l.b16 %v42
  %v160 = vunpack.c.l.b16 %v43
  %v161 = vunpack.c.h.b16 %v43
  %v162 = vunpack.c.l.b16 %v44
  %v163 = vunpack.c.l.b16 %v45
  %v164 = vunpack.c.h.b16 %v45
  %v165 = vunpack.c.l.b16 %v46
  %v166 = vunpack.c.l.b16 %v47
  %v167 = vunpack.c.h.b16 %v47
  %v168 = vunpack.c.l.b16 %v48
  %v169 = vpack.c.b16 %v124, %v121
  %v170 = vpack.c.b16 %v125, %v122
  %v171 = vpack.c.b16 %v126, %v123
  %v172 = vpack.c.b16 %v130, %v127
  %v173 = vpack.c.b16 %v131, %v128
  %v174 = vpack.c.b16 %v132, %v129
  %v175 = vpack.c.b16 %v136, %v133
  %v176 = vpack.c.b16 %v137, %v134
  %v177 = vpack.c.b16 %v138, %v135
  %v178 = vpack.c.b16 %v142, %v139
  %v179 = vpack.c.b16 %v143, %v140
  %v180 = vpack.c.b16 %v144, %v141
  %v181 = vpack.c.b16 %v148, %v145
  %v182 = vpack.c.b16 %v149, %v146
  %v183 = vpack.c.b16 %v150, %v147
  %v184 = vpack.c.b16 %v154, %v151
  %v185 = vpack.c.b16 %v155, %v152
  %v186 = vpack.c.b16 %v156, %v153
  %v187 = vpack.c.b16 %v160, %v157
  %v188 = vpack.c.b16 %v161, %v158
  %v189 = vpack.c.b16 %v162, %v159
  %v190 = vpack.c.b16 %v166, %v163
  %v191 = vpack.c.b16 %v167, %v164
  %v192 = vpack.c.b16 %v168, %v165
  %v245 = vunpack.c.l.b16 %v49
  %v246 = vunpack.c.l.b16 %v50
  %v247 = vunpack.c.l.b16 %v51
  %v248 = vunpack.c.l.b16 %v52
  %v249 = vunpack.c.l.b16 %v53
  %v250 = vunpack.c.l.b16 %v54
  %v251 = vunpack.c.l.b16 %v55
  %v252 = vunpack.c.l.b16 %v56
  %v253 = vunpack.c.l.b16 %v57
  %v254 = vunpack.c.l.b16 %v58
  %v255 = vunpack.c.l.b16 %v59
  %v256 = vunpack.c.l.b16 %v60
  %v257 = vunpack.c.l.b16 %v61
  %v258 = vunpack.c.l.b16 %v62
  %v259 = vunpack.c.l.b16 %v63
  %v260 = vunpack.c.l.b16 %v64
  %v261 = vunpack.c.l.b16 %v65
  %v262 = vunpack.c.l.b16 %v66
  %v263 = vunpack.c.l.b16 %v67
  %v264 = vunpack.c.l.b16 %v68
  %v265 = vunpack.c.l.b16 %v69
  %v266 = vunpack.c.l.b16 %v70
  %v267 = vunpack.c.l.b16 %v71
  %v268 = vunpack.c.l.b16 %v72
  %v269 = vunpack.c.l.b16 %v73
  %v270 = vunpack.c.l.b16 %v74
  %v271 = vunpack.c.l.b16 %v75
  %v272 = vunpack.c.l.b16 %v76
  %v273 = vunpack.c.l.b16 %v77
  %v274 = vunpack.c.l.b16 %v78
  %v275 = vunpack.c.l.b16 %v79
  %v276 = vunpack.c.l.b16 %v80
  %v277 = vunpack.c.l.b16 %v81
  %v278 = vunpack.c.l.b16 %v82
  %v279 = vunpack.c.l.b16 %v83
  %v280 = vunpack.c.l.b16 %v84
  %v281 = vpack.c.b16 %v246, %v245
  %v282 = vpack.c.b16 %v248, %v247
  %v283 = vpack.c.b16 %v250, %v249
  %v284 = vpack.c.b16 %v252, %v251
  %v285 = vpack.c.b16 %v254, %v253
  %v286 = vpack.c.b16 %v256, %v255
  %v287 = vpack.c.b16 %v258, %v257
  %v288 = vpack.c.b16 %v260, %v259
  %v289 = vpack.c.b16 %v262, %v261
  %v290 = vpack.c.b16 %v264, %v263
  %v291 = vpack.c.b16 %v266, %v265
  %v292 = vpack.c.b16 %v268, %v267
  %v293 = vpack.c.b16 %v270, %v269
  %v294 = vpack.c.b16 %v272, %v271
  %v295 = vpack.c.b16 %v274, %v273
  %v296 = vpack.c.b16 %v276, %v275
  %v297 = vpack.c.b16 %v278, %v277
  %v298 = vpack.c.b16 %v280, %v279
  %vm317 = vcmask 261120
  %v319 = vsel %vm317, %v171, 0
  %v322 = vsel %vm317, %v174, 0
  %v325 = vsel %vm317, %v177, 0
  %v328 = vsel %vm317, %v180, 0
  %v331 = vsel %vm317, %v183, 0
  %v334 = vsel %vm317, %v186, 0
  %v337 = vsel %vm317, %v189, 0
  %v340 = vsel %vm317, %v192, 0
  %342 = vmatpush.bf16.msra.mxu0 %v288
  %343 = vmatpush.bf16.msra.mxu0 %v287
  %344 = vmatpush.bf16.msra.mxu0 %v286
  %345 = vmatpush.bf16.msra.mxu0 %v285
  %346 = vmatpush.bf16.msra.mxu0 %v284
  %347 = vmatpush.bf16.msra.mxu0 %v283
  %348 = vmatpush.bf16.msra.mxu0 %v282
  %349 = vmatpush.bf16.msra.mxu0 %v281
  %350 = vmatmul.bf16.gmra.mxu0 %v169
  %v351 = vpop.f32.mrf.mxu0
  %v352 = vadd.f32 %v87, %v351
  %v353 = vpop.f32.mrf.mxu0
  %v354 = vadd.f32 %v87, %v353
  %355 = vmatmul.bf16.gmra.mxu0 %v172
  %v356 = vpop.f32.mrf.mxu0
  %v357 = vadd.f32 %v87, %v356
  %v358 = vpop.f32.mrf.mxu0
  %v359 = vadd.f32 %v87, %v358
  %360 = vmatmul.bf16.gmra.mxu0 %v175
  %v361 = vpop.f32.mrf.mxu0
  %v362 = vadd.f32 %v87, %v361
  %v363 = vpop.f32.mrf.mxu0
  %v364 = vadd.f32 %v87, %v363
  %365 = vmatmul.bf16.gmra.mxu0 %v178
  %v366 = vpop.f32.mrf.mxu0
  %v367 = vadd.f32 %v87, %v366
  %v368 = vpop.f32.mrf.mxu0
  %v369 = vadd.f32 %v87, %v368
  %370 = vmatmul.bf16.gmra.mxu0 %v181
  %v371 = vpop.f32.mrf.mxu0
  %v372 = vadd.f32 %v87, %v371
  %v373 = vpop.f32.mrf.mxu0
  %v374 = vadd.f32 %v87, %v373
  %375 = vmatmul.bf16.gmra.mxu0 %v184
  %v376 = vpop.f32.mrf.mxu0
  %v377 = vadd.f32 %v87, %v376
  %v378 = vpop.f32.mrf.mxu0
  %v379 = vadd.f32 %v87, %v378
  %380 = vmatmul.bf16.gmra.mxu0 %v187
  %v381 = vpop.f32.mrf.mxu0
  %v382 = vadd.f32 %v87, %v381
  %v383 = vpop.f32.mrf.mxu0
  %v384 = vadd.f32 %v87, %v383
  %385 = vmatmul.bf16.gmra.mxu0 %v190
  %v386 = vpop.f32.mrf.mxu0
  %v387 = vadd.f32 %v87, %v386
  %v388 = vpop.f32.mrf.mxu0
  %v389 = vadd.f32 %v87, %v388
  %390 = vdwg.mxu0
  %391 = vmatpush.bf16.msra.mxu0 %v296
  %392 = vmatpush.bf16.msra.mxu0 %v295
  %393 = vmatpush.bf16.msra.mxu0 %v294
  %394 = vmatpush.bf16.msra.mxu0 %v293
  %395 = vmatpush.bf16.msra.mxu0 %v292
  %396 = vmatpush.bf16.msra.mxu0 %v291
  %397 = vmatpush.bf16.msra.mxu0 %v290
  %398 = vmatpush.bf16.msra.mxu0 %v289
  %399 = vmatmul.bf16.gmra.mxu0 %v170
  %v400 = vpop.f32.mrf.mxu0
  %v401 = vadd.f32 %v352, %v400
  %v402 = vpop.f32.mrf.mxu0
  %v403 = vadd.f32 %v354, %v402
  %404 = vmatmul.bf16.gmra.mxu0 %v173
  %v405 = vpop.f32.mrf.mxu0
  %v406 = vadd.f32 %v357, %v405
  %v407 = vpop.f32.mrf.mxu0
  %v408 = vadd.f32 %v359, %v407
  %409 = vmatmul.bf16.gmra.mxu0 %v176
  %v410 = vpop.f32.mrf.mxu0
  %v411 = vadd.f32 %v362, %v410
  %v412 = vpop.f32.mrf.mxu0
  %v413 = vadd.f32 %v364, %v412
  %414 = vmatmul.bf16.gmra.mxu0 %v179
  %v415 = vpop.f32.mrf.mxu0
  %v416 = vadd.f32 %v367, %v415
  %v417 = vpop.f32.mrf.mxu0
  %v418 = vadd.f32 %v369, %v417
  %419 = vmatmul.bf16.gmra.mxu0 %v182
  %v420 = vpop.f32.mrf.mxu0
  %v421 = vadd.f32 %v372, %v420
  %v422 = vpop.f32.mrf.mxu0
  %v423 = vadd.f32 %v374, %v422
  %424 = vmatmul.bf16.gmra.mxu0 %v185
  %v425 = vpop.f32.mrf.mxu0
  %v426 = vadd.f32 %v377, %v425
  %v427 = vpop.f32.mrf.mxu0
  %v428 = vadd.f32 %v379, %v427
  %429 = vmatmul.bf16.gmra.mxu0 %v188
  %v430 = vpop.f32.mrf.mxu0
  %v431 = vadd.f32 %v382, %v430
  %v432 = vpop.f32.mrf.mxu0
  %v433 = vadd.f32 %v384, %v432
  %434 = vmatmul.bf16.gmra.mxu0 %v191
  %v435 = vpop.f32.mrf.mxu0
  %v436 = vadd.f32 %v387, %v435
  %v437 = vpop.f32.mrf.mxu0
  %v438 = vadd.f32 %v389, %v437
  %439 = vdwg.mxu0
  %440 = vmatpush.bf16.msra.mxu0 0
  %441 = vmatpush.bf16.msra.mxu0 0
  %442 = vmatpush.bf16.msra.mxu0 0
  %443 = vmatpush.bf16.msra.mxu0 0
  %444 = vmatpush.bf16.msra.mxu0 0
  %445 = vmatpush.bf16.msra.mxu0 0
  %446 = vmatpush.bf16.msra.mxu0 %v298
  %447 = vmatpush.bf16.msra.mxu0 %v297
  %448 = vmatmul.bf16.gmra.mxu0 %v319
  %v449 = vpop.f32.mrf.mxu0
  %v450 = vadd.f32 %v401, %v449
  %v451 = vpop.f32.mrf.mxu0
  %v452 = vadd.f32 %v403, %v451
  %453 = vmatmul.bf16.gmra.mxu0 %v322
  %v454 = vpop.f32.mrf.mxu0
  %v455 = vadd.f32 %v406, %v454
  %v456 = vpop.f32.mrf.mxu0
  %v457 = vadd.f32 %v408, %v456
  %458 = vmatmul.bf16.gmra.mxu0 %v325
  %v459 = vpop.f32.mrf.mxu0
  %v460 = vadd.f32 %v411, %v459
  %v461 = vpop.f32.mrf.mxu0
  %v462 = vadd.f32 %v413, %v461
  %463 = vmatmul.bf16.gmra.mxu0 %v328
  %v464 = vpop.f32.mrf.mxu0
  %v465 = vadd.f32 %v416, %v464
  %v466 = vpop.f32.mrf.mxu0
  %v467 = vadd.f32 %v418, %v466
  %468 = vmatmul.bf16.gmra.mxu0 %v331
  %v469 = vpop.f32.mrf.mxu0
  %v470 = vadd.f32 %v421, %v469
  %v471 = vpop.f32.mrf.mxu0
  %v472 = vadd.f32 %v423, %v471
  %473 = vmatmul.bf16.gmra.mxu0 %v334
  %v474 = vpop.f32.mrf.mxu0
  %v475 = vadd.f32 %v426, %v474
  %v476 = vpop.f32.mrf.mxu0
  %v477 = vadd.f32 %v428, %v476
  %478 = vmatmul.bf16.gmra.mxu0 %v337
  %v479 = vpop.f32.mrf.mxu0
  %v480 = vadd.f32 %v431, %v479
  %v481 = vpop.f32.mrf.mxu0
  %v482 = vadd.f32 %v433, %v481
  %483 = vmatmul.bf16.gmra.mxu0 %v340
  %v484 = vpop.f32.mrf.mxu0
  %v485 = vadd.f32 %v436, %v484
  %v486 = vpop.f32.mrf.mxu0
  %v487 = vadd.f32 %v438, %v486
  %488 = vdwg.mxu0
  %v489 = vmax.f32 %v450, 0.0
  %v490 = vmax.f32 %v452, 0.0
  %v491 = vmax.f32 %v455, 0.0
  %v492 = vmax.f32 %v457, 0.0
  %v493 = vmax.f32 %v460, 0.0
  %v494 = vmax.f32 %v462, 0.0
  %v495 = vmax.f32 %v465, 0.0
  %v496 = vmax.f32 %v467, 0.0
  %v497 = vmax.f32 %v470, 0.0
  %v498 = vmax.f32 %v472, 0.0
  %v499 = vmax.f32 %v475, 0.0
  %v500 = vmax.f32 %v477, 0.0
  %v501 = vmax.f32 %v480, 0.0
  %v502 = vmax.f32 %v482, 0.0
  %v503 = vmax.f32 %v485, 0.0
  %v504 = vmax.f32 %v487, 0.0
  %vm505 = vcmask 523264
  %506 = vst.msk [vmem:[%s3] sm:$0xff] %vm505, %v489
  %507 = vst.msk [vmem:[%s3 + $0x8] sm:$0xff] %vm505, %v490
  %508 = vst.msk [vmem:[%s3 + $0x10] sm:$0xff] %vm505, %v491
  %509 = vst.msk [vmem:[%s3 + $0x18] sm:$0xff] %vm505, %v492
  %510 = vst.msk [vmem:[%s3 + $0x20] sm:$0xff] %vm505, %v493
  %511 = vst.msk [vmem:[%s3 + $0x28] sm:$0xff] %vm505, %v494
  %512 = vst.msk [vmem:[%s3 + $0x30] sm:$0xff] %vm505, %v495
  %513 = vst.msk [vmem:[%s3 + $0x38] sm:$0xff] %vm505, %v496
  %514 = vst.msk [vmem:[%s3 + $0x40] sm:$0xff] %vm505, %v497
  %515 = vst.msk [vmem:[%s3 + $0x48] sm:$0xff] %vm505, %v498
  %516 = vst.msk [vmem:[%s3 + $0x50] sm:$0xff] %vm505, %v499
  %517 = vst.msk [vmem:[%s3 + $0x58] sm:$0xff] %vm505, %v500
  %518 = vst.msk [vmem:[%s3 + $0x60] sm:$0xff] %vm505, %v501
  %519 = vst.msk [vmem:[%s3 + $0x68] sm:$0xff] %vm505, %v502
  %520 = vst.msk [vmem:[%s3 + $0x70] sm:$0xff] %vm505, %v503
  %521 = vst.msk [vmem:[%s3 + $0x78] sm:$0xff] %vm505, %v504
  %v522 = vsel %vm505, %v489, 0.0
  %523 = vadd.xlane.f32.xlu0 %v522
  %v524 = vpop.xlane.xlu0 %523
  %v525 = vsel %vm505, %v490, 0.0
  %526 = vadd.xlane.f32.xlu0 %v525
  %v527 = vpop.xlane.xlu0 %526
  %v528 = vsel %vm505, %v491, 0.0
  %529 = vadd.xlane.f32.xlu0 %v528
  %v530 = vpop.xlane.xlu0 %529
  %v531 = vsel %vm505, %v492, 0.0
  %532 = vadd.xlane.f32.xlu0 %v531
  %v533 = vpop.xlane.xlu0 %532
  %v534 = vsel %vm505, %v493, 0.0
  %535 = vadd.xlane.f32.xlu0 %v534
  %v536 = vpop.xlane.xlu0 %535
  %v537 = vsel %vm505, %v494, 0.0
  %538 = vadd.xlane.f32.xlu0 %v537
  %v539 = vpop.xlane.xlu0 %538
  %v540 = vsel %vm505, %v495, 0.0
  %541 = vadd.xlane.f32.xlu0 %v540
  %v542 = vpop.xlane.xlu0 %541
  %v543 = vsel %vm505, %v496, 0.0
  %544 = vadd.xlane.f32.xlu0 %v543
  %v545 = vpop.xlane.xlu0 %544
  %v546 = vsel %vm505, %v497, 0.0
  %547 = vadd.xlane.f32.xlu0 %v546
  %v548 = vpop.xlane.xlu0 %547
  %v549 = vsel %vm505, %v498, 0.0
  %550 = vadd.xlane.f32.xlu0 %v549
  %v551 = vpop.xlane.xlu0 %550
  %v552 = vsel %vm505, %v499, 0.0
  %553 = vadd.xlane.f32.xlu0 %v552
  %v554 = vpop.xlane.xlu0 %553
  %v555 = vsel %vm505, %v500, 0.0
  %556 = vadd.xlane.f32.xlu0 %v555
  %v557 = vpop.xlane.xlu0 %556
  %v558 = vsel %vm505, %v501, 0.0
  %559 = vadd.xlane.f32.xlu0 %v558
  %v560 = vpop.xlane.xlu0 %559
  %v561 = vsel %vm505, %v502, 0.0
  %562 = vadd.xlane.f32.xlu0 %v561
  %v563 = vpop.xlane.xlu0 %562
  %v564 = vsel %vm505, %v503, 0.0
  %565 = vadd.xlane.f32.xlu0 %v564
  %v566 = vpop.xlane.xlu0 %565
  %v567 = vsel %vm505, %v504, 0.0
  %568 = vadd.xlane.f32.xlu0 %v567
  %v569 = vpop.xlane.xlu0 %568
  %v570 = vrcp.pop 64.0
  %v571 = vmul.f32 64.0, %v570
  %v572 = vsub.f32 1.0, %v571
  %v573 = vmul.f32 %v570, %v572
  %v574 = vadd.f32 %v570, %v573
  %vm575 = vweird.f32 %v570
  %v576 = vsel %vm575, %v570, %v574
  %v577 = vmul.f32 %v524, %v576
  %v578 = vmul.f32 %v527, %v576
  %v579 = vmul.f32 %v530, %v576
  %v580 = vmul.f32 %v533, %v576
  %v581 = vmul.f32 %v536, %v576
  %v582 = vmul.f32 %v539, %v576
  %v583 = vmul.f32 %v542, %v576
  %v584 = vmul.f32 %v545, %v576
  %v585 = vmul.f32 %v548, %v576
  %v586 = vmul.f32 %v551, %v576
  %v587 = vmul.f32 %v554, %v576
  %v588 = vmul.f32 %v557, %v576
  %v589 = vmul.f32 %v560, %v576
  %v590 = vmul.f32 %v563, %v576
  %v591 = vmul.f32 %v566, %v576
  %v592 = vmul.f32 %v569, %v576
  %v593 = vsel %vm505, %v489, -inf
  %594 = vmax.xlane.f32.xlu0 %v593
  %v595 = vpop.xlane.xlu0 %594
  %v596 = vsel %vm505, %v490, -inf
  %597 = vmax.xlane.f32.xlu0 %v596
  %v598 = vpop.xlane.xlu0 %597
  %v599 = vsel %vm505, %v491, -inf
  %600 = vmax.xlane.f32.xlu0 %v599
  %v601 = vpop.xlane.xlu0 %600
  %v602 = vsel %vm505, %v492, -inf
  %603 = vmax.xlane.f32.xlu0 %v602
  %v604 = vpop.xlane.xlu0 %603
  %v605 = vsel %vm505, %v493, -inf
  %606 = vmax.xlane.f32.xlu0 %v605
  %v607 = vpop.xlane.xlu0 %606
  %v608 = vsel %vm505, %v494, -inf
  %609 = vmax.xlane.f32.xlu0 %v608
  %v610 = vpop.xlane.xlu0 %609
  %v611 = vsel %vm505, %v495, -inf
  %612 = vmax.xlane.f32.xlu0 %v611
  %v613 = vpop.xlane.xlu0 %612
  %v614 = vsel %vm505, %v496, -inf
  %615 = vmax.xlane.f32.xlu0 %v614
  %v616 = vpop.xlane.xlu0 %615
  %v617 = vsel %vm505, %v497, -inf
  %618 = vmax.xlane.f32.xlu0 %v617
  %v619 = vpop.xlane.xlu0 %618
  %v620 = vsel %vm505, %v498, -inf
  %621 = vmax.xlane.f32.xlu0 %v620
  %v622 = vpop.xlane.xlu0 %621
  %v623 = vsel %vm505, %v499, -inf
  %624 = vmax.xlane.f32.xlu0 %v623
  %v625 = vpop.xlane.xlu0 %624
  %v626 = vsel %vm505, %v500, -inf
  %627 = vmax.xlane.f32.xlu0 %v626
  %v628 = vpop.xlane.xlu0 %627
  %v629 = vsel %vm505, %v501, -inf
  %630 = vmax.xlane.f32.xlu0 %v629
  %v631 = vpop.xlane.xlu0 %630
  %v632 = vsel %vm505, %v502, -inf
  %633 = vmax.xlane.f32.xlu0 %v632
  %v634 = vpop.xlane.xlu0 %633
  %v635 = vsel %vm505, %v503, -inf
  %636 = vmax.xlane.f32.xlu0 %v635
  %v637 = vpop.xlane.xlu0 %636
  %v638 = vsel %vm505, %v504, -inf
  %639 = vmax.xlane.f32.xlu0 %v638
  %v640 = vpop.xlane.xlu0 %639
  %vm641 = vcmask 7168
  %v642 = vsel %vm641, %v577, %v595
  %v643 = vsel %vm641, %v578, %v598
  %v644 = vsel %vm641, %v579, %v601
  %v645 = vsel %vm641, %v580, %v604
  %v646 = vsel %vm641, %v581, %v607
  %v647 = vsel %vm641, %v582, %v610
  %v648 = vsel %vm641, %v583, %v613
  %v649 = vsel %vm641, %v584, %v616
  %v650 = vsel %vm641, %v585, %v619
  %v651 = vsel %vm641, %v586, %v622
  %v652 = vsel %vm641, %v587, %v625
  %v653 = vsel %vm641, %v588, %v628
  %v654 = vsel %vm641, %v589, %v631
  %v655 = vsel %vm641, %v590, %v634
  %v656 = vsel %vm641, %v591, %v637
  %v657 = vsel %vm641, %v592, %v640
  %vm658 = vcmask 15360
  %659 = vst.msk [vmem:[%s4] sm:$0xff] %vm658, %v642
  %660 = vst.msk [vmem:[%s4 + $0x8] sm:$0xff] %vm658, %v643
  %661 = vst.msk [vmem:[%s4 + $0x10] sm:$0xff] %vm658, %v644
  %662 = vst.msk [vmem:[%s4 + $0x18] sm:$0xff] %vm658, %v645
  %663 = vst.msk [vmem:[%s4 + $0x20] sm:$0xff] %vm658, %v646
  %664 = vst.msk [vmem:[%s4 + $0x28] sm:$0xff] %vm658, %v647
  %665 = vst.msk [vmem:[%s4 + $0x30] sm:$0xff] %vm658, %v648
  %666 = vst.msk [vmem:[%s4 + $0x38] sm:$0xff] %vm658, %v649
  %667 = vst.msk [vmem:[%s4 + $0x40] sm:$0xff] %vm658, %v650
  %668 = vst.msk [vmem:[%s4 + $0x48] sm:$0xff] %vm658, %v651
  %669 = vst.msk [vmem:[%s4 + $0x50] sm:$0xff] %vm658, %v652
  %670 = vst.msk [vmem:[%s4 + $0x58] sm:$0xff] %vm658, %v653
  %671 = vst.msk [vmem:[%s4 + $0x60] sm:$0xff] %vm658, %v654
  %672 = vst.msk [vmem:[%s4 + $0x68] sm:$0xff] %vm658, %v655
  %673 = vst.msk [vmem:[%s4 + $0x70] sm:$0xff] %vm658, %v656
  %674 = vst.msk [vmem:[%s4 + $0x78] sm:$0xff] %vm658, %v657
  // Predicated region
  $region14: #{hsi_wave_forward.6} parent=0 // pred_check
    _
  $region15: #{hsi_wave_forward.6} parent=0 // pred_check_branch
    %676 = sbr.rel (0) target = $region17
  $region16: #{hsi_wave_forward.6} parent=0 // pred_region
    _
  $region17: #{hsi_wave_forward.6} parent=0 // pred_fallthru
    _
  // Predicated region
  $region18: #{hsi_wave_forward.6} parent=0 // pred_check
    _
  $region19: #{hsi_wave_forward.6} parent=0 // pred_check_branch
    %678 = sbr.rel (0) target = $region21
  $region20: #{hsi_wave_forward.6} parent=0 // pred_region
    _
  $region21: #{hsi_wave_forward.6} parent=0 // pred_fallthru
    _
  // Predicated region
  $region22: #{hsi_wave_forward.6} parent=0 // pred_check
    _
  $region23: #{hsi_wave_forward.6} parent=0 // pred_check_branch
    %680 = sbr.rel (0) target = $region25
  $region24: #{hsi_wave_forward.6} parent=0 // pred_region
    _
  $region25: #{hsi_wave_forward.6} parent=0 // pred_fallthru
    _
  // Predicated region
  $region26: #{hsi_wave_forward.6} parent=0 // pred_check
    _
  $region27: #{hsi_wave_forward.6} parent=0 // pred_check_branch
    %682 = sbr.rel (0) target = $region29
  $region28: #{hsi_wave_forward.6} parent=0 // pred_region
    _
  $region29: #{hsi_wave_forward.6} parent=0 // pred_fallthru
    _

// kernel: hsi_wave_forward.7
$region0: #{hsi_wave_forward.7}
  #allocation0 [shape = 'u32[]', space=smem, size = 0x4, offset = 0x4, fixed_abs, tag = 'smem constant byte address 0x4 - core index']
  #allocation1 [shape = 'u32[72,128]{1,0:T(1,128)}', space=vmem, size = 0x9000, scoped, tag = 'internal scratch']
  #allocation2 [shape = 'f32[1,1]{1,0:T(1,128)S(1)}', space=vmem, size = 0x200, scoped, tag = 'scoped memory for hsi_wave_forward.7']
  %s0 = inlined_call_operand.vmem [shape: f32[2,64,98], index: 0, kind: input, shape index: {}]
  %s1 = inlined_call_operand.vmem [shape: f32[1,98], index: 1, kind: input, shape index: {}]
  %s2 = inlined_call_operand.<no memory space> [shape: f32[1,1], index: 2, kind: input, shape index: {}]
  %s3 = inlined_call_operand.vmem [shape: f32[2,64,64], index: 3, kind: input, shape index: {}]
  %s4 = inlined_call_operand.vmem [shape: bf16[2,64,64], index: 4, kind: input, shape index: {}]
  %s5 = inlined_call_operand.vmem [shape: bf16[64,128], index: 5, kind: input, shape index: {}]
  %s6 = inlined_call_operand.vmem [shape: f32[1,128], index: 6, kind: input, shape index: {}]
  %s7 = inlined_call_operand.vmem [shape: bf16[4,16,64], index: 7, kind: input, shape index: {}]
  %s8 = inlined_call_operand.vmem [shape: f32[1,64], index: 8, kind: input, shape index: {}]
  %s9 = inlined_call_operand.hbm [shape: f32[2,64,64], index: 9, kind: output, shape index: {}]
  %s10 = sld [smem:[#allocation0]]
  $region69: #{hsi_wave_forward.7} parent=0
    _
  %s12 = ssub.s32 1, %s10
  %s13 = scalar_select 0, %s12, %s10
  %v14 = vstv %s2
  %15 = vst [vmem:[#allocation2] sm:$0x1] %v14
  $region1: #{hsi_wave_forward.7} parent=0
    #allocation3 [shape = 'u8[65536]{0}', space=vmem, size = 0x10000, scoped, tag = 'output window, operand 0']
    #allocation4 [shape = 's32[2]{0}', space=sflag, size = 0x8, scoped, tag = 'scoped memory for hsi_wave_forward.7']
    %16 = vsyncpa [#allocation4], 0
    %s17 = scalar_lea.sflag [#allocation4], 1
    %18 = vsyncpa %s17, 0
    loop: start=0, step=1, limit=4
    $region2: #{hsi_wave_forward.7} parent=1 // loop_pre_header
      _
    $region3: #{hsi_wave_forward.7} parent=1 // loop_header
      %s20 = sphi 0, %s24
      %p21 = scmp.ge.s32.totalorder %s20, 4
      %s30 = sphi 0, %s32
      %s33 = sphi 0, %s30
      %s34 = sphi 0, %s33
      %s50 = sphi 0, %s34
      %s54 = sphi 0, %s54
      %s56 = sphi 0, %s54
      %s57 = sphi 0, %s56
      %s71 = sphi 0, %s57
      %s75 = sphi 0, %s75
      %s77 = sphi 0, %s75
      %s78 = sphi 0, %s77
      %s92 = sphi 0, %s78
      %s98 = sphi 0, %s100
      %s101 = sphi 0, %s98
      %s102 = sphi 0, %s101
      %s118 = sphi 0, %s102
      %s124 = sphi 0, %s126
      %s127 = sphi 0, %s124
      %s128 = sphi 0, %s127
      %s144 = sphi 0, %s128
      %s148 = sphi 0, %s148
      %s150 = sphi 0, %s148
      %s151 = sphi 0, %s150
      %s165 = sphi 0, %s151
      %s169 = sphi 0, %s169
      %s171 = sphi 0, %s169
      %s172 = sphi 0, %s171
      %s186 = sphi 0, %s172
      %s190 = sphi 0, %s190
      %s192 = sphi 0, %s190
      %s193 = sphi 0, %s192
      %s207 = sphi 0, %s193
      %s211 = sphi 0, %s211
      %s213 = sphi 0, %s211
      %s214 = sphi 0, %s213
      %s228 = sphi 0, %s214
      %s234 = sphi 0, %s236
      %s237 = sphi 0, %s234
      %s238 = sphi 0, %s237
      %s254 = sphi 0, %s238
    $region4: #{hsi_wave_forward.7} parent=1 // loop_header_branch
      %23 = sbr.rel (%p21) target = $region8
    $region5: #{hsi_wave_forward.7} parent=1 // loop_body
      %s25 = ssub.s32 %s20, 1
      %s26 = ssub.s32 %s20, 2
      %s27 = sadd.s32 %s20, 1
      %s28 = ssub.s32 %s20, %s27
      %p29 = scmp.eq.s32.totalorder %s28, 0
      %s31 = sadd.s32 %s30, 1
      %s32 = scalar_select %p29, %s30, %s31
      %p35 = pneg %p29
      %p36 = scmp.eq.s32.totalorder %s20, 1
      %p37 = por %p35, %p36
      %p38 = scmp.ne.s32.totalorder %s30, %s33
      %p39 = scmp.eq.s32.totalorder %s20, 0
      %p40 = por %p38, %p39
      %p41 = scmp.ne.s32.totalorder %s30, %s33
      %p42 = scmp.eq.s32.totalorder %s25, 1
      %p43 = por %p41, %p42
      %p44 = scmp.ne.s32.totalorder %s33, %s34
      %p45 = scmp.eq.s32.totalorder %s25, 0
      %p46 = por %p44, %p45
      %p47 = scmp.ne.s32.totalorder %s33, %s34
      %p48 = scmp.eq.s32.totalorder %s26, 1
      %p49 = por %p47, %p48
      %p51 = scmp.ne.s32.totalorder %s34, %s50
      %p52 = scmp.eq.s32.totalorder %s26, 0
      %p53 = por %p51, %p52
      %s55 = sadd.s32 %s54, 1
      %p58 = scmp.eq.s32.totalorder %s20, 1
      %p59 = scmp.ne.s32.totalorder %s54, %s56
      %p60 = scmp.eq.s32.totalorder %s20, 0
      %p61 = por %p59, %p60
      %p62 = scmp.ne.s32.totalorder %s54, %s56
      %p63 = scmp.eq.s32.totalorder %s25, 1
      %p64 = por %p62, %p63
      %p65 = scmp.ne.s32.totalorder %s56, %s57
      %p66 = scmp.eq.s32.totalorder %s25, 0
      %p67 = por %p65, %p66
      %p68 = scmp.ne.s32.totalorder %s56, %s57
      %p69 = scmp.eq.s32.totalorder %s26, 1
      %p70 = por %p68, %p69
      %p72 = scmp.ne.s32.totalorder %s57, %s71
      %p73 = scmp.eq.s32.totalorder %s26, 0
      %p74 = por %p72, %p73
      %s76 = sadd.s32 %s75, 1
      %p79 = scmp.eq.s32.totalorder %s20, 1
      %p80 = scmp.ne.s32.totalorder %s75, %s77
      %p81 = scmp.eq.s32.totalorder %s20, 0
      %p82 = por %p80, %p81
      %p83 = scmp.ne.s32.totalorder %s75, %s77
      %p84 = scmp.eq.s32.totalorder %s25, 1
      %p85 = por %p83, %p84
      %p86 = scmp.ne.s32.totalorder %s77, %s78
      %p87 = scmp.eq.s32.totalorder %s25, 0
      %p88 = por %p86, %p87
      %p89 = scmp.ne.s32.totalorder %s77, %s78
      %p90 = scmp.eq.s32.totalorder %s26, 1
      %p91 = por %p89, %p90
      %p93 = scmp.ne.s32.totalorder %s78, %s92
      %p94 = scmp.eq.s32.totalorder %s26, 0
      %p95 = por %p93, %p94
      %s96 = ssub.s32 %s20, %s27
      %p97 = scmp.eq.s32.totalorder %s96, 0
      %s99 = sadd.s32 %s98, 1
      %s100 = scalar_select %p97, %s98, %s99
      %p103 = pneg %p97
      %p104 = scmp.eq.s32.totalorder %s20, 1
      %p105 = por %p103, %p104
      %p106 = scmp.ne.s32.totalorder %s98, %s101
      %p107 = scmp.eq.s32.totalorder %s20, 0
      %p108 = por %p106, %p107
      %p109 = scmp.ne.s32.totalorder %s98, %s101
      %p110 = scmp.eq.s32.totalorder %s25, 1
      %p111 = por %p109, %p110
      %p112 = scmp.ne.s32.totalorder %s101, %s102
      %p113 = scmp.eq.s32.totalorder %s25, 0
      %p114 = por %p112, %p113
      %p115 = scmp.ne.s32.totalorder %s101, %s102
      %p116 = scmp.eq.s32.totalorder %s26, 1
      %p117 = por %p115, %p116
      %p119 = scmp.ne.s32.totalorder %s102, %s118
      %p120 = scmp.eq.s32.totalorder %s26, 0
      %p121 = por %p119, %p120
      %s122 = ssub.s32 %s20, %s27
      %p123 = scmp.eq.s32.totalorder %s122, 0
      %s125 = sadd.s32 %s124, 1
      %s126 = scalar_select %p123, %s124, %s125
      %p129 = pneg %p123
      %p130 = scmp.eq.s32.totalorder %s20, 1
      %p131 = por %p129, %p130
      %p132 = scmp.ne.s32.totalorder %s124, %s127
      %p133 = scmp.eq.s32.totalorder %s20, 0
      %p134 = por %p132, %p133
      %p135 = scmp.ne.s32.totalorder %s124, %s127
      %p136 = scmp.eq.s32.totalorder %s25, 1
      %p137 = por %p135, %p136
      %p138 = scmp.ne.s32.totalorder %s127, %s128
      %p139 = scmp.eq.s32.totalorder %s25, 0
      %p140 = por %p138, %p139
      %p141 = scmp.ne.s32.totalorder %s127, %s128
      %p142 = scmp.eq.s32.totalorder %s26, 1
      %p143 = por %p141, %p142
      %p145 = scmp.ne.s32.totalorder %s128, %s144
      %p146 = scmp.eq.s32.totalorder %s26, 0
      %p147 = por %p145, %p146
      %s149 = sadd.s32 %s148, 1
      %p152 = scmp.eq.s32.totalorder %s20, 1
      %p153 = scmp.ne.s32.totalorder %s148, %s150
      %p154 = scmp.eq.s32.totalorder %s20, 0
      %p155 = por %p153, %p154
      %p156 = scmp.ne.s32.totalorder %s148, %s150
      %p157 = scmp.eq.s32.totalorder %s25, 1
      %p158 = por %p156, %p157
      %p159 = scmp.ne.s32.totalorder %s150, %s151
      %p160 = scmp.eq.s32.totalorder %s25, 0
      %p161 = por %p159, %p160
      %p162 = scmp.ne.s32.totalorder %s150, %s151
      %p163 = scmp.eq.s32.totalorder %s26, 1
      %p164 = por %p162, %p163
      %p166 = scmp.ne.s32.totalorder %s151, %s165
      %p167 = scmp.eq.s32.totalorder %s26, 0
      %p168 = por %p166, %p167
      %s170 = sadd.s32 %s169, 1
      %p173 = scmp.eq.s32.totalorder %s20, 1
      %p174 = scmp.ne.s32.totalorder %s169, %s171
      %p175 = scmp.eq.s32.totalorder %s20, 0
      %p176 = por %p174, %p175
      %p177 = scmp.ne.s32.totalorder %s169, %s171
      %p178 = scmp.eq.s32.totalorder %s25, 1
      %p179 = por %p177, %p178
      %p180 = scmp.ne.s32.totalorder %s171, %s172
      %p181 = scmp.eq.s32.totalorder %s25, 0
      %p182 = por %p180, %p181
      %p183 = scmp.ne.s32.totalorder %s171, %s172
      %p184 = scmp.eq.s32.totalorder %s26, 1
      %p185 = por %p183, %p184
      %p187 = scmp.ne.s32.totalorder %s172, %s186
      %p188 = scmp.eq.s32.totalorder %s26, 0
      %p189 = por %p187, %p188
      %s191 = sadd.s32 %s190, 1
      %p194 = scmp.eq.s32.totalorder %s20, 1
      %p195 = scmp.ne.s32.totalorder %s190, %s192
      %p196 = scmp.eq.s32.totalorder %s20, 0
      %p197 = por %p195, %p196
      %p198 = scmp.ne.s32.totalorder %s190, %s192
      %p199 = scmp.eq.s32.totalorder %s25, 1
      %p200 = por %p198, %p199
      %p201 = scmp.ne.s32.totalorder %s192, %s193
      %p202 = scmp.eq.s32.totalorder %s25, 0
      %p203 = por %p201, %p202
      %p204 = scmp.ne.s32.totalorder %s192, %s193
      %p205 = scmp.eq.s32.totalorder %s26, 1
      %p206 = por %p204, %p205
      %p208 = scmp.ne.s32.totalorder %s193, %s207
      %p209 = scmp.eq.s32.totalorder %s26, 0
      %p210 = por %p208, %p209
      %s212 = sadd.s32 %s211, 1
      %p215 = scmp.eq.s32.totalorder %s20, 1
      %p216 = scmp.ne.s32.totalorder %s211, %s213
      %p217 = scmp.eq.s32.totalorder %s20, 0
      %p218 = por %p216, %p217
      %p219 = scmp.ne.s32.totalorder %s211, %s213
      %p220 = scmp.eq.s32.totalorder %s25, 1
      %p221 = por %p219, %p220
      %p222 = scmp.ne.s32.totalorder %s213, %s214
      %p223 = scmp.eq.s32.totalorder %s25, 0
      %p224 = por %p222, %p223
      %p225 = scmp.ne.s32.totalorder %s213, %s214
      %p226 = scmp.eq.s32.totalorder %s26, 1
      %p227 = por %p225, %p226
      %p229 = scmp.ne.s32.totalorder %s214, %s228
      %p230 = scmp.eq.s32.totalorder %s26, 0
      %p231 = por %p229, %p230
      %s232 = ssub.s32 %s20, %s27
      %p233 = scmp.eq.s32.totalorder %s232, 0
      %s235 = sadd.s32 %s234, 1
      %s236 = scalar_select %p233, %s234, %s235
      %p239 = pneg %p233
      %p240 = scmp.eq.s32.totalorder %s20, 1
      %p241 = por %p239, %p240
      %p242 = scmp.ne.s32.totalorder %s234, %s237
      %p243 = scmp.eq.s32.totalorder %s20, 0
      %p244 = por %p242, %p243
      %p245 = scmp.ne.s32.totalorder %s234, %s237
      %p246 = scmp.eq.s32.totalorder %s25, 1
      %p247 = por %p245, %p246
      %p248 = scmp.ne.s32.totalorder %s237, %s238
      %p249 = scmp.eq.s32.totalorder %s25, 0
      %p250 = por %p248, %p249
      %p251 = scmp.ne.s32.totalorder %s237, %s238
      %p252 = scmp.eq.s32.totalorder %s26, 1
      %p253 = por %p251, %p252
      %p255 = scmp.ne.s32.totalorder %s238, %s254
      %p256 = scmp.eq.s32.totalorder %s26, 0
      %p257 = por %p255, %p256
      %p258 = scmp.le.s32.totalorder 1, %s20
      %p259 = scmp.lt.s32.totalorder %s20, 3
      %p260 = pnand %p258, %p259
      %p261 = pneg %p260
      // Predicated region
      $region9: #{hsi_wave_forward.7} parent=5 // pred_check
        _
      $region10: #{hsi_wave_forward.7} parent=5 // pred_check_branch
        %263 = sbr.rel (%p260) target = $region12
      $region11: #{hsi_wave_forward.7} parent=5 // pred_region
        %s264 = ssub.s32 %s20, 1
        // Predicated region
        $region13: #{hsi_wave_forward.7} parent=11 // pred_check
          %p265 = pneg %p67
        $region14: #{hsi_wave_forward.7} parent=11 // pred_check_branch
          %267 = sbr.rel (%p265) target = $region16
        $region15: #{hsi_wave_forward.7} parent=11 // pred_region
          _
        $region16: #{hsi_wave_forward.7} parent=11 // pred_fallthru
          _
        // Predicated region
        $region17: #{hsi_wave_forward.7} parent=11 // pred_check
          %p268 = pneg %p88
        $region18: #{hsi_wave_forward.7} parent=11 // pred_check_branch
          %270 = sbr.rel (%p268) target = $region20
        $region19: #{hsi_wave_forward.7} parent=11 // pred_region
          _
        $region20: #{hsi_wave_forward.7} parent=11 // pred_fallthru
          _
        // Predicated region
        $region21: #{hsi_wave_forward.7} parent=11 // pred_check
          %p271 = pneg %p161
        $region22: #{hsi_wave_forward.7} parent=11 // pred_check_branch
          %273 = sbr.rel (%p271) target = $region24
        $region23: #{hsi_wave_forward.7} parent=11 // pred_region
          _
        $region24: #{hsi_wave_forward.7} parent=11 // pred_fallthru
          _
        // Predicated region
        $region25: #{hsi_wave_forward.7} parent=11 // pred_check
          %p274 = pneg %p182
        $region26: #{hsi_wave_forward.7} parent=11 // pred_check_branch
          %276 = sbr.rel (%p274) target = $region28
        $region27: #{hsi_wave_forward.7} parent=11 // pred_region
          _
        $region28: #{hsi_wave_forward.7} parent=11 // pred_fallthru
          _
        // Predicated region
        $region29: #{hsi_wave_forward.7} parent=11 // pred_check
          %p277 = pneg %p203
        $region30: #{hsi_wave_forward.7} parent=11 // pred_check_branch
          %279 = sbr.rel (%p277) target = $region32
        $region31: #{hsi_wave_forward.7} parent=11 // pred_region
          _
        $region32: #{hsi_wave_forward.7} parent=11 // pred_fallthru
          _
        // Predicated region
        $region33: #{hsi_wave_forward.7} parent=11 // pred_check
          %p280 = pneg %p224
        $region34: #{hsi_wave_forward.7} parent=11 // pred_check_branch
          %282 = sbr.rel (%p280) target = $region36
        $region35: #{hsi_wave_forward.7} parent=11 // pred_region
          _
        $region36: #{hsi_wave_forward.7} parent=11 // pred_fallthru
          _
      $region12: #{hsi_wave_forward.7} parent=5 // pred_fallthru
        _
      %p283 = scmp.lt.s32.totalorder %s20, 2
      // Predicated region
      $region37: #{hsi_wave_forward.7} parent=5 // pred_check
        %p284 = pneg %p283
      $region38: #{hsi_wave_forward.7} parent=5 // pred_check_branch
        %286 = sbr.rel (%p284) target = $region40
      $region39: #{hsi_wave_forward.7} parent=5 // pred_region
        // Predicated region
        $region41: #{hsi_wave_forward.7} parent=39 // pred_check
          %p287 = pneg %p40
        $region42: #{hsi_wave_forward.7} parent=39 // pred_check_branch
          %289 = sbr.rel (%p287) target = $region44
        $region43: #{hsi_wave_forward.7} parent=39 // pred_region
          %p290 = scmp.lt.s32.totalorder %s20, 1
          %s291 = scalar_select %p290, %s20, 1
          %s292 = smul.addr %s291, 8
          %s293 = smul.addr %s292, 8
          %s294 = scalar_lea.vmem %s0, %s293
        $region44: #{hsi_wave_forward.7} parent=39 // pred_fallthru
          _
        // Predicated region
        $region45: #{hsi_wave_forward.7} parent=39 // pred_check
          %p295 = pneg %p108
        $region46: #{hsi_wave_forward.7} parent=39 // pred_check_branch
          %297 = sbr.rel (%p295) target = $region48
        $region47: #{hsi_wave_forward.7} parent=39 // pred_region
          %p298 = scmp.lt.s32.totalorder %s20, 1
          %s299 = scalar_select %p298, %s20, 1
          %s300 = smul.addr %s299, 8
          %s301 = smul.addr %s300, 8
          %s302 = scalar_lea.vmem %s3, %s301
        $region48: #{hsi_wave_forward.7} parent=39 // pred_fallthru
          _
        // Predicated region
        $region49: #{hsi_wave_forward.7} parent=39 // pred_check
          %p303 = pneg %p134
        $region50: #{hsi_wave_forward.7} parent=39 // pred_check_branch
          %305 = sbr.rel (%p303) target = $region52
        $region51: #{hsi_wave_forward.7} parent=39 // pred_region
          %p306 = scmp.lt.s32.totalorder %s20, 1
          %s307 = scalar_select %p306, %s20, 1
          %s308 = smul.addr %s307, 8
          %s309 = smul.addr %s308, 4
          %s310 = scalar_lea.vmem %s4, %s309
        $region52: #{hsi_wave_forward.7} parent=39 // pred_fallthru
          _
      $region40: #{hsi_wave_forward.7} parent=5 // pred_fallthru
        _
      %p311 = scmp.le.s32.totalorder 1, %s20
      %p312 = scmp.lt.s32.totalorder %s20, 3
      %p313 = pnand %p311, %p312
      %p314 = pneg %p313
      // Predicated region
      $region53: #{hsi_wave_forward.7} parent=5 // pred_check
        _
      $region54: #{hsi_wave_forward.7} parent=5 // pred_check_branch
        %316 = sbr.rel (%p313) target = $region56
      $region55: #{hsi_wave_forward.7} parent=5 // pred_region
        %s317 = ssub.s32 %s20, 1
        %p318 = scmp.lt.s32.totalorder %s25, 1
        %s319 = scalar_select %p318, %s25, 1
        %s320 = smul.addr %s319, 8
        %s321 = smul.addr %s320, 8
        %s322 = scalar_lea.vmem %s0, %s321
        %p323 = pneg %p46
        %p324 = pneg %p43
        %p325 = pneg %p67
        %p326 = pneg %p64
        %p327 = pneg %p88
        %p328 = pneg %p85
        %p329 = scmp.lt.s32.totalorder %s25, 1
        %s330 = scalar_select %p329, %s25, 1
        %s331 = smul.addr %s330, 8
        %s332 = smul.addr %s331, 8
        %s333 = scalar_lea.vmem %s3, %s332
        %p334 = pneg %p114
        %p335 = pneg %p111
        %p336 = scmp.lt.s32.totalorder %s25, 1
        %s337 = scalar_select %p336, %s25, 1
        %s338 = smul.addr %s337, 8
        %s339 = smul.addr %s338, 4
        %s340 = scalar_lea.vmem %s4, %s339
        %p341 = pneg %p140
        %p342 = pneg %p137
        %p343 = pneg %p161
        %p344 = pneg %p158
        %p345 = pneg %p182
        %p346 = pneg %p179
        %p347 = pneg %p203
        %p348 = pneg %p200
        %p349 = pneg %p224
        %p350 = pneg %p221
        %p351 = pneg %p250
        %p352 = pneg %p247
        %s353 = sand.u32 %s237, 1
        %s354 = scalar_lea.sflag [#allocation4], %s353
        %s355 = sand.u32 %s237, 1
        %s356 = smul.addr %s355, 64
        %s357 = scalar_lea.vmem [#allocation3], %s356
        %p358 = scmp.lt.s32.totalorder %s25, 1
        %s359 = scalar_select %p358, %s25, 1
        %s360 = smul.addr %s359, 8
        %s361 = smul.addr %s360, 8
        %s362 = scalar_lea.vmem %s0, %s361
        %p363 = scmp.lt.s32.totalorder %s25, 1
        %s364 = scalar_select %p363, %s25, 1
        %s365 = smul.addr %s364, 8
        %s366 = smul.addr %s365, 8
        %s367 = scalar_lea.vmem %s3, %s366
        %p368 = scmp.lt.s32.totalorder %s25, 1
        %s369 = scalar_select %p368, %s25, 1
        %s370 = smul.addr %s369, 8
        %s371 = smul.addr %s370, 4
        %s372 = scalar_lea.vmem %s4, %s371
        %v374 = vld [vmem:[%s362] sm:$0xff]
        %v375 = vld [vmem:[%s362 + $0x8] sm:$0xff]
        %v376 = vld [vmem:[%s362 + $0x10] sm:$0xff]
        %v377 = vld [vmem:[%s362 + $0x18] sm:$0xff]
        %v378 = vld [vmem:[%s362 + $0x20] sm:$0xff]
        %v379 = vld [vmem:[%s362 + $0x28] sm:$0xff]
        %v380 = vld [vmem:[%s362 + $0x30] sm:$0xff]
        %v381 = vld [vmem:[%s362 + $0x38] sm:$0xff]
        %v382 = vld [vmem:[%s1] sm:$0x1]
        %v384 = vperm.slane %v382, 0
        %v386 = vmul.f32 %v374, %v384
        %v387 = vmul.f32 %v375, %v384
        %v388 = vmul.f32 %v376, %v384
        %v389 = vmul.f32 %v377, %v384
        %v390 = vmul.f32 %v378, %v384
        %v391 = vmul.f32 %v379, %v384
        %v392 = vmul.f32 %v380, %v384
        %v393 = vmul.f32 %v381, %v384
        %vm394 = vcmask 801792
        %v395 = vsel %vm394, %v386, 0.0
        %396 = vadd.xlane.f32.xlu0 %v395
        %v397 = vpop.xlane.xlu0 %396
        %v398 = vsel %vm394, %v387, 0.0
        %399 = vadd.xlane.f32.xlu0 %v398
        %v400 = vpop.xlane.xlu0 %399
        %v401 = vsel %vm394, %v388, 0.0
        %402 = vadd.xlane.f32.xlu0 %v401
        %v403 = vpop.xlane.xlu0 %402
        %v404 = vsel %vm394, %v389, 0.0
        %405 = vadd.xlane.f32.xlu0 %v404
        %v406 = vpop.xlane.xlu0 %405
        %v407 = vsel %vm394, %v390, 0.0
        %408 = vadd.xlane.f32.xlu0 %v407
        %v409 = vpop.xlane.xlu0 %408
        %v410 = vsel %vm394, %v391, 0.0
        %411 = vadd.xlane.f32.xlu0 %v410
        %v412 = vpop.xlane.xlu0 %411
        %v413 = vsel %vm394, %v392, 0.0
        %414 = vadd.xlane.f32.xlu0 %v413
        %v415 = vpop.xlane.xlu0 %414
        %v416 = vsel %vm394, %v393, 0.0
        %417 = vadd.xlane.f32.xlu0 %v416
        %v418 = vpop.xlane.xlu0 %417
        %v419 = vld [vmem:[#allocation2] sm:$0x1]
        %v421 = vperm.slane %v419, 0
        %v423 = vadd.f32 %v397, %v421
        %v424 = vadd.f32 %v400, %v421
        %v425 = vadd.f32 %v403, %v421
        %v426 = vadd.f32 %v406, %v421
        %v427 = vadd.f32 %v409, %v421
        %v428 = vadd.f32 %v412, %v421
        %v429 = vadd.f32 %v415, %v421
        %v430 = vadd.f32 %v418, %v421
        %v431 = vxor.u32 %v423, 2147483648
        %v432 = vxor.u32 %v424, 2147483648
        %v433 = vxor.u32 %v425, 2147483648
        %v434 = vxor.u32 %v426, 2147483648
        %v435 = vxor.u32 %v427, 2147483648
        %v436 = vxor.u32 %v428, 2147483648
        %v437 = vxor.u32 %v429, 2147483648
        %v438 = vxor.u32 %v430, 2147483648
        %v439 = vmul.f32 %v431, 1.442695
        %v440 = vpow.pop %v439
        %v441 = vmul.f32 %v432, 1.442695
        %v442 = vpow.pop %v441
        %v443 = vmul.f32 %v433, 1.442695
        %v444 = vpow.pop %v443
        %v445 = vmul.f32 %v434, 1.442695
        %v446 = vpow.pop %v445
        %v447 = vmul.f32 %v435, 1.442695
        %v448 = vpow.pop %v447
        %v449 = vmul.f32 %v436, 1.442695
        %v450 = vpow.pop %v449
        %v451 = vmul.f32 %v437, 1.442695
        %v452 = vpow.pop %v451
        %v453 = vmul.f32 %v438, 1.442695
        %v454 = vpow.pop %v453
        %v455 = vadd.f32 %v440, 1.0
        %v456 = vadd.f32 %v442, 1.0
        %v457 = vadd.f32 %v444, 1.0
        %v458 = vadd.f32 %v446, 1.0
        %v459 = vadd.f32 %v448, 1.0
        %v460 = vadd.f32 %v450, 1.0
        %v461 = vadd.f32 %v452, 1.0
        %v462 = vadd.f32 %v454, 1.0
        %v463 = vrcp.pop %v455
        %v464 = vmul.f32 %v455, %v463
        %v465 = vsub.f32 1.0, %v464
        %v466 = vmul.f32 %v463, %v465
        %v467 = vadd.f32 %v463, %v466
        %vm468 = vweird.f32 %v455
        %vm469 = vweird.f32 %v463
        %vm470 = vmor %vm468, %vm469
        %v471 = vsel %vm470, %v463, %v467
        %v472 = vand.u32 2147483647, %v455
        %vm473 = vcmp.eq.f32.partialorder %v472, 8.507059e+37
        %v474 = vand.u32 %v455, 2147483648
        %v475 = vor.u32 1.1754944e-38, %v474
        %v476 = vsel %vm473, %v475, %v471
        %v477 = vmul.f32 1.0, %v476
        %v478 = vrcp.pop %v456
        %v479 = vmul.f32 %v456, %v478
        %v480 = vsub.f32 1.0, %v479
        %v481 = vmul.f32 %v478, %v480
        %v482 = vadd.f32 %v478, %v481
        %vm483 = vweird.f32 %v456
        %vm484 = vweird.f32 %v478
        %vm485 = vmor %vm483, %vm484
        %v486 = vsel %vm485, %v478, %v482
        %v487 = vand.u32 2147483647, %v456
        %vm488 = vcmp.eq.f32.partialorder %v487, 8.507059e+37
        %v489 = vand.u32 %v456, 2147483648
        %v490 = vor.u32 1.1754944e-38, %v489
        %v491 = vsel %vm488, %v490, %v486
        %v492 = vmul.f32 1.0, %v491
        %v493 = vrcp.pop %v457
        %v494 = vmul.f32 %v457, %v493
        %v495 = vsub.f32 1.0, %v494
        %v496 = vmul.f32 %v493, %v495
        %v497 = vadd.f32 %v493, %v496
        %vm498 = vweird.f32 %v457
        %vm499 = vweird.f32 %v493
        %vm500 = vmor %vm498, %vm499
        %v501 = vsel %vm500, %v493, %v497
        %v502 = vand.u32 2147483647, %v457
        %vm503 = vcmp.eq.f32.partialorder %v502, 8.507059e+37
        %v504 = vand.u32 %v457, 2147483648
        %v505 = vor.u32 1.1754944e-38, %v504
        %v506 = vsel %vm503, %v505, %v501
        %v507 = vmul.f32 1.0, %v506
        %v508 = vrcp.pop %v458
        %v509 = vmul.f32 %v458, %v508
        %v510 = vsub.f32 1.0, %v509
        %v511 = vmul.f32 %v508, %v510
        %v512 = vadd.f32 %v508, %v511
        %vm513 = vweird.f32 %v458
        %vm514 = vweird.f32 %v508
        %vm515 = vmor %vm513, %vm514
        %v516 = vsel %vm515, %v508, %v512
        %v517 = vand.u32 2147483647, %v458
        %vm518 = vcmp.eq.f32.partialorder %v517, 8.507059e+37
        %v519 = vand.u32 %v458, 2147483648
        %v520 = vor.u32 1.1754944e-38, %v519
        %v521 = vsel %vm518, %v520, %v516
        %v522 = vmul.f32 1.0, %v521
        %v523 = vrcp.pop %v459
        %v524 = vmul.f32 %v459, %v523
        %v525 = vsub.f32 1.0, %v524
        %v526 = vmul.f32 %v523, %v525
        %v527 = vadd.f32 %v523, %v526
        %vm528 = vweird.f32 %v459
        %vm529 = vweird.f32 %v523
        %vm530 = vmor %vm528, %vm529
        %v531 = vsel %vm530, %v523, %v527
        %v532 = vand.u32 2147483647, %v459
        %vm533 = vcmp.eq.f32.partialorder %v532, 8.507059e+37
        %v534 = vand.u32 %v459, 2147483648
        %v535 = vor.u32 1.1754944e-38, %v534
        %v536 = vsel %vm533, %v535, %v531
        %v537 = vmul.f32 1.0, %v536
        %v538 = vrcp.pop %v460
        %v539 = vmul.f32 %v460, %v538
        %v540 = vsub.f32 1.0, %v539
        %v541 = vmul.f32 %v538, %v540
        %v542 = vadd.f32 %v538, %v541
        %vm543 = vweird.f32 %v460
        %vm544 = vweird.f32 %v538
        %vm545 = vmor %vm543, %vm544
        %v546 = vsel %vm545, %v538, %v542
        %v547 = vand.u32 2147483647, %v460
        %vm548 = vcmp.eq.f32.partialorder %v547, 8.507059e+37
        %v549 = vand.u32 %v460, 2147483648
        %v550 = vor.u32 1.1754944e-38, %v549
        %v551 = vsel %vm548, %v550, %v546
        %v552 = vmul.f32 1.0, %v551
        %v553 = vrcp.pop %v461
        %v554 = vmul.f32 %v461, %v553
        %v555 = vsub.f32 1.0, %v554
        %v556 = vmul.f32 %v553, %v555
        %v557 = vadd.f32 %v553, %v556
        %vm558 = vweird.f32 %v461
        %vm559 = vweird.f32 %v553
        %vm560 = vmor %vm558, %vm559
        %v561 = vsel %vm560, %v553, %v557
        %v562 = vand.u32 2147483647, %v461
        %vm563 = vcmp.eq.f32.partialorder %v562, 8.507059e+37
        %v564 = vand.u32 %v461, 2147483648
        %v565 = vor.u32 1.1754944e-38, %v564
        %v566 = vsel %vm563, %v565, %v561
        %v567 = vmul.f32 1.0, %v566
        %v568 = vrcp.pop %v462
        %v569 = vmul.f32 %v462, %v568
        %v570 = vsub.f32 1.0, %v569
        %v571 = vmul.f32 %v568, %v570
        %v572 = vadd.f32 %v568, %v571
        %vm573 = vweird.f32 %v462
        %vm574 = vweird.f32 %v568
        %vm575 = vmor %vm573, %vm574
        %v576 = vsel %vm575, %v568, %v572
        %v577 = vand.u32 2147483647, %v462
        %vm578 = vcmp.eq.f32.partialorder %v577, 8.507059e+37
        %v579 = vand.u32 %v462, 2147483648
        %v580 = vor.u32 1.1754944e-38, %v579
        %v581 = vsel %vm578, %v580, %v576
        %v582 = vmul.f32 1.0, %v581
        %v583 = vld [vmem:[%s367] sm:$0xff]
        %v584 = vld [vmem:[%s367 + $0x8] sm:$0xff]
        %v585 = vld [vmem:[%s367 + $0x10] sm:$0xff]
        %v586 = vld [vmem:[%s367 + $0x18] sm:$0xff]
        %v587 = vld [vmem:[%s367 + $0x20] sm:$0xff]
        %v588 = vld [vmem:[%s367 + $0x28] sm:$0xff]
        %v589 = vld [vmem:[%s367 + $0x30] sm:$0xff]
        %v590 = vld [vmem:[%s367 + $0x38] sm:$0xff]
        %592 = vset.pattern.permute.xlu0 0
        %593 = vperm.xlu0 %592, %v477
        %v594 = vpop.permute.xlu0 %593
        %597 = vset.pattern.permute.xlu0 0
        %598 = vperm.xlu0 %597, %v492
        %v599 = vpop.permute.xlu0 %598
        %602 = vset.pattern.permute.xlu0 0
        %603 = vperm.xlu0 %602, %v507
        %v604 = vpop.permute.xlu0 %603
        %607 = vset.pattern.permute.xlu0 0
        %608 = vperm.xlu0 %607, %v522
        %v609 = vpop.permute.xlu0 %608
        %612 = vset.pattern.permute.xlu0 0
        %613 = vperm.xlu0 %612, %v537
        %v614 = vpop.permute.xlu0 %613
        %617 = vset.pattern.permute.xlu0 0
        %618 = vperm.xlu0 %617, %v552
        %v619 = vpop.permute.xlu0 %618
        %622 = vset.pattern.permute.xlu0 0
        %623 = vperm.xlu0 %622, %v567
        %v624 = vpop.permute.xlu0 %623
        %627 = vset.pattern.permute.xlu0 0
        %628 = vperm.xlu0 %627, %v582
        %v629 = vpop.permute.xlu0 %628
        %v631 = vmul.f32 %v583, %v594
        %v632 = vmul.f32 %v584, %v599
        %v633 = vmul.f32 %v585, %v604
        %v634 = vmul.f32 %v586, %v609
        %v635 = vmul.f32 %v587, %v614
        %v636 = vmul.f32 %v588, %v619
        %v637 = vmul.f32 %v589, %v624
        %v638 = vmul.f32 %v590, %v629
        %v639 = vpack.c.bf16 %v632, %v631
        %v640 = vpack.c.bf16 %v634, %v633
        %v641 = vpack.c.bf16 %v636, %v635
        %v642 = vpack.c.bf16 %v638, %v637
        %v643 = vld [vmem:[%s5] sm:$0xf]
        %v644 = vld [vmem:[%s5 + $0x4] sm:$0xf]
        %v645 = vld [vmem:[%s5 + $0x8] sm:$0xf]
        %v646 = vld [vmem:[%s5 + $0xc] sm:$0xf]
        %v647 = vld [vmem:[%s5 + $0x10] sm:$0xf]
        %v648 = vld [vmem:[%s5 + $0x14] sm:$0xf]
        %v649 = vld [vmem:[%s5 + $0x18] sm:$0xf]
        %v650 = vld [vmem:[%s5 + $0x1c] sm:$0xf]
        %v651 = vld [vmem:[%s6] sm:$0x1]
        %v653 = vperm.slane %v651, 0
        %v663 = vunpack.c.l.b16 %v643
        %v664 = vunpack.c.l.b16 %v644
        %v665 = vunpack.c.l.b16 %v645
        %v666 = vunpack.c.l.b16 %v646
        %v667 = vunpack.c.l.b16 %v647
        %v668 = vunpack.c.l.b16 %v648
        %v669 = vunpack.c.l.b16 %v649
        %v670 = vunpack.c.l.b16 %v650
        %v671 = vpack.c.b16 %v664, %v663
        %v672 = vpack.c.b16 %v666, %v665
        %v673 = vpack.c.b16 %v668, %v667
        %v674 = vpack.c.b16 %v670, %v669
        %vm679 = vcmask 523264
        %v681 = vsel %vm679, %v639, 0
        %v684 = vsel %vm679, %v640, 0
        %v687 = vsel %vm679, %v641, 0
        %v690 = vsel %vm679, %v642, 0
        %692 = vmatpush.bf16.msra.mxu0 0
        %693 = vmatpush.bf16.msra.mxu0 0
        %694 = vmatpush.bf16.msra.mxu0 0
        %695 = vmatpush.bf16.msra.mxu0 0
        %696 = vmatpush.bf16.msra.mxu0 %v674
        %697 = vmatpush.bf16.msra.mxu0 %v673
        %698 = vmatpush.bf16.msra.mxu0 %v672
        %699 = vmatpush.bf16.msra.mxu0 %v671
        %700 = vmatmul.bf16.gmra.mxu0 %v681
        %v701 = vpop.f32.mrf.mxu0
        %v702 = vadd.f32 %v653, %v701
        %v703 = vpop.f32.mrf.mxu0
        %v704 = vadd.f32 %v653, %v703
        %705 = vmatmul.bf16.gmra.mxu0 %v684
        %v706 = vpop.f32.mrf.mxu0
        %v707 = vadd.f32 %v653, %v706
        %v708 = vpop.f32.mrf.mxu0
        %v709 = vadd.f32 %v653, %v708
        %710 = vmatmul.bf16.gmra.mxu0 %v687
        %v711 = vpop.f32.mrf.mxu0
        %v712 = vadd.f32 %v653, %v711
        %v713 = vpop.f32.mrf.mxu0
        %v714 = vadd.f32 %v653, %v713
        %715 = vmatmul.bf16.gmra.mxu0 %v690
        %v716 = vpop.f32.mrf.mxu0
        %v717 = vadd.f32 %v653, %v716
        %v718 = vpop.f32.mrf.mxu0
        %v719 = vadd.f32 %v653, %v718
        %720 = vdwg.mxu0
        %v721 = vpack.c.bf16 %v702, %v702
        %v722 = vpack.c.bf16 %v704, %v704
        %v723 = vpack.c.bf16 %v707, %v707
        %v724 = vpack.c.bf16 %v709, %v709
        %v725 = vpack.c.bf16 %v712, %v712
        %v726 = vpack.c.bf16 %v714, %v714
        %v727 = vpack.c.bf16 %v717, %v717
        %v728 = vpack.c.bf16 %v719, %v719
        %v729 = vld [vmem:[%s372] sm:$0xf]
        %v730 = vld [vmem:[%s372 + $0x4] sm:$0xf]
        %v731 = vld [vmem:[%s372 + $0x8] sm:$0xf]
        %v732 = vld [vmem:[%s372 + $0xc] sm:$0xf]
        %v733 = vld [vmem:[%s372 + $0x10] sm:$0xf]
        %v734 = vld [vmem:[%s372 + $0x14] sm:$0xf]
        %v735 = vld [vmem:[%s372 + $0x18] sm:$0xf]
        %v736 = vld [vmem:[%s372 + $0x1c] sm:$0xf]
        %v737 = vld [vmem:[%s8] sm:$0x1]
        %v739 = vperm.slane %v737, 0
        %v741 = vadd.f32 %v631, %v739
        %v742 = vadd.f32 %v632, %v739
        %v743 = vadd.f32 %v633, %v739
        %v744 = vadd.f32 %v634, %v739
        %v745 = vadd.f32 %v635, %v739
        %v746 = vadd.f32 %v636, %v739
        %v747 = vadd.f32 %v637, %v739
        %v748 = vadd.f32 %v638, %v739
        %v757 = vunpack.c.l.b16 %v729
        %v758 = vunpack.c.l.b16 %v730
        %v759 = vunpack.c.l.b16 %v731
        %v760 = vunpack.c.l.b16 %v732
        %v761 = vunpack.c.l.b16 %v733
        %v762 = vunpack.c.l.b16 %v734
        %v763 = vunpack.c.l.b16 %v735
        %v764 = vunpack.c.l.b16 %v736
        %v765 = vpack.c.b16 %v758, %v757
        %v766 = vpack.c.b16 %v760, %v759
        %v767 = vpack.c.b16 %v762, %v761
        %v768 = vpack.c.b16 %v764, %v763
        %v777 = vunpack.c.l.b16 %v721
        %v778 = vunpack.c.l.b16 %v722
        %v779 = vunpack.c.l.b16 %v723
        %v780 = vunpack.c.l.b16 %v724
        %v781 = vunpack.c.l.b16 %v725
        %v782 = vunpack.c.l.b16 %v726
        %v783 = vunpack.c.l.b16 %v727
        %v784 = vunpack.c.l.b16 %v728
        %v785 = vpack.c.b16 %v778, %v777
        %v786 = vpack.c.b16 %v780, %v779
        %v787 = vpack.c.b16 %v782, %v781
        %v788 = vpack.c.b16 %v784, %v783
        %vm789 = vcmask 130048
        %v791 = vsel %vm789, %v765, 0
        %v794 = vsel %vm789, %v766, 0
        %v797 = vsel %vm789, %v767, 0
        %v800 = vsel %vm789, %v768, 0
        %v803 = vsel %vm789, %v785, 0
        %v806 = vsel %vm789, %v786, 0
        %v809 = vsel %vm789, %v787, 0
        %v812 = vsel %vm789, %v788, 0
        %814 = vmatpush.bf16.xpose.msra.mxu0 0
        %815 = vmatpush.bf16.xpose.msra.mxu0 0
        %816 = vmatpush.bf16.xpose.msra.mxu0 0
        %817 = vmatpush.bf16.xpose.msra.mxu0 0
        %818 = vmatpush.bf16.xpose.msra.mxu0 %v812
        %819 = vmatpush.bf16.xpose.msra.mxu0 %v809
        %820 = vmatpush.bf16.xpose.msra.mxu0 %v806
        %821 = vmatpush.bf16.xpose.msra.mxu0 %v803
        %822 = vmatmul.bf16.gmra.mxu0 %v791
        %v823 = vpop.f32.mrf.mxu0
        %v824 = vadd.f32 0.0, %v823
        %v825 = vpop.f32.mrf.mxu0
        %v826 = vadd.f32 0.0, %v825
        %827 = vmatmul.bf16.gmra.mxu0 %v794
        %v828 = vpop.f32.mrf.mxu0
        %v829 = vadd.f32 0.0, %v828
        %v830 = vpop.f32.mrf.mxu0
        %v831 = vadd.f32 0.0, %v830
        %832 = vmatmul.bf16.gmra.mxu0 %v797
        %v833 = vpop.f32.mrf.mxu0
        %v834 = vadd.f32 0.0, %v833
        %v835 = vpop.f32.mrf.mxu0
        %v836 = vadd.f32 0.0, %v835
        %837 = vmatmul.bf16.gmra.mxu0 %v800
        %v838 = vpop.f32.mrf.mxu0
        %v839 = vadd.f32 0.0, %v838
        %v840 = vpop.f32.mrf.mxu0
        %v841 = vadd.f32 0.0, %v840
        %842 = vdwg.mxu0
        %v843 = vmul.f32 %v824, 0.25
        %v844 = vmul.f32 %v826, 0.25
        %v845 = vmul.f32 %v829, 0.25
        %v846 = vmul.f32 %v831, 0.25
        %v847 = vmul.f32 %v834, 0.25
        %v848 = vmul.f32 %v836, 0.25
        %v849 = vmul.f32 %v839, 0.25
        %v850 = vmul.f32 %v841, 0.25
        %v851 = vsel %vm679, %v843, -inf
        %852 = vmax.xlane.f32.xlu0 %v851
        %v853 = vpop.xlane.xlu0 %852
        %v854 = vsel %vm679, %v844, -inf
        %855 = vmax.xlane.f32.xlu0 %v854
        %v856 = vpop.xlane.xlu0 %855
        %v857 = vsel %vm679, %v845, -inf
        %858 = vmax.xlane.f32.xlu0 %v857
        %v859 = vpop.xlane.xlu0 %858
        %v860 = vsel %vm679, %v846, -inf
        %861 = vmax.xlane.f32.xlu0 %v860
        %v862 = vpop.xlane.xlu0 %861
        %v863 = vsel %vm679, %v847, -inf
        %864 = vmax.xlane.f32.xlu0 %v863
        %v865 = vpop.xlane.xlu0 %864
        %v866 = vsel %vm679, %v848, -inf
        %867 = vmax.xlane.f32.xlu0 %v866
        %v868 = vpop.xlane.xlu0 %867
        %v869 = vsel %vm679, %v849, -inf
        %870 = vmax.xlane.f32.xlu0 %v869
        %v871 = vpop.xlane.xlu0 %870
        %v872 = vsel %vm679, %v850, -inf
        %873 = vmax.xlane.f32.xlu0 %v872
        %v874 = vpop.xlane.xlu0 %873
        %v875 = vsub.f32 %v843, %v853
        %v876 = vsub.f32 %v844, %v856
        %v877 = vsub.f32 %v845, %v859
        %v878 = vsub.f32 %v846, %v862
        %v879 = vsub.f32 %v847, %v865
        %v880 = vsub.f32 %v848, %v868
        %v881 = vsub.f32 %v849, %v871
        %v882 = vsub.f32 %v850, %v874
        %v883 = vmul.f32 %v875, 1.442695
        %v884 = vpow.pop %v883
        %v885 = vmul.f32 %v876, 1.442695
        %v886 = vpow.pop %v885
        %v887 = vmul.f32 %v877, 1.442695
        %v888 = vpow.pop %v887
        %v889 = vmul.f32 %v878, 1.442695
        %v890 = vpow.pop %v889
        %v891 = vmul.f32 %v879, 1.442695
        %v892 = vpow.pop %v891
        %v893 = vmul.f32 %v880, 1.442695
        %v894 = vpow.pop %v893
        %v895 = vmul.f32 %v881, 1.442695
        %v896 = vpow.pop %v895
        %v897 = vmul.f32 %v882, 1.442695
        %v898 = vpow.pop %v897
        %v899 = vsel %vm679, %v884, 0.0
        %900 = vadd.xlane.f32.xlu0 %v899
        %v901 = vpop.xlane.xlu0 %900
        %v902 = vsel %vm679, %v886, 0.0
        %903 = vadd.xlane.f32.xlu0 %v902
        %v904 = vpop.xlane.xlu0 %903
        %v905 = vsel %vm679, %v888, 0.0
        %906 = vadd.xlane.f32.xlu0 %v905
        %v907 = vpop.xlane.xlu0 %906
        %v908 = vsel %vm679, %v890, 0.0
        %909 = vadd.xlane.f32.xlu0 %v908
        %v910 = vpop.xlane.xlu0 %909
        %v911 = vsel %vm679, %v892, 0.0
        %912 = vadd.xlane.f32.xlu0 %v911
        %v913 = vpop.xlane.xlu0 %912
        %v914 = vsel %vm679, %v894, 0.0
        %915 = vadd.xlane.f32.xlu0 %v914
        %v916 = vpop.xlane.xlu0 %915
        %v917 = vsel %vm679, %v896, 0.0
        %918 = vadd.xlane.f32.xlu0 %v917
        %v919 = vpop.xlane.xlu0 %918
        %v920 = vsel %vm679, %v898, 0.0
        %921 = vadd.xlane.f32.xlu0 %v920
        %v922 = vpop.xlane.xlu0 %921
        %v923 = vrcp.pop %v901
        %v924 = vrcp.pop %v904
        %v925 = vrcp.pop %v907
        %v926 = vrcp.pop %v910
        %v927 = vrcp.pop %v913
        %v928 = vrcp.pop %v916
        %v929 = vrcp.pop %v919
        %v930 = vrcp.pop %v922
        %v931 = vmul.f32 %v884, %v923
        %v932 = vmul.f32 %v886, %v924
        %v933 = vmul.f32 %v888, %v925
        %v934 = vmul.f32 %v890, %v926
        %v935 = vmul.f32 %v892, %v927
        %v936 = vmul.f32 %v894, %v928
        %v937 = vmul.f32 %v896, %v929
        %v938 = vmul.f32 %v898, %v930
        %v939 = vpack.c.bf16 %v932, %v931
        %v940 = vpack.c.bf16 %v934, %v933
        %v941 = vpack.c.bf16 %v936, %v935
        %v942 = vpack.c.bf16 %v938, %v937
        %943 = vrot.lane.b32.xlu0 %v785, 64
        %v944 = vpop.permute.xlu0 %943
        %945 = vrot.lane.b32.xlu0 %v786, 64
        %v946 = vpop.permute.xlu0 %945
        %947 = vrot.lane.b32.xlu0 %v787, 64
        %v948 = vpop.permute.xlu0 %947
        %949 = vrot.lane.b32.xlu0 %v788, 64
        %v950 = vpop.permute.xlu0 %949
        %v956 = vsel %vm679, %v939, 0
        %v959 = vsel %vm679, %v940, 0
        %v962 = vsel %vm679, %v941, 0
        %v965 = vsel %vm679, %v942, 0
        %967 = vmatpush.bf16.msra.mxu0 0
        %968 = vmatpush.bf16.msra.mxu0 0
        %969 = vmatpush.bf16.msra.mxu0 0
        %970 = vmatpush.bf16.msra.mxu0 0
        %971 = vmatpush.bf16.msra.mxu0 %v950
        %972 = vmatpush.bf16.msra.mxu0 %v948
        %973 = vmatpush.bf16.msra.mxu0 %v946
        %974 = vmatpush.bf16.msra.mxu0 %v944
        %975 = vmatmul.bf16.gmra.mxu0 %v956
        %v976 = vpop.f32.mrf.mxu0
        %v977 = vadd.f32 0.0, %v976
        %v978 = vpop.f32.mrf.mxu0
        %v979 = vadd.f32 0.0, %v978
        %980 = vmatmul.bf16.gmra.mxu0 %v959
        %v981 = vpop.f32.mrf.mxu0
        %v982 = vadd.f32 0.0, %v981
        %v983 = vpop.f32.mrf.mxu0
        %v984 = vadd.f32 0.0, %v983
        %985 = vmatmul.bf16.gmra.mxu0 %v962
        %v986 = vpop.f32.mrf.mxu0
        %v987 = vadd.f32 0.0, %v986
        %v988 = vpop.f32.mrf.mxu0
        %v989 = vadd.f32 0.0, %v988
        %990 = vmatmul.bf16.gmra.mxu0 %v965
        %v991 = vpop.f32.mrf.mxu0
        %v992 = vadd.f32 0.0, %v991
        %v993 = vpop.f32.mrf.mxu0
        %v994 = vadd.f32 0.0, %v993
        %995 = vdwg.mxu0
        %v996 = vpack.c.bf16 %v979, %v977
        %v997 = vpack.c.bf16 %v984, %v982
        %v998 = vpack.c.bf16 %v989, %v987
        %v999 = vpack.c.bf16 %v994, %v992
        %v1000 = vld [vmem:[%s7] sm:$0xf]
        %v1001 = vld [vmem:[%s7 + $0x4] sm:$0xf]
        %v1004 = vunpack.c.l.b16 %v1000
        %v1005 = vunpack.c.l.b16 %v1001
        %v1006 = vpack.c.b16 %v1005, %v1004
        %v1009 = vsel %vm789, %v996, 0
        %v1012 = vsel %vm789, %v997, 0
        %v1015 = vsel %vm789, %v998, 0
        %v1018 = vsel %vm789, %v999, 0
        %1020 = vmatpush.bf16.msra.mxu0 0
        %1021 = vmatpush.bf16.msra.mxu0 0
        %1022 = vmatpush.bf16.msra.mxu0 0
        %1023 = vmatpush.bf16.msra.mxu0 0
        %1024 = vmatpush.bf16.msra.mxu0 0
        %1025 = vmatpush.bf16.msra.mxu0 0
        %1026 = vmatpush.bf16.msra.mxu0 0
        %1027 = vmatpush.bf16.msra.mxu0 %v1006
        %1028 = vmatmul.bf16.gmra.mxu0 %v1009
        %v1029 = vpop.f32.mrf.mxu0
        %v1030 = vadd.f32 0.0, %v1029
        %v1031 = vpop.f32.mrf.mxu0
        %v1032 = vadd.f32 0.0, %v1031
        %1033 = vmatmul.bf16.gmra.mxu0 %v1012
        %v1034 = vpop.f32.mrf.mxu0
        %v1035 = vadd.f32 0.0, %v1034
        %v1036 = vpop.f32.mrf.mxu0
        %v1037 = vadd.f32 0.0, %v1036
        %1038 = vmatmul.bf16.gmra.mxu0 %v1015
        %v1039 = vpop.f32.mrf.mxu0
        %v1040 = vadd.f32 0.0, %v1039
        %v1041 = vpop.f32.mrf.mxu0
        %v1042 = vadd.f32 0.0, %v1041
        %1043 = vmatmul.bf16.gmra.mxu0 %v1018
        %v1044 = vpop.f32.mrf.mxu0
        %v1045 = vadd.f32 0.0, %v1044
        %v1046 = vpop.f32.mrf.mxu0
        %v1047 = vadd.f32 0.0, %v1046
        %1048 = vdwg.mxu0
        %v1049 = vadd.f32 %v741, %v1030
        %v1050 = vadd.f32 %v742, %v1032
        %v1051 = vadd.f32 %v743, %v1035
        %v1052 = vadd.f32 %v744, %v1037
        %v1053 = vadd.f32 %v745, %v1040
        %v1054 = vadd.f32 %v746, %v1042
        %v1055 = vadd.f32 %v747, %v1045
        %v1056 = vadd.f32 %v748, %v1047
        %1057 = vrot.lane.b32.xlu0 %v765, 112
        %v1058 = vpop.permute.xlu0 %1057
        %1059 = vrot.lane.b32.xlu0 %v766, 112
        %v1060 = vpop.permute.xlu0 %1059
        %1061 = vrot.lane.b32.xlu0 %v767, 112
        %v1062 = vpop.permute.xlu0 %1061
        %1063 = vrot.lane.b32.xlu0 %v768, 112
        %v1064 = vpop.permute.xlu0 %1063
        %1065 = vrot.lane.b32.xlu0 %v785, 112
        %v1066 = vpop.permute.xlu0 %1065
        %1067 = vrot.lane.b32.xlu0 %v786, 112
        %v1068 = vpop.permute.xlu0 %1067
        %1069 = vrot.lane.b32.xlu0 %v787, 112
        %v1070 = vpop.permute.xlu0 %1069
        %1071 = vrot.lane.b32.xlu0 %v788, 112
        %v1072 = vpop.permute.xlu0 %1071
        %v1074 = vsel %vm789, %v1058, 0
        %v1077 = vsel %vm789, %v1060, 0
        %v1080 = vsel %vm789, %v1062, 0
        %v1083 = vsel %vm789, %v1064, 0
        %v1086 = vsel %vm789, %v1066, 0
        %v1089 = vsel %vm789, %v1068, 0
        %v1092 = vsel %vm789, %v1070, 0
        %v1095 = vsel %vm789, %v1072, 0
        %1097 = vmatpush.bf16.xpose.msra.mxu0 0
        %1098 = vmatpush.bf16.xpose.msra.mxu0 0
        %1099 = vmatpush.bf16.xpose.msra.mxu0 0
        %1100 = vmatpush.bf16.xpose.msra.mxu0 0
        %1101 = vmatpush.bf16.xpose.msra.mxu0 %v1095
        %1102 = vmatpush.bf16.xpose.msra.mxu0 %v1092
        %1103 = vmatpush.bf16.xpose.msra.mxu0 %v1089
        %1104 = vmatpush.bf16.xpose.msra.mxu0 %v1086
        %1105 = vmatmul.bf16.gmra.mxu0 %v1074
        %v1106 = vpop.f32.mrf.mxu0
        %v1107 = vadd.f32 0.0, %v1106
        %v1108 = vpop.f32.mrf.mxu0
        %v1109 = vadd.f32 0.0, %v1108
        %1110 = vmatmul.bf16.gmra.mxu0 %v1077
        %v1111 = vpop.f32.mrf.mxu0
        %v1112 = vadd.f32 0.0, %v1111
        %v1113 = vpop.f32.mrf.mxu0
        %v1114 = vadd.f32 0.0, %v1113
        %1115 = vmatmul.bf16.gmra.mxu0 %v1080
        %v1116 = vpop.f32.mrf.mxu0
        %v1117 = vadd.f32 0.0, %v1116
        %v1118 = vpop.f32.mrf.mxu0
        %v1119 = vadd.f32 0.0, %v1118
        %1120 = vmatmul.bf16.gmra.mxu0 %v1083
        %v1121 = vpop.f32.mrf.mxu0
        %v1122 = vadd.f32 0.0, %v1121
        %v1123 = vpop.f32.mrf.mxu0
        %v1124 = vadd.f32 0.0, %v1123
        %1125 = vdwg.mxu0
        %v1126 = vmul.f32 %v1107, 0.25
        %v1127 = vmul.f32 %v1109, 0.25
        %v1128 = vmul.f32 %v1112, 0.25
        %v1129 = vmul.f32 %v1114, 0.25
        %v1130 = vmul.f32 %v1117, 0.25
        %v1131 = vmul.f32 %v1119, 0.25
        %v1132 = vmul.f32 %v1122, 0.25
        %v1133 = vmul.f32 %v1124, 0.25
        %v1134 = vsel %vm679, %v1126, -inf
        %1135 = vmax.xlane.f32.xlu0 %v1134
        %v1136 = vpop.xlane.xlu0 %1135
        %v1137 = vsel %vm679, %v1127, -inf
        %1138 = vmax.xlane.f32.xlu0 %v1137
        %v1139 = vpop.xlane.xlu0 %1138
        %v1140 = vsel %vm679, %v1128, -inf
        %1141 = vmax.xlane.f32.xlu0 %v1140
        %v1142 = vpop.xlane.xlu0 %1141
        %v1143 = vsel %vm679, %v1129, -inf
        %1144 = vmax.xlane.f32.xlu0 %v1143
        %v1145 = vpop.xlane.xlu0 %1144
        %v1146 = vsel %vm679, %v1130, -inf
        %1147 = vmax.xlane.f32.xlu0 %v1146
        %v1148 = vpop.xlane.xlu0 %1147
        %v1149 = vsel %vm679, %v1131, -inf
        %1150 = vmax.xlane.f32.xlu0 %v1149
        %v1151 = vpop.xlane.xlu0 %1150
        %v1152 = vsel %vm679, %v1132, -inf
        %1153 = vmax.xlane.f32.xlu0 %v1152
        %v1154 = vpop.xlane.xlu0 %1153
        %v1155 = vsel %vm679, %v1133, -inf
        %1156 = vmax.xlane.f32.xlu0 %v1155
        %v1157 = vpop.xlane.xlu0 %1156
        %v1158 = vsub.f32 %v1126, %v1136
        %v1159 = vsub.f32 %v1127, %v1139
        %v1160 = vsub.f32 %v1128, %v1142
        %v1161 = vsub.f32 %v1129, %v1145
        %v1162 = vsub.f32 %v1130, %v1148
        %v1163 = vsub.f32 %v1131, %v1151
        %v1164 = vsub.f32 %v1132, %v1154
        %v1165 = vsub.f32 %v1133, %v1157
        %v1166 = vmul.f32 %v1158, 1.442695
        %v1167 = vpow.pop %v1166
        %v1168 = vmul.f32 %v1159, 1.442695
        %v1169 = vpow.pop %v1168
        %v1170 = vmul.f32 %v1160, 1.442695
        %v1171 = vpow.pop %v1170
        %v1172 = vmul.f32 %v1161, 1.442695
        %v1173 = vpow.pop %v1172
        %v1174 = vmul.f32 %v1162, 1.442695
        %v1175 = vpow.pop %v1174
        %v1176 = vmul.f32 %v1163, 1.442695
        %v1177 = vpow.pop %v1176
        %v1178 = vmul.f32 %v1164, 1.442695
        %v1179 = vpow.pop %v1178
        %v1180 = vmul.f32 %v1165, 1.442695
        %v1181 = vpow.pop %v1180
        %v1182 = vsel %vm679, %v1167, 0.0
        %1183 = vadd.xlane.f32.xlu0 %v1182
        %v1184 = vpop.xlane.xlu0 %1183
        %v1185 = vsel %vm679, %v1169, 0.0
        %1186 = vadd.xlane.f32.xlu0 %v1185
        %v1187 = vpop.xlane.xlu0 %1186
        %v1188 = vsel %vm679, %v1171, 0.0
        %1189 = vadd.xlane.f32.xlu0 %v1188
        %v1190 = vpop.xlane.xlu0 %1189
        %v1191 = vsel %vm679, %v1173, 0.0
        %1192 = vadd.xlane.f32.xlu0 %v1191
        %v1193 = vpop.xlane.xlu0 %1192
        %v1194 = vsel %vm679, %v1175, 0.0
        %1195 = vadd.xlane.f32.xlu0 %v1194
        %v1196 = vpop.xlane.xlu0 %1195
        %v1197 = vsel %vm679, %v1177, 0.0
        %1198 = vadd.xlane.f32.xlu0 %v1197
        %v1199 = vpop.xlane.xlu0 %1198
        %v1200 = vsel %vm679, %v1179, 0.0
        %1201 = vadd.xlane.f32.xlu0 %v1200
        %v1202 = vpop.xlane.xlu0 %1201
        %v1203 = vsel %vm679, %v1181, 0.0
        %1204 = vadd.xlane.f32.xlu0 %v1203
        %v1205 = vpop.xlane.xlu0 %1204
        %v1206 = vrcp.pop %v1184
        %v1207 = vrcp.pop %v1187
        %v1208 = vrcp.pop %v1190
        %v1209 = vrcp.pop %v1193
        %v1210 = vrcp.pop %v1196
        %v1211 = vrcp.pop %v1199
        %v1212 = vrcp.pop %v1202
        %v1213 = vrcp.pop %v1205
        %v1214 = vmul.f32 %v1167, %v1206
        %v1215 = vmul.f32 %v1169, %v1207
        %v1216 = vmul.f32 %v1171, %v1208
        %v1217 = vmul.f32 %v1173, %v1209
        %v1218 = vmul.f32 %v1175, %v1210
        %v1219 = vmul.f32 %v1177, %v1211
        %v1220 = vmul.f32 %v1179, %v1212
        %v1221 = vmul.f32 %v1181, %v1213
        %v1222 = vpack.c.bf16 %v1215, %v1214
        %v1223 = vpack.c.bf16 %v1217, %v1216
        %v1224 = vpack.c.bf16 %v1219, %v1218
        %v1225 = vpack.c.bf16 %v1221, %v1220
        %1226 = vrot.lane.b32.xlu0 %v785, 48
        %v1227 = vpop.permute.xlu0 %1226
        %1228 = vrot.lane.b32.xlu0 %v786, 48
        %v1229 = vpop.permute.xlu0 %1228
        %1230 = vrot.lane.b32.xlu0 %v787, 48
        %v1231 = vpop.permute.xlu0 %1230
        %1232 = vrot.lane.b32.xlu0 %v788, 48
        %v1233 = vpop.permute.xlu0 %1232
        %v1239 = vsel %vm679, %v1222, 0
        %v1242 = vsel %vm679, %v1223, 0
        %v1245 = vsel %vm679, %v1224, 0
        %v1248 = vsel %vm679, %v1225, 0
        %1250 = vmatpush.bf16.msra.mxu0 0
        %1251 = vmatpush.bf16.msra.mxu0 0
        %1252 = vmatpush.bf16.msra.mxu0 0
        %1253 = vmatpush.bf16.msra.mxu0 0
        %1254 = vmatpush.bf16.msra.mxu0 %v1233
        %1255 = vmatpush.bf16.msra.mxu0 %v1231
        %1256 = vmatpush.bf16.msra.mxu0 %v1229
        %1257 = vmatpush.bf16.msra.mxu0 %v1227
        %1258 = vmatmul.bf16.gmra.mxu0 %v1239
        %v1259 = vpop.f32.mrf.mxu0
        %v1260 = vadd.f32 0.0, %v1259
        %v1261 = vpop.f32.mrf.mxu0
        %v1262 = vadd.f32 0.0, %v1261
        %1263 = vmatmul.bf16.gmra.mxu0 %v1242
        %v1264 = vpop.f32.mrf.mxu0
        %v1265 = vadd.f32 0.0, %v1264
        %v1266 = vpop.f32.mrf.mxu0
        %v1267 = vadd.f32 0.0, %v1266
        %1268 = vmatmul.bf16.gmra.mxu0 %v1245
        %v1269 = vpop.f32.mrf.mxu0
        %v1270 = vadd.f32 0.0, %v1269
        %v1271 = vpop.f32.mrf.mxu0
        %v1272 = vadd.f32 0.0, %v1271
        %1273 = vmatmul.bf16.gmra.mxu0 %v1248
        %v1274 = vpop.f32.mrf.mxu0
        %v1275 = vadd.f32 0.0, %v1274
        %v1276 = vpop.f32.mrf.mxu0
        %v1277 = vadd.f32 0.0, %v1276
        %1278 = vdwg.mxu0
        %v1279 = vpack.c.bf16 %v1262, %v1260
        %v1280 = vpack.c.bf16 %v1267, %v1265
        %v1281 = vpack.c.bf16 %v1272, %v1270
        %v1282 = vpack.c.bf16 %v1277, %v1275
        %s1283 = scalar_lea.vmem %s7, 8
        %v1284 = vld [vmem:[%s1283] sm:$0xf]
        %v1285 = vld [vmem:[%s1283 + $0x4] sm:$0xf]
        %v1288 = vunpack.c.l.b16 %v1284
        %v1289 = vunpack.c.l.b16 %v1285
        %v1290 = vpack.c.b16 %v1289, %v1288
        %v1293 = vsel %vm789, %v1279, 0
        %v1296 = vsel %vm789, %v1280, 0
        %v1299 = vsel %vm789, %v1281, 0
        %v1302 = vsel %vm789, %v1282, 0
        %1304 = vmatpush.bf16.msra.mxu0 0
        %1305 = vmatpush.bf16.msra.mxu0 0
        %1306 = vmatpush.bf16.msra.mxu0 0
        %1307 = vmatpush.bf16.msra.mxu0 0
        %1308 = vmatpush.bf16.msra.mxu0 0
        %1309 = vmatpush.bf16.msra.mxu0 0
        %1310 = vmatpush.bf16.msra.mxu0 0
        %1311 = vmatpush.bf16.msra.mxu0 %v1290
        %1312 = vmatmul.bf16.gmra.mxu0 %v1293
        %v1313 = vpop.f32.mrf.mxu0
        %v1314 = vadd.f32 0.0, %v1313
        %v1315 = vpop.f32.mrf.mxu0
        %v1316 = vadd.f32 0.0, %v1315
        %1317 = vmatmul.bf16.gmra.mxu0 %v1296
        %v1318 = vpop.f32.mrf.mxu0
        %v1319 = vadd.f32 0.0, %v1318
        %v1320 = vpop.f32.mrf.mxu0
        %v1321 = vadd.f32 0.0, %v1320
        %1322 = vmatmul.bf16.gmra.mxu0 %v1299
        %v1323 = vpop.f32.mrf.mxu0
        %v1324 = vadd.f32 0.0, %v1323
        %v1325 = vpop.f32.mrf.mxu0
        %v1326 = vadd.f32 0.0, %v1325
        %1327 = vmatmul.bf16.gmra.mxu0 %v1302
        %v1328 = vpop.f32.mrf.mxu0
        %v1329 = vadd.f32 0.0, %v1328
        %v1330 = vpop.f32.mrf.mxu0
        %v1331 = vadd.f32 0.0, %v1330
        %1332 = vdwg.mxu0
        %v1333 = vadd.f32 %v1049, %v1314
        %v1334 = vadd.f32 %v1050, %v1316
        %v1335 = vadd.f32 %v1051, %v1319
        %v1336 = vadd.f32 %v1052, %v1321
        %v1337 = vadd.f32 %v1053, %v1324
        %v1338 = vadd.f32 %v1054, %v1326
        %v1339 = vadd.f32 %v1055, %v1329
        %v1340 = vadd.f32 %v1056, %v1331
        %1341 = vrot.lane.b32.xlu0 %v765, 96
        %v1342 = vpop.permute.xlu0 %1341
        %1343 = vrot.lane.b32.xlu0 %v766, 96
        %v1344 = vpop.permute.xlu0 %1343
        %1345 = vrot.lane.b32.xlu0 %v767, 96
        %v1346 = vpop.permute.xlu0 %1345
        %1347 = vrot.lane.b32.xlu0 %v768, 96
        %v1348 = vpop.permute.xlu0 %1347
        %1349 = vrot.lane.b32.xlu0 %v785, 96
        %v1350 = vpop.permute.xlu0 %1349
        %1351 = vrot.lane.b32.xlu0 %v786, 96
        %v1352 = vpop.permute.xlu0 %1351
        %1353 = vrot.lane.b32.xlu0 %v787, 96
        %v1354 = vpop.permute.xlu0 %1353
        %1355 = vrot.lane.b32.xlu0 %v788, 96
        %v1356 = vpop.permute.xlu0 %1355
        %v1358 = vsel %vm789, %v1342, 0
        %v1361 = vsel %vm789, %v1344, 0
        %v1364 = vsel %vm789, %v1346, 0
        %v1367 = vsel %vm789, %v1348, 0
        %v1370 = vsel %vm789, %v1350, 0
        %v1373 = vsel %vm789, %v1352, 0
        %v1376 = vsel %vm789, %v1354, 0
        %v1379 = vsel %vm789, %v1356, 0
        %1381 = vmatpush.bf16.xpose.msra.mxu0 0
        %1382 = vmatpush.bf16.xpose.msra.mxu0 0
        %1383 = vmatpush.bf16.xpose.msra.mxu0 0
        %1384 = vmatpush.bf16.xpose.msra.mxu0 0
        %1385 = vmatpush.bf16.xpose.msra.mxu0 %v1379
        %1386 = vmatpush.bf16.xpose.msra.mxu0 %v1376
        %1387 = vmatpush.bf16.xpose.msra.mxu0 %v1373
        %1388 = vmatpush.bf16.xpose.msra.mxu0 %v1370
        %1389 = vmatmul.bf16.gmra.mxu0 %v1358
        %v1390 = vpop.f32.mrf.mxu0
        %v1391 = vadd.f32 0.0, %v1390
        %v1392 = vpop.f32.mrf.mxu0
        %v1393 = vadd.f32 0.0, %v1392
        %1394 = vmatmul.bf16.gmra.mxu0 %v1361
        %v1395 = vpop.f32.mrf.mxu0
        %v1396 = vadd.f32 0.0, %v1395
        %v1397 = vpop.f32.mrf.mxu0
        %v1398 = vadd.f32 0.0, %v1397
        %1399 = vmatmul.bf16.gmra.mxu0 %v1364
        %v1400 = vpop.f32.mrf.mxu0
        %v1401 = vadd.f32 0.0, %v1400
        %v1402 = vpop.f32.mrf.mxu0
        %v1403 = vadd.f32 0.0, %v1402
        %1404 = vmatmul.bf16.gmra.mxu0 %v1367
        %v1405 = vpop.f32.mrf.mxu0
        %v1406 = vadd.f32 0.0, %v1405
        %v1407 = vpop.f32.mrf.mxu0
        %v1408 = vadd.f32 0.0, %v1407
        %1409 = vdwg.mxu0
        %v1410 = vmul.f32 %v1391, 0.25
        %v1411 = vmul.f32 %v1393, 0.25
        %v1412 = vmul.f32 %v1396, 0.25
        %v1413 = vmul.f32 %v1398, 0.25
        %v1414 = vmul.f32 %v1401, 0.25
        %v1415 = vmul.f32 %v1403, 0.25
        %v1416 = vmul.f32 %v1406, 0.25
        %v1417 = vmul.f32 %v1408, 0.25
        %v1418 = vsel %vm679, %v1410, -inf
        %1419 = vmax.xlane.f32.xlu0 %v1418
        %v1420 = vpop.xlane.xlu0 %1419
        %v1421 = vsel %vm679, %v1411, -inf
        %1422 = vmax.xlane.f32.xlu0 %v1421
        %v1423 = vpop.xlane.xlu0 %1422
        %v1424 = vsel %vm679, %v1412, -inf
        %1425 = vmax.xlane.f32.xlu0 %v1424
        %v1426 = vpop.xlane.xlu0 %1425
        %v1427 = vsel %vm679, %v1413, -inf
        %1428 = vmax.xlane.f32.xlu0 %v1427
        %v1429 = vpop.xlane.xlu0 %1428
        %v1430 = vsel %vm679, %v1414, -inf
        %1431 = vmax.xlane.f32.xlu0 %v1430
        %v1432 = vpop.xlane.xlu0 %1431
        %v1433 = vsel %vm679, %v1415, -inf
        %1434 = vmax.xlane.f32.xlu0 %v1433
        %v1435 = vpop.xlane.xlu0 %1434
        %v1436 = vsel %vm679, %v1416, -inf
        %1437 = vmax.xlane.f32.xlu0 %v1436
        %v1438 = vpop.xlane.xlu0 %1437
        %v1439 = vsel %vm679, %v1417, -inf
        %1440 = vmax.xlane.f32.xlu0 %v1439
        %v1441 = vpop.xlane.xlu0 %1440
        %v1442 = vsub.f32 %v1410, %v1420
        %v1443 = vsub.f32 %v1411, %v1423
        %v1444 = vsub.f32 %v1412, %v1426
        %v1445 = vsub.f32 %v1413, %v1429
        %v1446 = vsub.f32 %v1414, %v1432
        %v1447 = vsub.f32 %v1415, %v1435
        %v1448 = vsub.f32 %v1416, %v1438
        %v1449 = vsub.f32 %v1417, %v1441
        %v1450 = vmul.f32 %v1442, 1.442695
        %v1451 = vpow.pop %v1450
        %v1452 = vmul.f32 %v1443, 1.442695
        %v1453 = vpow.pop %v1452
        %v1454 = vmul.f32 %v1444, 1.442695
        %v1455 = vpow.pop %v1454
        %v1456 = vmul.f32 %v1445, 1.442695
        %v1457 = vpow.pop %v1456
        %v1458 = vmul.f32 %v1446, 1.442695
        %v1459 = vpow.pop %v1458
        %v1460 = vmul.f32 %v1447, 1.442695
        %v1461 = vpow.pop %v1460
        %v1462 = vmul.f32 %v1448, 1.442695
        %v1463 = vpow.pop %v1462
        %v1464 = vmul.f32 %v1449, 1.442695
        %v1465 = vpow.pop %v1464
        %v1466 = vsel %vm679, %v1451, 0.0
        %1467 = vadd.xlane.f32.xlu0 %v1466
        %v1468 = vpop.xlane.xlu0 %1467
        %v1469 = vsel %vm679, %v1453, 0.0
        %1470 = vadd.xlane.f32.xlu0 %v1469
        %v1471 = vpop.xlane.xlu0 %1470
        %v1472 = vsel %vm679, %v1455, 0.0
        %1473 = vadd.xlane.f32.xlu0 %v1472
        %v1474 = vpop.xlane.xlu0 %1473
        %v1475 = vsel %vm679, %v1457, 0.0
        %1476 = vadd.xlane.f32.xlu0 %v1475
        %v1477 = vpop.xlane.xlu0 %1476
        %v1478 = vsel %vm679, %v1459, 0.0
        %1479 = vadd.xlane.f32.xlu0 %v1478
        %v1480 = vpop.xlane.xlu0 %1479
        %v1481 = vsel %vm679, %v1461, 0.0
        %1482 = vadd.xlane.f32.xlu0 %v1481
        %v1483 = vpop.xlane.xlu0 %1482
        %v1484 = vsel %vm679, %v1463, 0.0
        %1485 = vadd.xlane.f32.xlu0 %v1484
        %v1486 = vpop.xlane.xlu0 %1485
        %v1487 = vsel %vm679, %v1465, 0.0
        %1488 = vadd.xlane.f32.xlu0 %v1487
        %v1489 = vpop.xlane.xlu0 %1488
        %v1490 = vrcp.pop %v1468
        %v1491 = vrcp.pop %v1471
        %v1492 = vrcp.pop %v1474
        %v1493 = vrcp.pop %v1477
        %v1494 = vrcp.pop %v1480
        %v1495 = vrcp.pop %v1483
        %v1496 = vrcp.pop %v1486
        %v1497 = vrcp.pop %v1489
        %v1498 = vmul.f32 %v1451, %v1490
        %v1499 = vmul.f32 %v1453, %v1491
        %v1500 = vmul.f32 %v1455, %v1492
        %v1501 = vmul.f32 %v1457, %v1493
        %v1502 = vmul.f32 %v1459, %v1494
        %v1503 = vmul.f32 %v1461, %v1495
        %v1504 = vmul.f32 %v1463, %v1496
        %v1505 = vmul.f32 %v1465, %v1497
        %v1506 = vpack.c.bf16 %v1499, %v1498
        %v1507 = vpack.c.bf16 %v1501, %v1500
        %v1508 = vpack.c.bf16 %v1503, %v1502
        %v1509 = vpack.c.bf16 %v1505, %v1504
        %1510 = vrot.lane.b32.xlu0 %v785, 32
        %v1511 = vpop.permute.xlu0 %1510
        %1512 = vrot.lane.b32.xlu0 %v786, 32
        %v1513 = vpop.permute.xlu0 %1512
        %1514 = vrot.lane.b32.xlu0 %v787, 32
        %v1515 = vpop.permute.xlu0 %1514
        %1516 = vrot.lane.b32.xlu0 %v788, 32
        %v1517 = vpop.permute.xlu0 %1516
        %v1523 = vsel %vm679, %v1506, 0
        %v1526 = vsel %vm679, %v1507, 0
        %v1529 = vsel %vm679, %v1508, 0
        %v1532 = vsel %vm679, %v1509, 0
        %1534 = vmatpush.bf16.msra.mxu0 0
        %1535 = vmatpush.bf16.msra.mxu0 0
        %1536 = vmatpush.bf16.msra.mxu0 0
        %1537 = vmatpush.bf16.msra.mxu0 0
        %1538 = vmatpush.bf16.msra.mxu0 %v1517
        %1539 = vmatpush.bf16.msra.mxu0 %v1515
        %1540 = vmatpush.bf16.msra.mxu0 %v1513
        %1541 = vmatpush.bf16.msra.mxu0 %v1511
        %1542 = vmatmul.bf16.gmra.mxu0 %v1523
        %v1543 = vpop.f32.mrf.mxu0
        %v1544 = vadd.f32 0.0, %v1543
        %v1545 = vpop.f32.mrf.mxu0
        %v1546 = vadd.f32 0.0, %v1545
        %1547 = vmatmul.bf16.gmra.mxu0 %v1526
        %v1548 = vpop.f32.mrf.mxu0
        %v1549 = vadd.f32 0.0, %v1548
        %v1550 = vpop.f32.mrf.mxu0
        %v1551 = vadd.f32 0.0, %v1550
        %1552 = vmatmul.bf16.gmra.mxu0 %v1529
        %v1553 = vpop.f32.mrf.mxu0
        %v1554 = vadd.f32 0.0, %v1553
        %v1555 = vpop.f32.mrf.mxu0
        %v1556 = vadd.f32 0.0, %v1555
        %1557 = vmatmul.bf16.gmra.mxu0 %v1532
        %v1558 = vpop.f32.mrf.mxu0
        %v1559 = vadd.f32 0.0, %v1558
        %v1560 = vpop.f32.mrf.mxu0
        %v1561 = vadd.f32 0.0, %v1560
        %1562 = vdwg.mxu0
        %v1563 = vpack.c.bf16 %v1546, %v1544
        %v1564 = vpack.c.bf16 %v1551, %v1549
        %v1565 = vpack.c.bf16 %v1556, %v1554
        %v1566 = vpack.c.bf16 %v1561, %v1559
        %s1567 = scalar_lea.vmem %s7, 16
        %v1568 = vld [vmem:[%s1567] sm:$0xf]
        %v1569 = vld [vmem:[%s1567 + $0x4] sm:$0xf]
        %v1572 = vunpack.c.l.b16 %v1568
        %v1573 = vunpack.c.l.b16 %v1569
        %v1574 = vpack.c.b16 %v1573, %v1572
        %v1577 = vsel %vm789, %v1563, 0
        %v1580 = vsel %vm789, %v1564, 0
        %v1583 = vsel %vm789, %v1565, 0
        %v1586 = vsel %vm789, %v1566, 0
        %1588 = vmatpush.bf16.msra.mxu0 0
        %1589 = vmatpush.bf16.msra.mxu0 0
        %1590 = vmatpush.bf16.msra.mxu0 0
        %1591 = vmatpush.bf16.msra.mxu0 0
        %1592 = vmatpush.bf16.msra.mxu0 0
        %1593 = vmatpush.bf16.msra.mxu0 0
        %1594 = vmatpush.bf16.msra.mxu0 0
        %1595 = vmatpush.bf16.msra.mxu0 %v1574
        %1596 = vmatmul.bf16.gmra.mxu0 %v1577
        %v1597 = vpop.f32.mrf.mxu0
        %v1598 = vadd.f32 0.0, %v1597
        %v1599 = vpop.f32.mrf.mxu0
        %v1600 = vadd.f32 0.0, %v1599
        %1601 = vmatmul.bf16.gmra.mxu0 %v1580
        %v1602 = vpop.f32.mrf.mxu0
        %v1603 = vadd.f32 0.0, %v1602
        %v1604 = vpop.f32.mrf.mxu0
        %v1605 = vadd.f32 0.0, %v1604
        %1606 = vmatmul.bf16.gmra.mxu0 %v1583
        %v1607 = vpop.f32.mrf.mxu0
        %v1608 = vadd.f32 0.0, %v1607
        %v1609 = vpop.f32.mrf.mxu0
        %v1610 = vadd.f32 0.0, %v1609
        %1611 = vmatmul.bf16.gmra.mxu0 %v1586
        %v1612 = vpop.f32.mrf.mxu0
        %v1613 = vadd.f32 0.0, %v1612
        %v1614 = vpop.f32.mrf.mxu0
        %v1615 = vadd.f32 0.0, %v1614
        %1616 = vdwg.mxu0
        %v1617 = vadd.f32 %v1333, %v1598
        %v1618 = vadd.f32 %v1334, %v1600
        %v1619 = vadd.f32 %v1335, %v1603
        %v1620 = vadd.f32 %v1336, %v1605
        %v1621 = vadd.f32 %v1337, %v1608
        %v1622 = vadd.f32 %v1338, %v1610
        %v1623 = vadd.f32 %v1339, %v1613
        %v1624 = vadd.f32 %v1340, %v1615
        %1625 = vrot.lane.b32.xlu0 %v765, 80
        %v1626 = vpop.permute.xlu0 %1625
        %1627 = vrot.lane.b32.xlu0 %v766, 80
        %v1628 = vpop.permute.xlu0 %1627
        %1629 = vrot.lane.b32.xlu0 %v767, 80
        %v1630 = vpop.permute.xlu0 %1629
        %1631 = vrot.lane.b32.xlu0 %v768, 80
        %v1632 = vpop.permute.xlu0 %1631
        %1633 = vrot.lane.b32.xlu0 %v785, 80
        %v1634 = vpop.permute.xlu0 %1633
        %1635 = vrot.lane.b32.xlu0 %v786, 80
        %v1636 = vpop.permute.xlu0 %1635
        %1637 = vrot.lane.b32.xlu0 %v787, 80
        %v1638 = vpop.permute.xlu0 %1637
        %1639 = vrot.lane.b32.xlu0 %v788, 80
        %v1640 = vpop.permute.xlu0 %1639
        %v1642 = vsel %vm789, %v1626, 0
        %v1645 = vsel %vm789, %v1628, 0
        %v1648 = vsel %vm789, %v1630, 0
        %v1651 = vsel %vm789, %v1632, 0
        %v1654 = vsel %vm789, %v1634, 0
        %v1657 = vsel %vm789, %v1636, 0
        %v1660 = vsel %vm789, %v1638, 0
        %v1663 = vsel %vm789, %v1640, 0
        %1665 = vmatpush.bf16.xpose.msra.mxu0 0
        %1666 = vmatpush.bf16.xpose.msra.mxu0 0
        %1667 = vmatpush.bf16.xpose.msra.mxu0 0
        %1668 = vmatpush.bf16.xpose.msra.mxu0 0
        %1669 = vmatpush.bf16.xpose.msra.mxu0 %v1663
        %1670 = vmatpush.bf16.xpose.msra.mxu0 %v1660
        %1671 = vmatpush.bf16.xpose.msra.mxu0 %v1657
        %1672 = vmatpush.bf16.xpose.msra.mxu0 %v1654
        %1673 = vmatmul.bf16.gmra.mxu0 %v1642
        %v1674 = vpop.f32.mrf.mxu0
        %v1675 = vadd.f32 0.0, %v1674
        %v1676 = vpop.f32.mrf.mxu0
        %v1677 = vadd.f32 0.0, %v1676
        %1678 = vmatmul.bf16.gmra.mxu0 %v1645
        %v1679 = vpop.f32.mrf.mxu0
        %v1680 = vadd.f32 0.0, %v1679
        %v1681 = vpop.f32.mrf.mxu0
        %v1682 = vadd.f32 0.0, %v1681
        %1683 = vmatmul.bf16.gmra.mxu0 %v1648
        %v1684 = vpop.f32.mrf.mxu0
        %v1685 = vadd.f32 0.0, %v1684
        %v1686 = vpop.f32.mrf.mxu0
        %v1687 = vadd.f32 0.0, %v1686
        %1688 = vmatmul.bf16.gmra.mxu0 %v1651
        %v1689 = vpop.f32.mrf.mxu0
        %v1690 = vadd.f32 0.0, %v1689
        %v1691 = vpop.f32.mrf.mxu0
        %v1692 = vadd.f32 0.0, %v1691
        %1693 = vdwg.mxu0
        %v1694 = vmul.f32 %v1675, 0.25
        %v1695 = vmul.f32 %v1677, 0.25
        %v1696 = vmul.f32 %v1680, 0.25
        %v1697 = vmul.f32 %v1682, 0.25
        %v1698 = vmul.f32 %v1685, 0.25
        %v1699 = vmul.f32 %v1687, 0.25
        %v1700 = vmul.f32 %v1690, 0.25
        %v1701 = vmul.f32 %v1692, 0.25
        %v1702 = vsel %vm679, %v1694, -inf
        %1703 = vmax.xlane.f32.xlu0 %v1702
        %v1704 = vpop.xlane.xlu0 %1703
        %v1705 = vsel %vm679, %v1695, -inf
        %1706 = vmax.xlane.f32.xlu0 %v1705
        %v1707 = vpop.xlane.xlu0 %1706
        %v1708 = vsel %vm679, %v1696, -inf
        %1709 = vmax.xlane.f32.xlu0 %v1708
        %v1710 = vpop.xlane.xlu0 %1709
        %v1711 = vsel %vm679, %v1697, -inf
        %1712 = vmax.xlane.f32.xlu0 %v1711
        %v1713 = vpop.xlane.xlu0 %1712
        %v1714 = vsel %vm679, %v1698, -inf
        %1715 = vmax.xlane.f32.xlu0 %v1714
        %v1716 = vpop.xlane.xlu0 %1715
        %v1717 = vsel %vm679, %v1699, -inf
        %1718 = vmax.xlane.f32.xlu0 %v1717
        %v1719 = vpop.xlane.xlu0 %1718
        %v1720 = vsel %vm679, %v1700, -inf
        %1721 = vmax.xlane.f32.xlu0 %v1720
        %v1722 = vpop.xlane.xlu0 %1721
        %v1723 = vsel %vm679, %v1701, -inf
        %1724 = vmax.xlane.f32.xlu0 %v1723
        %v1725 = vpop.xlane.xlu0 %1724
        %v1726 = vsub.f32 %v1694, %v1704
        %v1727 = vsub.f32 %v1695, %v1707
        %v1728 = vsub.f32 %v1696, %v1710
        %v1729 = vsub.f32 %v1697, %v1713
        %v1730 = vsub.f32 %v1698, %v1716
        %v1731 = vsub.f32 %v1699, %v1719
        %v1732 = vsub.f32 %v1700, %v1722
        %v1733 = vsub.f32 %v1701, %v1725
        %v1734 = vmul.f32 %v1726, 1.442695
        %v1735 = vpow.pop %v1734
        %v1736 = vmul.f32 %v1727, 1.442695
        %v1737 = vpow.pop %v1736
        %v1738 = vmul.f32 %v1728, 1.442695
        %v1739 = vpow.pop %v1738
        %v1740 = vmul.f32 %v1729, 1.442695
        %v1741 = vpow.pop %v1740
        %v1742 = vmul.f32 %v1730, 1.442695
        %v1743 = vpow.pop %v1742
        %v1744 = vmul.f32 %v1731, 1.442695
        %v1745 = vpow.pop %v1744
        %v1746 = vmul.f32 %v1732, 1.442695
        %v1747 = vpow.pop %v1746
        %v1748 = vmul.f32 %v1733, 1.442695
        %v1749 = vpow.pop %v1748
        %v1750 = vsel %vm679, %v1735, 0.0
        %1751 = vadd.xlane.f32.xlu0 %v1750
        %v1752 = vpop.xlane.xlu0 %1751
        %v1753 = vsel %vm679, %v1737, 0.0
        %1754 = vadd.xlane.f32.xlu0 %v1753
        %v1755 = vpop.xlane.xlu0 %1754
        %v1756 = vsel %vm679, %v1739, 0.0
        %1757 = vadd.xlane.f32.xlu0 %v1756
        %v1758 = vpop.xlane.xlu0 %1757
        %v1759 = vsel %vm679, %v1741, 0.0
        %1760 = vadd.xlane.f32.xlu0 %v1759
        %v1761 = vpop.xlane.xlu0 %1760
        %v1762 = vsel %vm679, %v1743, 0.0
        %1763 = vadd.xlane.f32.xlu0 %v1762
        %v1764 = vpop.xlane.xlu0 %1763
        %v1765 = vsel %vm679, %v1745, 0.0
        %1766 = vadd.xlane.f32.xlu0 %v1765
        %v1767 = vpop.xlane.xlu0 %1766
        %v1768 = vsel %vm679, %v1747, 0.0
        %1769 = vadd.xlane.f32.xlu0 %v1768
        %v1770 = vpop.xlane.xlu0 %1769
        %v1771 = vsel %vm679, %v1749, 0.0
        %1772 = vadd.xlane.f32.xlu0 %v1771
        %v1773 = vpop.xlane.xlu0 %1772
        %v1774 = vrcp.pop %v1752
        %v1775 = vrcp.pop %v1755
        %v1776 = vrcp.pop %v1758
        %v1777 = vrcp.pop %v1761
        %v1778 = vrcp.pop %v1764
        %v1779 = vrcp.pop %v1767
        %v1780 = vrcp.pop %v1770
        %v1781 = vrcp.pop %v1773
        %v1782 = vmul.f32 %v1735, %v1774
        %v1783 = vmul.f32 %v1737, %v1775
        %v1784 = vmul.f32 %v1739, %v1776
        %v1785 = vmul.f32 %v1741, %v1777
        %v1786 = vmul.f32 %v1743, %v1778
        %v1787 = vmul.f32 %v1745, %v1779
        %v1788 = vmul.f32 %v1747, %v1780
        %v1789 = vmul.f32 %v1749, %v1781
        %v1790 = vpack.c.bf16 %v1783, %v1782
        %v1791 = vpack.c.bf16 %v1785, %v1784
        %v1792 = vpack.c.bf16 %v1787, %v1786
        %v1793 = vpack.c.bf16 %v1789, %v1788
        %1794 = vrot.lane.b32.xlu0 %v785, 16
        %v1795 = vpop.permute.xlu0 %1794
        %1796 = vrot.lane.b32.xlu0 %v786, 16
        %v1797 = vpop.permute.xlu0 %1796
        %1798 = vrot.lane.b32.xlu0 %v787, 16
        %v1799 = vpop.permute.xlu0 %1798
        %1800 = vrot.lane.b32.xlu0 %v788, 16
        %v1801 = vpop.permute.xlu0 %1800
        %v1807 = vsel %vm679, %v1790, 0
        %v1810 = vsel %vm679, %v1791, 0
        %v1813 = vsel %vm679, %v1792, 0
        %v1816 = vsel %vm679, %v1793, 0
        %1818 = vmatpush.bf16.msra.mxu0 0
        %1819 = vmatpush.bf16.msra.mxu0 0
        %1820 = vmatpush.bf16.msra.mxu0 0
        %1821 = vmatpush.bf16.msra.mxu0 0
        %1822 = vmatpush.bf16.msra.mxu0 %v1801
        %1823 = vmatpush.bf16.msra.mxu0 %v1799
        %1824 = vmatpush.bf16.msra.mxu0 %v1797
        %1825 = vmatpush.bf16.msra.mxu0 %v1795
        %1826 = vmatmul.bf16.gmra.mxu0 %v1807
        %v1827 = vpop.f32.mrf.mxu0
        %v1828 = vadd.f32 0.0, %v1827
        %v1829 = vpop.f32.mrf.mxu0
        %v1830 = vadd.f32 0.0, %v1829
        %1831 = vmatmul.bf16.gmra.mxu0 %v1810
        %v1832 = vpop.f32.mrf.mxu0
        %v1833 = vadd.f32 0.0, %v1832
        %v1834 = vpop.f32.mrf.mxu0
        %v1835 = vadd.f32 0.0, %v1834
        %1836 = vmatmul.bf16.gmra.mxu0 %v1813
        %v1837 = vpop.f32.mrf.mxu0
        %v1838 = vadd.f32 0.0, %v1837
        %v1839 = vpop.f32.mrf.mxu0
        %v1840 = vadd.f32 0.0, %v1839
        %1841 = vmatmul.bf16.gmra.mxu0 %v1816
        %v1842 = vpop.f32.mrf.mxu0
        %v1843 = vadd.f32 0.0, %v1842
        %v1844 = vpop.f32.mrf.mxu0
        %v1845 = vadd.f32 0.0, %v1844
        %1846 = vdwg.mxu0
        %v1847 = vpack.c.bf16 %v1830, %v1828
        %v1848 = vpack.c.bf16 %v1835, %v1833
        %v1849 = vpack.c.bf16 %v1840, %v1838
        %v1850 = vpack.c.bf16 %v1845, %v1843
        %s1851 = scalar_lea.vmem %s7, 24
        %v1852 = vld [vmem:[%s1851] sm:$0xf]
        %v1853 = vld [vmem:[%s1851 + $0x4] sm:$0xf]
        %v1856 = vunpack.c.l.b16 %v1852
        %v1857 = vunpack.c.l.b16 %v1853
        %v1858 = vpack.c.b16 %v1857, %v1856
        %v1861 = vsel %vm789, %v1847, 0
        %v1864 = vsel %vm789, %v1848, 0
        %v1867 = vsel %vm789, %v1849, 0
        %v1870 = vsel %vm789, %v1850, 0
        %1872 = vmatpush.bf16.msra.mxu0 0
        %1873 = vmatpush.bf16.msra.mxu0 0
        %1874 = vmatpush.bf16.msra.mxu0 0
        %1875 = vmatpush.bf16.msra.mxu0 0
        %1876 = vmatpush.bf16.msra.mxu0 0
        %1877 = vmatpush.bf16.msra.mxu0 0
        %1878 = vmatpush.bf16.msra.mxu0 0
        %1879 = vmatpush.bf16.msra.mxu0 %v1858
        %1880 = vmatmul.bf16.gmra.mxu0 %v1861
        %v1881 = vpop.f32.mrf.mxu0
        %v1882 = vadd.f32 0.0, %v1881
        %v1883 = vpop.f32.mrf.mxu0
        %v1884 = vadd.f32 0.0, %v1883
        %1885 = vmatmul.bf16.gmra.mxu0 %v1864
        %v1886 = vpop.f32.mrf.mxu0
        %v1887 = vadd.f32 0.0, %v1886
        %v1888 = vpop.f32.mrf.mxu0
        %v1889 = vadd.f32 0.0, %v1888
        %1890 = vmatmul.bf16.gmra.mxu0 %v1867
        %v1891 = vpop.f32.mrf.mxu0
        %v1892 = vadd.f32 0.0, %v1891
        %v1893 = vpop.f32.mrf.mxu0
        %v1894 = vadd.f32 0.0, %v1893
        %1895 = vmatmul.bf16.gmra.mxu0 %v1870
        %v1896 = vpop.f32.mrf.mxu0
        %v1897 = vadd.f32 0.0, %v1896
        %v1898 = vpop.f32.mrf.mxu0
        %v1899 = vadd.f32 0.0, %v1898
        %1900 = vdwg.mxu0
        %v1901 = vadd.f32 %v1617, %v1882
        %v1902 = vadd.f32 %v1618, %v1884
        %v1903 = vadd.f32 %v1619, %v1887
        %v1904 = vadd.f32 %v1620, %v1889
        %v1905 = vadd.f32 %v1621, %v1892
        %v1906 = vadd.f32 %v1622, %v1894
        %v1907 = vadd.f32 %v1623, %v1897
        %v1908 = vadd.f32 %v1624, %v1899
        %1909 = vst.msk [vmem:[%s357] sm:$0xff] %vm679, %v1901
        %1910 = vst.msk [vmem:[%s357 + $0x8] sm:$0xff] %vm679, %v1902
        %1911 = vst.msk [vmem:[%s357 + $0x10] sm:$0xff] %vm679, %v1903
        %1912 = vst.msk [vmem:[%s357 + $0x18] sm:$0xff] %vm679, %v1904
        %1913 = vst.msk [vmem:[%s357 + $0x20] sm:$0xff] %vm679, %v1905
        %1914 = vst.msk [vmem:[%s357 + $0x28] sm:$0xff] %vm679, %v1906
        %1915 = vst.msk [vmem:[%s357 + $0x30] sm:$0xff] %vm679, %v1907
        %1916 = vst.msk [vmem:[%s357 + $0x38] sm:$0xff] %vm679, %v1908
        %s1917 = sand.u32 %s237, 1
        %s1918 = scalar_lea.sflag [#allocation4], %s1917
        %s1919 = sand.u32 %s237, 1
        %s1920 = smul.addr %s1919, 64
        %s1921 = scalar_lea.vmem [#allocation3], %s1920
        // Predicated region
        $region57: #{hsi_wave_forward.7} parent=55 // pred_check
          %p1922 = pneg %p247
        $region58: #{hsi_wave_forward.7} parent=55 // pred_check_branch
          %1924 = sbr.rel (%p1922) target = $region60
        $region59: #{hsi_wave_forward.7} parent=55 // pred_region
          %1926 = vsyncadd %s1918, 0
          %s1927 = smul.addr %s25, 8
          %s1928 = smul.addr %s1927, 8
          %s1929 = scalar_lea.hbm %s9, %s1928
          %s1930 = sshll.u32 %s1921, 4
          %s1931 = int_to_ptr.vmem [resolvable:$true] %s1930
          %s1932 = sshll.u32 %s1929, 4
          %s1933 = int_to_ptr.hbm [resolvable:$true] %s1932
          %1938 = dma.vmem_to_hbm [thread:$0]  %s1931, 1024, %s1933, %s1918, 128, 128, 8
        $region60: #{hsi_wave_forward.7} parent=55 // pred_fallthru
          _
      $region56: #{hsi_wave_forward.7} parent=5 // pred_fallthru
        _
      %p1939 = scmp.le.s32.totalorder 2, %s20
      // Predicated region
      $region61: #{hsi_wave_forward.7} parent=5 // pred_check
        %p1940 = pneg %p1939
      $region62: #{hsi_wave_forward.7} parent=5 // pred_check_branch
        %1942 = sbr.rel (%p1940) target = $region64
      $region63: #{hsi_wave_forward.7} parent=5 // pred_region
        %s1943 = ssub.s32 %s20, 2
        // Predicated region
        $region65: #{hsi_wave_forward.7} parent=63 // pred_check
          %p1944 = pneg %p253
        $region66: #{hsi_wave_forward.7} parent=63 // pred_check_branch
          %1946 = sbr.rel (%p1944) target = $region68
        $region67: #{hsi_wave_forward.7} parent=63 // pred_region
          %s1947 = sand.u32 %s238, 1
          %s1948 = scalar_lea.sflag [#allocation4], %s1947
          %s1949 = sand.u32 %s238, 1
          %s1950 = smul.addr %s1949, 64
          %s1951 = scalar_lea.vmem [#allocation3], %s1950
          %1953 = dma.done %s1948, 1024
        $region68: #{hsi_wave_forward.7} parent=63 // pred_fallthru
          _
      $region64: #{hsi_wave_forward.7} parent=5 // pred_fallthru
        _
    $region6: #{hsi_wave_forward.7} parent=1 // loop_footer
      %s24 = sadd.s32 1, %s20
    $region7: #{hsi_wave_forward.7} parent=1 // loop_footer_branch
      %19 = sbr.rel target = $region3
    $region8: #{hsi_wave_forward.7} parent=1 // loop_exit
      _
    %1954 = vsyncpa [#allocation4], 1
    %s1955 = scalar_lea.sflag [#allocation4], 1
    %1956 = vsyncpa %s1955, 1

</llo_original>
